<compile_context>
chip_gen: v6e
topology: v6e:2x2x1
jax: 0.10.0
libtpu: 0.0.40
codegen_flags: <defaults>
</compile_context>

<pallas_src>
import functools

import jax
import jax.numpy as jnp
from jax import lax
from jax.experimental import pallas as pl
from jax.experimental.pallas import tpu as pltpu


def _self_attention_kernel(x_ref, w_ref, b_ref, out_ref, *,
                           n_heads, head_dim, n_time, n_vertex, eps,
                           matmul_dtype):
    f32 = jnp.float32
    T, V, H, D = n_time, n_vertex, n_heads, head_dim
    inner = H * D

    # ---- (C, T*V) -> (T*V, C); LayerNorm over channels (the affine gamma/beta
    #      are already folded into the projection weights) ----
    x = x_ref[0].astype(f32).T                              # (T*V, C)
    mu = jnp.mean(x, axis=-1, keepdims=True)
    xc = x - mu
    var = jnp.mean(xc * xc, axis=-1, keepdims=True)
    xn = xc * lax.rsqrt(var + eps)                          # (T*V, C)

    # ---- fused q/k projection: one (T*V, C) @ (C, 2*inner) MXU matmul ----
    qk = jnp.dot(xn.astype(matmul_dtype), w_ref[...],
                 preferred_element_type=f32) + b_ref[...]   # (T*V, 2*inner) f32

    # ---- stack all (head, t) pairs; one batched QK^T + one stacked softmax ----
    q = qk[:, :inner].astype(matmul_dtype)                  # (T*V, H*D)
    k = qk[:, inner:].astype(matmul_dtype)
    # batch index b = h*T + t (row split T*V -> (T, V) is a layout-free reshape)
    q3 = jnp.concatenate([q[:, h * D:(h + 1) * D].reshape(T, V, D)
                          for h in range(H)], axis=0)       # (H*T, V, D)
    k3 = jnp.concatenate([k[:, h * D:(h + 1) * D].reshape(T, V, D)
                          for h in range(H)], axis=0)       # (H*T, V, D)
    dots = jnp.einsum('bid,bjd->bij', q3, k3,
                      preferred_element_type=f32)           # (H*T, V, V); scale folded
    m = jnp.max(dots, axis=-1, keepdims=True)
    e = jnp.exp(dots - m)
    attn = e * pl.reciprocal(jnp.sum(e, axis=-1, keepdims=True), approx=True)

    # ---- lane-dense store: build one (V, H*T*V) slab, single unmasked store ----
    slab = jnp.concatenate([attn[b] for b in range(H * T)], axis=-1)  # (V, H*T*V)
    out_ref[0] = slab.astype(out_ref.dtype)


def _fold_qk_params(params, *, n_heads, hidden_dim, matmul_dtype):
    """Fold LN affine and the softmax scale into the projection (f32, once)."""
    gamma, beta, w_qk, b_qk = params                  # torch layout: (2I, C), (2I,)
    inner = n_heads * hidden_dim
    scale = float(hidden_dim) ** -0.5
    w = w_qk.T * gamma[:, None]                       # (C, 2*inner)  gamma folded
    b = beta @ w_qk.T + b_qk                          # (2*inner,)    beta folded
    col_scale = jnp.concatenate([jnp.full((inner,), scale, jnp.float32),
                                 jnp.ones((inner,), jnp.float32)])
    w = (w * col_scale[None, :]).astype(matmul_dtype)  # q-half pre-scaled, pre-cast
    b = (b * col_scale).astype(jnp.float32)
    return w, b


def self_attention_forward(x_nctv, params, *, n_heads, hidden_dim,
                           eps=1e-5, matmul_dtype=jnp.bfloat16):
    """x_nctv: (N, C, T, V) float32.  Returns attention (N*T, n_heads, V, V) f32."""
    N, C, T, V = x_nctv.shape
    inner = n_heads * hidden_dim

    w, b = _fold_qk_params(params, n_heads=n_heads, hidden_dim=hidden_dim,
                           matmul_dtype=matmul_dtype)
    b = b.reshape(1, 2 * inner)

    # 'n c t v -> n c (t v)' is a free (minor-dim merging) reshape; the
    # (C,TV)->(TV,C) flip happens in-kernel, so no extra HBM rearrange pass.
    x = x_nctv.reshape(N, C, T * V)

    kernel = functools.partial(
        _self_attention_kernel, n_heads=n_heads, head_dim=hidden_dim,
        n_time=T, n_vertex=V, eps=eps, matmul_dtype=matmul_dtype)

    slab = pl.pallas_call(
        kernel,
        out_shape=jax.ShapeDtypeStruct((N, V, n_heads * T * V), jnp.float32),
        grid=(N,),
        in_specs=[
            pl.BlockSpec((1, C, T * V), lambda n: (n, 0, 0)),   # one n-slice / step
            pl.BlockSpec((C, 2 * inner), lambda n: (0, 0)),     # folded W (resident, bf16)
            pl.BlockSpec((1, 2 * inner), lambda n: (0, 0)),     # folded bias (resident)
        ],
        out_specs=pl.BlockSpec((1, V, n_heads * T * V), lambda n: (n, 0, 0)),
        compiler_params=pltpu.CompilerParams(
            dimension_semantics=("parallel",),   # N >= 2 -> both v7x TCs busy
        ),
    )(x, w, b)

    # slab[n, i, (h*T + t)*V + j] == attn[n*T + t, h, i, j]; un-permute (tiny).
    out = slab.reshape(N, V, n_heads, T, V)
    out = jnp.transpose(out, (0, 3, 2, 1, 4)).reshape(N * T, n_heads, V, V)
    return out


def make_self_attention_params(key, in_channels, hidden_dim, n_heads):
    """Matches the PyTorch module init: LayerNorm defaults (gamma=1, beta=0);
    to_qk.weight ~ N(0,1) (nn.init.normal_), bias ~ U(-1/sqrt(C), 1/sqrt(C))."""
    inner = hidden_dim * n_heads
    kw, kb = jax.random.split(key)
    w = jax.random.normal(kw, (2 * inner, in_channels), jnp.float32)   # (out, in)
    bound = 1.0 / (in_channels ** 0.5)
    b = jax.random.uniform(kb, (2 * inner,), jnp.float32, -bound, bound)
    gamma = jnp.ones((in_channels,), jnp.float32)
    beta = jnp.zeros((in_channels,), jnp.float32)
    return gamma, beta, w, b


def _reference(x_nctv, params, *, n_heads, hidden_dim, eps=1e-5,
               matmul_dtype=jnp.bfloat16):
    """Pure-JAX reference mirroring the kernel's precision choices
    (folded weights, bf16 matmul inputs, f32 accumulation, exact divide)."""
    N, C, T, V = x_nctv.shape
    inner = n_heads * hidden_dim
    w, b = _fold_qk_params(params, n_heads=n_heads, hidden_dim=hidden_dim,
                           matmul_dtype=matmul_dtype)
    y = jnp.transpose(x_nctv, (0, 2, 3, 1)).astype(jnp.float32)   # (N, T, V, C)
    mu = jnp.mean(y, -1, keepdims=True)
    yc = y - mu
    var = jnp.mean(yc * yc, -1, keepdims=True)
    yn = yc * lax.rsqrt(var + eps)
    qk = jnp.einsum('ntvc,co->ntvo', yn.astype(matmul_dtype), w,
                    preferred_element_type=jnp.float32) + b
    q = qk[..., :inner].astype(matmul_dtype).reshape(N, T, V, n_heads, hidden_dim)
    k = qk[..., inner:].astype(matmul_dtype).reshape(N, T, V, n_heads, hidden_dim)
    dots = jnp.einsum('ntihd,ntjhd->nthij', q, k,
                      preferred_element_type=jnp.float32)
    return jax.nn.softmax(dots, axis=-1).reshape(N * T, n_heads, V, V)


if __name__ == "__main__":
    N, C, T, V = 2, 16, 8, 16          # x: (n, c, t, v); T*V = 128 rows per grid step
    hidden_dim, n_heads = 32, 4        # inner_dim = 128

    key = jax.random.PRNGKey(0)
    kx, kp = jax.random.split(key)
    x = jax.random.normal(kx, (N, C, T, V), jnp.float32)
    params = make_self_attention_params(kp, C, hidden_dim, n_heads)

    fwd = jax.jit(functools.partial(self_attention_forward,
                                    n_heads=n_heads, hidden_dim=hidden_dim))
    attn = fwd(x, params)
    jax.block_until_ready(attn)
    assert attn.shape == (N * T, n_heads, V, V) and attn.dtype == jnp.float32

    ref = _reference(x, params, n_heads=n_heads, hidden_dim=hidden_dim)
    err = float(jnp.max(jnp.abs(attn - ref)))
    assert err < 2e-2, f"max |kernel - reference| = {err}"
    print("KERNEL_OK")
</pallas_src>

<mosaic_0001>
module attributes {stable_mosaic.version = 11 : i64} {
  func.func @_self_attention_kernel(%arg0: i32, %arg1: memref<1x16x128xf32, #tpu.memory_space<vmem>>, %arg2: memref<16x256xbf16, #tpu.memory_space<vmem>>, %arg3: memref<1x256xf32, #tpu.memory_space<vmem>>, %arg4: memref<1x16x512xf32, #tpu.memory_space<vmem>>) attributes {dimension_semantics = [#tpu.dimension_semantics<parallel>], iteration_bounds = array<i64: 2>, scalar_prefetch = 0 : i64, scratch_operands = 0 : i64, tpu.core_type = #tpu.core_type<tc>, window_params = [{transform_indices = @transform_0, window_bounds = array<i64: 1, 16, 128>}, {pipeline_mode = #tpu.pipeline_mode<synchronous>, transform_indices = @transform_1, window_bounds = array<i64: 16, 256>}, {pipeline_mode = #tpu.pipeline_mode<synchronous>, transform_indices = @transform_2, window_bounds = array<i64: 1, 256>}, {transform_indices = @transform_3, window_bounds = array<i64: 1, 16, 512>}]} {
    %c0 = arith.constant 0 : index
    %c0_0 = arith.constant 0 : index
    %c0_1 = arith.constant 0 : index
    %0 = vector.load %arg1[%c0, %c0_0, %c0_1] : memref<1x16x128xf32, #tpu.memory_space<vmem>>, vector<1x16x128xf32>
    %1 = vector.shape_cast %0 : vector<1x16x128xf32> to vector<16x128xf32>
    %2 = tpu.transpose %1, [1, 0] : vector<16x128xf32> -> vector<128x16xf32>
    %cst = arith.constant dense<0.000000e+00> : vector<128xf32>
    %3 = vector.multi_reduction <add>, %2, %cst [1] : vector<128x16xf32> to vector<128xf32>
    %4 = vector.shape_cast %3 : vector<128xf32> to vector<128x1xf32>
    %cst_2 = arith.constant 1.600000e+01 : f32
    %5 = vector.broadcast %cst_2 : f32 to vector<128x1xf32>
    %6 = arith.divf %4, %5 : vector<128x1xf32>
    %7 = vector.broadcast %6 : vector<128x1xf32> to vector<128x16xf32>
    %8 = arith.subf %2, %7 : vector<128x16xf32>
    %9 = arith.mulf %8, %8 : vector<128x16xf32>
    %cst_3 = arith.constant dense<0.000000e+00> : vector<128xf32>
    %10 = vector.multi_reduction <add>, %9, %cst_3 [1] : vector<128x16xf32> to vector<128xf32>
    %11 = vector.shape_cast %10 : vector<128xf32> to vector<128x1xf32>
    %cst_4 = arith.constant 1.600000e+01 : f32
    %12 = vector.broadcast %cst_4 : f32 to vector<128x1xf32>
    %13 = arith.divf %11, %12 : vector<128x1xf32>
    %cst_5 = arith.constant 9.99999974E-6 : f32
    %14 = vector.broadcast %cst_5 : f32 to vector<128x1xf32>
    %15 = arith.addf %13, %14 : vector<128x1xf32>
    %16 = math.rsqrt %15 : vector<128x1xf32>
    %17 = vector.broadcast %16 : vector<128x1xf32> to vector<128x16xf32>
    %18 = arith.mulf %8, %17 : vector<128x16xf32>
    %19 = arith.truncf %18 : vector<128x16xf32> to vector<128x16xbf16>
    %c0_6 = arith.constant 0 : index
    %c0_7 = arith.constant 0 : index
    %20 = vector.load %arg2[%c0_6, %c0_7] : memref<16x256xbf16, #tpu.memory_space<vmem>>, vector<16x256xbf16>
    %cst_8 = arith.constant dense<0.000000e+00> : vector<128x256xf32>
    %21 = tpu.matmul %19, %20, %cst_8 {dimension_numbers = #tpu.dot_dimension_numbers<[1], [0], [0], [1], [0, 0, 1, 1], [], []>} : vector<128x16xbf16>, vector<16x256xbf16>, vector<128x256xf32> -> vector<128x256xf32>
    %c0_9 = arith.constant 0 : index
    %c0_10 = arith.constant 0 : index
    %22 = vector.load %arg3[%c0_9, %c0_10] : memref<1x256xf32, #tpu.memory_space<vmem>>, vector<1x256xf32>
    %23 = vector.broadcast %22 : vector<1x256xf32> to vector<128x256xf32>
    %24 = arith.addf %21, %23 : vector<128x256xf32>
    %25 = vector.extract_strided_slice %24 {offsets = [0, 0], sizes = [128, 128], strides = [1, 1]} : vector<128x256xf32> to vector<128x128xf32>
    %26 = arith.truncf %25 : vector<128x128xf32> to vector<128x128xbf16>
    %27 = vector.extract_strided_slice %24 {offsets = [0, 128], sizes = [128, 128], strides = [1, 1]} : vector<128x256xf32> to vector<128x128xf32>
    %28 = arith.truncf %27 : vector<128x128xf32> to vector<128x128xbf16>
    %29 = vector.extract_strided_slice %26 {offsets = [0, 0], sizes = [128, 32], strides = [1, 1]} : vector<128x128xbf16> to vector<128x32xbf16>
    %30 = vector.shape_cast %29 : vector<128x32xbf16> to vector<8x16x32xbf16>
    %31 = vector.extract_strided_slice %26 {offsets = [0, 32], sizes = [128, 32], strides = [1, 1]} : vector<128x128xbf16> to vector<128x32xbf16>
    %32 = vector.shape_cast %31 : vector<128x32xbf16> to vector<8x16x32xbf16>
    %33 = vector.extract_strided_slice %26 {offsets = [0, 64], sizes = [128, 32], strides = [1, 1]} : vector<128x128xbf16> to vector<128x32xbf16>
    %34 = vector.shape_cast %33 : vector<128x32xbf16> to vector<8x16x32xbf16>
    %35 = vector.extract_strided_slice %26 {offsets = [0, 96], sizes = [128, 32], strides = [1, 1]} : vector<128x128xbf16> to vector<128x32xbf16>
    %36 = vector.shape_cast %35 : vector<128x32xbf16> to vector<8x16x32xbf16>
    %37 = tpu.concatenate %30, %32, %34, %36 in 0 : vector<8x16x32xbf16>, vector<8x16x32xbf16>, vector<8x16x32xbf16>, vector<8x16x32xbf16> -> vector<32x16x32xbf16>
    %38 = vector.extract_strided_slice %28 {offsets = [0, 0], sizes = [128, 32], strides = [1, 1]} : vector<128x128xbf16> to vector<128x32xbf16>
    %39 = vector.shape_cast %38 : vector<128x32xbf16> to vector<8x16x32xbf16>
    %40 = vector.extract_strided_slice %28 {offsets = [0, 32], sizes = [128, 32], strides = [1, 1]} : vector<128x128xbf16> to vector<128x32xbf16>
    %41 = vector.shape_cast %40 : vector<128x32xbf16> to vector<8x16x32xbf16>
    %42 = vector.extract_strided_slice %28 {offsets = [0, 64], sizes = [128, 32], strides = [1, 1]} : vector<128x128xbf16> to vector<128x32xbf16>
    %43 = vector.shape_cast %42 : vector<128x32xbf16> to vector<8x16x32xbf16>
    %44 = vector.extract_strided_slice %28 {offsets = [0, 96], sizes = [128, 32], strides = [1, 1]} : vector<128x128xbf16> to vector<128x32xbf16>
    %45 = vector.shape_cast %44 : vector<128x32xbf16> to vector<8x16x32xbf16>
    %46 = tpu.concatenate %39, %41, %43, %45 in 0 : vector<8x16x32xbf16>, vector<8x16x32xbf16>, vector<8x16x32xbf16>, vector<8x16x32xbf16> -> vector<32x16x32xbf16>
    "tpu.trace_start"() <{level = 10 : i32, message = "bid,bjd->bij"}> : () -> ()
    %cst_11 = arith.constant dense<0.000000e+00> : vector<32x16x16xf32>
    %47 = tpu.matmul %37, %46, %cst_11 {dimension_numbers = #tpu.dot_dimension_numbers<[2], [2], [1], [1], [0, 0, 0, 1, 1, 1], [0], [0]>} : vector<32x16x32xbf16>, vector<32x16x32xbf16>, vector<32x16x16xf32> -> vector<32x16x16xf32>
    "tpu.trace_stop"() : () -> ()
    %cst_12 = arith.constant dense<0xFF800000> : vector<32x16xf32>
    %48 = vector.multi_reduction <maximumf>, %47, %cst_12 [2] : vector<32x16x16xf32> to vector<32x16xf32>
    %49 = vector.shape_cast %48 : vector<32x16xf32> to vector<32x16x1xf32>
    %50 = vector.broadcast %49 : vector<32x16x1xf32> to vector<32x16x16xf32>
    %51 = arith.subf %47, %50 : vector<32x16x16xf32>
    %52 = math.exp %51 : vector<32x16x16xf32>
    %cst_13 = arith.constant dense<0.000000e+00> : vector<32x16xf32>
    %53 = vector.multi_reduction <add>, %52, %cst_13 [2] : vector<32x16x16xf32> to vector<32x16xf32>
    %54 = vector.shape_cast %53 : vector<32x16xf32> to vector<32x16x1xf32>
    %55 = tpu.reciprocal %54 {approx = true} : vector<32x16x1xf32> -> vector<32x16x1xf32>
    %56 = vector.broadcast %55 : vector<32x16x1xf32> to vector<32x16x16xf32>
    %57 = arith.mulf %52, %56 : vector<32x16x16xf32>
    %58 = vector.extract_strided_slice %57 {offsets = [0, 0, 0], sizes = [1, 16, 16], strides = [1, 1, 1]} : vector<32x16x16xf32> to vector<1x16x16xf32>
    %59 = vector.shape_cast %58 : vector<1x16x16xf32> to vector<16x16xf32>
    %60 = vector.extract_strided_slice %57 {offsets = [1, 0, 0], sizes = [1, 16, 16], strides = [1, 1, 1]} : vector<32x16x16xf32> to vector<1x16x16xf32>
    %61 = vector.shape_cast %60 : vector<1x16x16xf32> to vector<16x16xf32>
    %62 = vector.extract_strided_slice %57 {offsets = [2, 0, 0], sizes = [1, 16, 16], strides = [1, 1, 1]} : vector<32x16x16xf32> to vector<1x16x16xf32>
    %63 = vector.shape_cast %62 : vector<1x16x16xf32> to vector<16x16xf32>
    %64 = vector.extract_strided_slice %57 {offsets = [3, 0, 0], sizes = [1, 16, 16], strides = [1, 1, 1]} : vector<32x16x16xf32> to vector<1x16x16xf32>
    %65 = vector.shape_cast %64 : vector<1x16x16xf32> to vector<16x16xf32>
    %66 = vector.extract_strided_slice %57 {offsets = [4, 0, 0], sizes = [1, 16, 16], strides = [1, 1, 1]} : vector<32x16x16xf32> to vector<1x16x16xf32>
    %67 = vector.shape_cast %66 : vector<1x16x16xf32> to vector<16x16xf32>
    %68 = vector.extract_strided_slice %57 {offsets = [5, 0, 0], sizes = [1, 16, 16], strides = [1, 1, 1]} : vector<32x16x16xf32> to vector<1x16x16xf32>
    %69 = vector.shape_cast %68 : vector<1x16x16xf32> to vector<16x16xf32>
    %70 = vector.extract_strided_slice %57 {offsets = [6, 0, 0], sizes = [1, 16, 16], strides = [1, 1, 1]} : vector<32x16x16xf32> to vector<1x16x16xf32>
    %71 = vector.shape_cast %70 : vector<1x16x16xf32> to vector<16x16xf32>
    %72 = vector.extract_strided_slice %57 {offsets = [7, 0, 0], sizes = [1, 16, 16], strides = [1, 1, 1]} : vector<32x16x16xf32> to vector<1x16x16xf32>
    %73 = vector.shape_cast %72 : vector<1x16x16xf32> to vector<16x16xf32>
    %74 = vector.extract_strided_slice %57 {offsets = [8, 0, 0], sizes = [1, 16, 16], strides = [1, 1, 1]} : vector<32x16x16xf32> to vector<1x16x16xf32>
    %75 = vector.shape_cast %74 : vector<1x16x16xf32> to vector<16x16xf32>
    %76 = vector.extract_strided_slice %57 {offsets = [9, 0, 0], sizes = [1, 16, 16], strides = [1, 1, 1]} : vector<32x16x16xf32> to vector<1x16x16xf32>
    %77 = vector.shape_cast %76 : vector<1x16x16xf32> to vector<16x16xf32>
    %78 = vector.extract_strided_slice %57 {offsets = [10, 0, 0], sizes = [1, 16, 16], strides = [1, 1, 1]} : vector<32x16x16xf32> to vector<1x16x16xf32>
    %79 = vector.shape_cast %78 : vector<1x16x16xf32> to vector<16x16xf32>
    %80 = vector.extract_strided_slice %57 {offsets = [11, 0, 0], sizes = [1, 16, 16], strides = [1, 1, 1]} : vector<32x16x16xf32> to vector<1x16x16xf32>
    %81 = vector.shape_cast %80 : vector<1x16x16xf32> to vector<16x16xf32>
    %82 = vector.extract_strided_slice %57 {offsets = [12, 0, 0], sizes = [1, 16, 16], strides = [1, 1, 1]} : vector<32x16x16xf32> to vector<1x16x16xf32>
    %83 = vector.shape_cast %82 : vector<1x16x16xf32> to vector<16x16xf32>
    %84 = vector.extract_strided_slice %57 {offsets = [13, 0, 0], sizes = [1, 16, 16], strides = [1, 1, 1]} : vector<32x16x16xf32> to vector<1x16x16xf32>
    %85 = vector.shape_cast %84 : vector<1x16x16xf32> to vector<16x16xf32>
    %86 = vector.extract_strided_slice %57 {offsets = [14, 0, 0], sizes = [1, 16, 16], strides = [1, 1, 1]} : vector<32x16x16xf32> to vector<1x16x16xf32>
    %87 = vector.shape_cast %86 : vector<1x16x16xf32> to vector<16x16xf32>
    %88 = vector.extract_strided_slice %57 {offsets = [15, 0, 0], sizes = [1, 16, 16], strides = [1, 1, 1]} : vector<32x16x16xf32> to vector<1x16x16xf32>
    %89 = vector.shape_cast %88 : vector<1x16x16xf32> to vector<16x16xf32>
    %90 = vector.extract_strided_slice %57 {offsets = [16, 0, 0], sizes = [1, 16, 16], strides = [1, 1, 1]} : vector<32x16x16xf32> to vector<1x16x16xf32>
    %91 = vector.shape_cast %90 : vector<1x16x16xf32> to vector<16x16xf32>
    %92 = vector.extract_strided_slice %57 {offsets = [17, 0, 0], sizes = [1, 16, 16], strides = [1, 1, 1]} : vector<32x16x16xf32> to vector<1x16x16xf32>
    %93 = vector.shape_cast %92 : vector<1x16x16xf32> to vector<16x16xf32>
    %94 = vector.extract_strided_slice %57 {offsets = [18, 0, 0], sizes = [1, 16, 16], strides = [1, 1, 1]} : vector<32x16x16xf32> to vector<1x16x16xf32>
    %95 = vector.shape_cast %94 : vector<1x16x16xf32> to vector<16x16xf32>
    %96 = vector.extract_strided_slice %57 {offsets = [19, 0, 0], sizes = [1, 16, 16], strides = [1, 1, 1]} : vector<32x16x16xf32> to vector<1x16x16xf32>
    %97 = vector.shape_cast %96 : vector<1x16x16xf32> to vector<16x16xf32>
    %98 = vector.extract_strided_slice %57 {offsets = [20, 0, 0], sizes = [1, 16, 16], strides = [1, 1, 1]} : vector<32x16x16xf32> to vector<1x16x16xf32>
    %99 = vector.shape_cast %98 : vector<1x16x16xf32> to vector<16x16xf32>
    %100 = vector.extract_strided_slice %57 {offsets = [21, 0, 0], sizes = [1, 16, 16], strides = [1, 1, 1]} : vector<32x16x16xf32> to vector<1x16x16xf32>
    %101 = vector.shape_cast %100 : vector<1x16x16xf32> to vector<16x16xf32>
    %102 = vector.extract_strided_slice %57 {offsets = [22, 0, 0], sizes = [1, 16, 16], strides = [1, 1, 1]} : vector<32x16x16xf32> to vector<1x16x16xf32>
    %103 = vector.shape_cast %102 : vector<1x16x16xf32> to vector<16x16xf32>
    %104 = vector.extract_strided_slice %57 {offsets = [23, 0, 0], sizes = [1, 16, 16], strides = [1, 1, 1]} : vector<32x16x16xf32> to vector<1x16x16xf32>
    %105 = vector.shape_cast %104 : vector<1x16x16xf32> to vector<16x16xf32>
    %106 = vector.extract_strided_slice %57 {offsets = [24, 0, 0], sizes = [1, 16, 16], strides = [1, 1, 1]} : vector<32x16x16xf32> to vector<1x16x16xf32>
    %107 = vector.shape_cast %106 : vector<1x16x16xf32> to vector<16x16xf32>
    %108 = vector.extract_strided_slice %57 {offsets = [25, 0, 0], sizes = [1, 16, 16], strides = [1, 1, 1]} : vector<32x16x16xf32> to vector<1x16x16xf32>
    %109 = vector.shape_cast %108 : vector<1x16x16xf32> to vector<16x16xf32>
    %110 = vector.extract_strided_slice %57 {offsets = [26, 0, 0], sizes = [1, 16, 16], strides = [1, 1, 1]} : vector<32x16x16xf32> to vector<1x16x16xf32>
    %111 = vector.shape_cast %110 : vector<1x16x16xf32> to vector<16x16xf32>
    %112 = vector.extract_strided_slice %57 {offsets = [27, 0, 0], sizes = [1, 16, 16], strides = [1, 1, 1]} : vector<32x16x16xf32> to vector<1x16x16xf32>
    %113 = vector.shape_cast %112 : vector<1x16x16xf32> to vector<16x16xf32>
    %114 = vector.extract_strided_slice %57 {offsets = [28, 0, 0], sizes = [1, 16, 16], strides = [1, 1, 1]} : vector<32x16x16xf32> to vector<1x16x16xf32>
    %115 = vector.shape_cast %114 : vector<1x16x16xf32> to vector<16x16xf32>
    %116 = vector.extract_strided_slice %57 {offsets = [29, 0, 0], sizes = [1, 16, 16], strides = [1, 1, 1]} : vector<32x16x16xf32> to vector<1x16x16xf32>
    %117 = vector.shape_cast %116 : vector<1x16x16xf32> to vector<16x16xf32>
    %118 = vector.extract_strided_slice %57 {offsets = [30, 0, 0], sizes = [1, 16, 16], strides = [1, 1, 1]} : vector<32x16x16xf32> to vector<1x16x16xf32>
    %119 = vector.shape_cast %118 : vector<1x16x16xf32> to vector<16x16xf32>
    %120 = vector.extract_strided_slice %57 {offsets = [31, 0, 0], sizes = [1, 16, 16], strides = [1, 1, 1]} : vector<32x16x16xf32> to vector<1x16x16xf32>
    %121 = vector.shape_cast %120 : vector<1x16x16xf32> to vector<16x16xf32>
    %122 = tpu.concatenate %59, %61, %63, %65, %67, %69, %71, %73, %75, %77, %79, %81, %83, %85, %87, %89 in 1 : vector<16x16xf32>, vector<16x16xf32>, vector<16x16xf32>, vector<16x16xf32>, vector<16x16xf32>, vector<16x16xf32>, vector<16x16xf32>, vector<16x16xf32>, vector<16x16xf32>, vector<16x16xf32>, vector<16x16xf32>, vector<16x16xf32>, vector<16x16xf32>, vector<16x16xf32>, vector<16x16xf32>, vector<16x16xf32> -> vector<16x256xf32>
    %123 = tpu.concatenate %91, %93, %95, %97, %99, %101, %103, %105, %107, %109, %111, %113, %115, %117, %119, %121 in 1 : vector<16x16xf32>, vector<16x16xf32>, vector<16x16xf32>, vector<16x16xf32>, vector<16x16xf32>, vector<16x16xf32>, vector<16x16xf32>, vector<16x16xf32>, vector<16x16xf32>, vector<16x16xf32>, vector<16x16xf32>, vector<16x16xf32>, vector<16x16xf32>, vector<16x16xf32>, vector<16x16xf32>, vector<16x16xf32> -> vector<16x256xf32>
    %124 = tpu.concatenate %122, %123 in 1 : vector<16x256xf32>, vector<16x256xf32> -> vector<16x512xf32>
    %c0_14 = arith.constant 0 : index
    %c0_15 = arith.constant 0 : index
    %c0_16 = arith.constant 0 : index
    %125 = vector.load %arg4[%c0_14, %c0_15, %c0_16] : memref<1x16x512xf32, #tpu.memory_space<vmem>>, vector<1x16x512xf32>
    %126 = vector.shape_cast %125 : vector<1x16x512xf32> to vector<16x512xf32>
    %127 = vector.shape_cast %124 : vector<16x512xf32> to vector<1x16x512xf32>
    tpu.vector_store %arg4[%c0_14, %c0_15, %c0_16], %127 {strides = array<i32>} : memref<1x16x512xf32, #tpu.memory_space<vmem>>, vector<1x16x512xf32>,
    return
  }
  func.func @transform_0(%arg0: i32) -> (i32, i32, i32) {
    %c0_i32 = arith.constant 0 : i32
    %c0_i32_0 = arith.constant 0 : i32
    %c0_i32_1 = arith.constant 0 : i32
    return %arg0, %c0_i32, %c0_i32_0 : i32, i32, i32
  }
  func.func @transform_1(%arg0: i32) -> (i32, i32) {
    %c0_i32 = arith.constant 0 : i32
    %c0_i32_0 = arith.constant 0 : i32
    %c0_i32_1 = arith.constant 0 : i32
    return %c0_i32, %c0_i32_0 : i32, i32
  }
  func.func @transform_2(%arg0: i32) -> (i32, i32) {
    %c0_i32 = arith.constant 0 : i32
    %c0_i32_0 = arith.constant 0 : i32
    %c0_i32_1 = arith.constant 0 : i32
    return %c0_i32, %c0_i32_0 : i32, i32
  }
  func.func @transform_3(%arg0: i32) -> (i32, i32, i32) {
    %c0_i32 = arith.constant 0 : i32
    %c0_i32_0 = arith.constant 0 : i32
    %c0_i32_1 = arith.constant 0 : i32
    return %arg0, %c0_i32, %c0_i32_0 : i32, i32, i32
  }
}

</mosaic_0001>

<llo_original>
// kernel: self_attention_forward.1
$region0: #{self_attention_forward.1}
  #allocation0 [shape = 'u32[]', space=smem, size = 0x4, offset = 0x4, fixed_abs, tag = 'smem constant byte address 0x4 - core index']
  #allocation1 [shape = 'u32[144,128]{1,0:T(1,128)}', space=vmem, size = 0x12000, scoped, tag = 'internal scratch']
  %s0 = inlined_call_operand.vmem [shape: f32[2,16,128], index: 0, kind: input, shape index: {}]
  %s1 = inlined_call_operand.vmem [shape: bf16[16,256], index: 1, kind: input, shape index: {}]
  %s2 = inlined_call_operand.vmem [shape: f32[1,256], index: 2, kind: input, shape index: {}]
  %s3 = inlined_call_operand.vmem [shape: f32[2,16,512], index: 3, kind: output, shape index: {}]
  %s4 = sld [smem:[#allocation0]]
  $region45: #{self_attention_forward.1} parent=0
    _
  %s6 = ssub.s32 1, %s4
  %s7 = scalar_select 0, %s6, %s4
  loop: start=0, step=1, limit=4
  $region2: #{self_attention_forward.1} parent=0 // loop_pre_header
    _
  $region3: #{self_attention_forward.1} parent=0 // loop_header
    %s9 = sphi 0, %s13
    %p10 = scmp.ge.s32.totalorder %s9, 4
    %s19 = sphi 0, %s21
    %s22 = sphi 0, %s19
    %s23 = sphi 0, %s22
    %s39 = sphi 0, %s23
    %s43 = sphi 0, %s43
    %s45 = sphi 0, %s43
    %s46 = sphi 0, %s45
    %s60 = sphi 0, %s46
    %s64 = sphi 0, %s64
    %s66 = sphi 0, %s64
    %s67 = sphi 0, %s66
    %s81 = sphi 0, %s67
    %s87 = sphi 0, %s89
    %s90 = sphi 0, %s87
    %s91 = sphi 0, %s90
    %s107 = sphi 0, %s91
  $region4: #{self_attention_forward.1} parent=0 // loop_header_branch
    %12 = sbr.rel (%p10) target = $region8
  $region5: #{self_attention_forward.1} parent=0 // loop_body
    %s14 = ssub.s32 %s9, 1
    %s15 = ssub.s32 %s9, 2
    %s16 = sadd.s32 %s9, 1
    %s17 = ssub.s32 %s9, %s16
    %p18 = scmp.eq.s32.totalorder %s17, 0
    %s20 = sadd.s32 %s19, 1
    %s21 = scalar_select %p18, %s19, %s20
    %p24 = pneg %p18
    %p25 = scmp.eq.s32.totalorder %s9, 1
    %p26 = por %p24, %p25
    %p27 = scmp.ne.s32.totalorder %s19, %s22
    %p28 = scmp.eq.s32.totalorder %s9, 0
    %p29 = por %p27, %p28
    %p30 = scmp.ne.s32.totalorder %s19, %s22
    %p31 = scmp.eq.s32.totalorder %s14, 1
    %p32 = por %p30, %p31
    %p33 = scmp.ne.s32.totalorder %s22, %s23
    %p34 = scmp.eq.s32.totalorder %s14, 0
    %p35 = por %p33, %p34
    %p36 = scmp.ne.s32.totalorder %s22, %s23
    %p37 = scmp.eq.s32.totalorder %s15, 1
    %p38 = por %p36, %p37
    %p40 = scmp.ne.s32.totalorder %s23, %s39
    %p41 = scmp.eq.s32.totalorder %s15, 0
    %p42 = por %p40, %p41
    %s44 = sadd.s32 %s43, 1
    %p47 = scmp.eq.s32.totalorder %s9, 1
    %p48 = scmp.ne.s32.totalorder %s43, %s45
    %p49 = scmp.eq.s32.totalorder %s9, 0
    %p50 = por %p48, %p49
    %p51 = scmp.ne.s32.totalorder %s43, %s45
    %p52 = scmp.eq.s32.totalorder %s14, 1
    %p53 = por %p51, %p52
    %p54 = scmp.ne.s32.totalorder %s45, %s46
    %p55 = scmp.eq.s32.totalorder %s14, 0
    %p56 = por %p54, %p55
    %p57 = scmp.ne.s32.totalorder %s45, %s46
    %p58 = scmp.eq.s32.totalorder %s15, 1
    %p59 = por %p57, %p58
    %p61 = scmp.ne.s32.totalorder %s46, %s60
    %p62 = scmp.eq.s32.totalorder %s15, 0
    %p63 = por %p61, %p62
    %s65 = sadd.s32 %s64, 1
    %p68 = scmp.eq.s32.totalorder %s9, 1
    %p69 = scmp.ne.s32.totalorder %s64, %s66
    %p70 = scmp.eq.s32.totalorder %s9, 0
    %p71 = por %p69, %p70
    %p72 = scmp.ne.s32.totalorder %s64, %s66
    %p73 = scmp.eq.s32.totalorder %s14, 1
    %p74 = por %p72, %p73
    %p75 = scmp.ne.s32.totalorder %s66, %s67
    %p76 = scmp.eq.s32.totalorder %s14, 0
    %p77 = por %p75, %p76
    %p78 = scmp.ne.s32.totalorder %s66, %s67
    %p79 = scmp.eq.s32.totalorder %s15, 1
    %p80 = por %p78, %p79
    %p82 = scmp.ne.s32.totalorder %s67, %s81
    %p83 = scmp.eq.s32.totalorder %s15, 0
    %p84 = por %p82, %p83
    %s85 = ssub.s32 %s9, %s16
    %p86 = scmp.eq.s32.totalorder %s85, 0
    %s88 = sadd.s32 %s87, 1
    %s89 = scalar_select %p86, %s87, %s88
    %p92 = pneg %p86
    %p93 = scmp.eq.s32.totalorder %s9, 1
    %p94 = por %p92, %p93
    %p95 = scmp.ne.s32.totalorder %s87, %s90
    %p96 = scmp.eq.s32.totalorder %s9, 0
    %p97 = por %p95, %p96
    %p98 = scmp.ne.s32.totalorder %s87, %s90
    %p99 = scmp.eq.s32.totalorder %s14, 1
    %p100 = por %p98, %p99
    %p101 = scmp.ne.s32.totalorder %s90, %s91
    %p102 = scmp.eq.s32.totalorder %s14, 0
    %p103 = por %p101, %p102
    %p104 = scmp.ne.s32.totalorder %s90, %s91
    %p105 = scmp.eq.s32.totalorder %s15, 1
    %p106 = por %p104, %p105
    %p108 = scmp.ne.s32.totalorder %s91, %s107
    %p109 = scmp.eq.s32.totalorder %s15, 0
    %p110 = por %p108, %p109
    %p111 = scmp.le.s32.totalorder 1, %s9
    %p112 = scmp.lt.s32.totalorder %s9, 3
    %p113 = pnand %p111, %p112
    %p114 = pneg %p113
    // Predicated region
    $region9: #{self_attention_forward.1} parent=5 // pred_check
      _
    $region10: #{self_attention_forward.1} parent=5 // pred_check_branch
      %116 = sbr.rel (%p113) target = $region12
    $region11: #{self_attention_forward.1} parent=5 // pred_region
      %s117 = ssub.s32 %s9, 1
      // Predicated region
      $region13: #{self_attention_forward.1} parent=11 // pred_check
        %p118 = pneg %p56
      $region14: #{self_attention_forward.1} parent=11 // pred_check_branch
        %120 = sbr.rel (%p118) target = $region16
      $region15: #{self_attention_forward.1} parent=11 // pred_region
        _
      $region16: #{self_attention_forward.1} parent=11 // pred_fallthru
        _
      // Predicated region
      $region17: #{self_attention_forward.1} parent=11 // pred_check
        %p121 = pneg %p77
      $region18: #{self_attention_forward.1} parent=11 // pred_check_branch
        %123 = sbr.rel (%p121) target = $region20
      $region19: #{self_attention_forward.1} parent=11 // pred_region
        _
      $region20: #{self_attention_forward.1} parent=11 // pred_fallthru
        _
    $region12: #{self_attention_forward.1} parent=5 // pred_fallthru
      _
    %p124 = scmp.lt.s32.totalorder %s9, 2
    // Predicated region
    $region21: #{self_attention_forward.1} parent=5 // pred_check
      %p125 = pneg %p124
    $region22: #{self_attention_forward.1} parent=5 // pred_check_branch
      %127 = sbr.rel (%p125) target = $region24
    $region23: #{self_attention_forward.1} parent=5 // pred_region
      // Predicated region
      $region25: #{self_attention_forward.1} parent=23 // pred_check
        %p128 = pneg %p29
      $region26: #{self_attention_forward.1} parent=23 // pred_check_branch
        %130 = sbr.rel (%p128) target = $region28
      $region27: #{self_attention_forward.1} parent=23 // pred_region
        %p131 = scmp.lt.s32.totalorder %s9, 1
        %s132 = scalar_select %p131, %s9, 1
        %s133 = smul.addr %s132, 2
        %s134 = smul.addr %s133, 8
        %s135 = scalar_lea.vmem %s0, %s134
      $region28: #{self_attention_forward.1} parent=23 // pred_fallthru
        _
    $region24: #{self_attention_forward.1} parent=5 // pred_fallthru
      _
    %p136 = scmp.le.s32.totalorder 1, %s9
    %p137 = scmp.lt.s32.totalorder %s9, 3
    %p138 = pnand %p136, %p137
    %p139 = pneg %p138
    // Predicated region
    $region29: #{self_attention_forward.1} parent=5 // pred_check
      _
    $region30: #{self_attention_forward.1} parent=5 // pred_check_branch
      %141 = sbr.rel (%p138) target = $region32
    $region31: #{self_attention_forward.1} parent=5 // pred_region
      %s142 = ssub.s32 %s9, 1
      %p143 = scmp.lt.s32.totalorder %s14, 1
      %s144 = scalar_select %p143, %s14, 1
      %s145 = smul.addr %s144, 2
      %s146 = smul.addr %s145, 8
      %s147 = scalar_lea.vmem %s0, %s146
      %p148 = pneg %p35
      %p149 = pneg %p32
      %p150 = pneg %p56
      %p151 = pneg %p53
      %p152 = pneg %p77
      %p153 = pneg %p74
      %p154 = pneg %p103
      %p155 = pneg %p100
      %p156 = scmp.lt.s32.totalorder %s14, 1
      %s157 = scalar_select %p156, %s14, 1
      %s158 = smul.addr %s157, 8
      %s159 = smul.addr %s158, 8
      %s160 = scalar_lea.vmem %s3, %s159
      %p161 = scmp.lt.s32.totalorder %s14, 1
      %s162 = scalar_select %p161, %s14, 1
      %s163 = smul.addr %s162, 2
      %s164 = smul.addr %s163, 8
      %s165 = scalar_lea.vmem %s0, %s164
      %p166 = scmp.lt.s32.totalorder %s14, 1
      %s167 = scalar_select %p166, %s14, 1
      %s168 = smul.addr %s167, 8
      %s169 = smul.addr %s168, 8
      %s170 = scalar_lea.vmem %s3, %s169
      %v172 = vld [vmem:[%s165] sm:$0xff]
      %v173 = vld [vmem:[%s165 + $0x8] sm:$0xff]
      %174 = vxpose.xlu0.b32.start [1/16] %v172, 128
      %175 = vxpose.xlu0.b32.cont [2/16] %v173, 128
      %176 = vxpose.xlu0.b32.cont [3/16] 0.0, 128
      %177 = vxpose.xlu0.b32.cont [4/16] 0.0, 128
      %178 = vxpose.xlu0.b32.cont [5/16] 0.0, 128
      %179 = vxpose.xlu0.b32.cont [6/16] 0.0, 128
      %180 = vxpose.xlu0.b32.cont [7/16] 0.0, 128
      %181 = vxpose.xlu0.b32.cont [8/16] 0.0, 128
      %182 = vxpose.xlu0.b32.cont [9/16] 0.0, 128
      %183 = vxpose.xlu0.b32.cont [10/16] 0.0, 128
      %184 = vxpose.xlu0.b32.cont [11/16] 0.0, 128
      %185 = vxpose.xlu0.b32.cont [12/16] 0.0, 128
      %186 = vxpose.xlu0.b32.cont [13/16] 0.0, 128
      %187 = vxpose.xlu0.b32.cont [14/16] 0.0, 128
      %188 = vxpose.xlu0.b32.cont [15/16] 0.0, 128
      %189 = vxpose.xlu0.b32.end [16/16] 0.0, 128
      %v190 = vpop.trf.xlu0
      %v191 = vpop.trf.xlu0
      %v192 = vpop.trf.xlu0
      %v193 = vpop.trf.xlu0
      %v194 = vpop.trf.xlu0
      %v195 = vpop.trf.xlu0
      %v196 = vpop.trf.xlu0
      %v197 = vpop.trf.xlu0
      %v198 = vpop.trf.xlu0
      %v199 = vpop.trf.xlu0
      %v200 = vpop.trf.xlu0
      %v201 = vpop.trf.xlu0
      %v202 = vpop.trf.xlu0
      %v203 = vpop.trf.xlu0
      %v204 = vpop.trf.xlu0
      %v205 = vpop.trf.xlu0
      %vm206 = vcmask 130048
      %v207 = vsel %vm206, %v190, 0.0
      %208 = vadd.xlane.f32.xlu0 %v207
      %v209 = vpop.xlane.xlu0 %208
      %v210 = vsel %vm206, %v191, 0.0
      %211 = vadd.xlane.f32.xlu0 %v210
      %v212 = vpop.xlane.xlu0 %211
      %v213 = vsel %vm206, %v192, 0.0
      %214 = vadd.xlane.f32.xlu0 %v213
      %v215 = vpop.xlane.xlu0 %214
      %v216 = vsel %vm206, %v193, 0.0
      %217 = vadd.xlane.f32.xlu0 %v216
      %v218 = vpop.xlane.xlu0 %217
      %v219 = vsel %vm206, %v194, 0.0
      %220 = vadd.xlane.f32.xlu0 %v219
      %v221 = vpop.xlane.xlu0 %220
      %v222 = vsel %vm206, %v195, 0.0
      %223 = vadd.xlane.f32.xlu0 %v222
      %v224 = vpop.xlane.xlu0 %223
      %v225 = vsel %vm206, %v196, 0.0
      %226 = vadd.xlane.f32.xlu0 %v225
      %v227 = vpop.xlane.xlu0 %226
      %v228 = vsel %vm206, %v197, 0.0
      %229 = vadd.xlane.f32.xlu0 %v228
      %v230 = vpop.xlane.xlu0 %229
      %v231 = vsel %vm206, %v198, 0.0
      %232 = vadd.xlane.f32.xlu0 %v231
      %v233 = vpop.xlane.xlu0 %232
      %v234 = vsel %vm206, %v199, 0.0
      %235 = vadd.xlane.f32.xlu0 %v234
      %v236 = vpop.xlane.xlu0 %235
      %v237 = vsel %vm206, %v200, 0.0
      %238 = vadd.xlane.f32.xlu0 %v237
      %v239 = vpop.xlane.xlu0 %238
      %v240 = vsel %vm206, %v201, 0.0
      %241 = vadd.xlane.f32.xlu0 %v240
      %v242 = vpop.xlane.xlu0 %241
      %v243 = vsel %vm206, %v202, 0.0
      %244 = vadd.xlane.f32.xlu0 %v243
      %v245 = vpop.xlane.xlu0 %244
      %v246 = vsel %vm206, %v203, 0.0
      %247 = vadd.xlane.f32.xlu0 %v246
      %v248 = vpop.xlane.xlu0 %247
      %v249 = vsel %vm206, %v204, 0.0
      %250 = vadd.xlane.f32.xlu0 %v249
      %v251 = vpop.xlane.xlu0 %250
      %v252 = vsel %vm206, %v205, 0.0
      %253 = vadd.xlane.f32.xlu0 %v252
      %v254 = vpop.xlane.xlu0 %253
      %v255 = vrcp.pop 16.0
      %v256 = vmul.f32 %v209, %v255
      %v257 = vmul.f32 %v212, %v255
      %v258 = vmul.f32 %v215, %v255
      %v259 = vmul.f32 %v218, %v255
      %v260 = vmul.f32 %v221, %v255
      %v261 = vmul.f32 %v224, %v255
      %v262 = vmul.f32 %v227, %v255
      %v263 = vmul.f32 %v230, %v255
      %v264 = vmul.f32 %v233, %v255
      %v265 = vmul.f32 %v236, %v255
      %v266 = vmul.f32 %v239, %v255
      %v267 = vmul.f32 %v242, %v255
      %v268 = vmul.f32 %v245, %v255
      %v269 = vmul.f32 %v248, %v255
      %v270 = vmul.f32 %v251, %v255
      %v271 = vmul.f32 %v254, %v255
      %v272 = vsub.f32 %v190, %v256
      %v273 = vsub.f32 %v191, %v257
      %v274 = vsub.f32 %v192, %v258
      %v275 = vsub.f32 %v193, %v259
      %v276 = vsub.f32 %v194, %v260
      %v277 = vsub.f32 %v195, %v261
      %v278 = vsub.f32 %v196, %v262
      %v279 = vsub.f32 %v197, %v263
      %v280 = vsub.f32 %v198, %v264
      %v281 = vsub.f32 %v199, %v265
      %v282 = vsub.f32 %v200, %v266
      %v283 = vsub.f32 %v201, %v267
      %v284 = vsub.f32 %v202, %v268
      %v285 = vsub.f32 %v203, %v269
      %v286 = vsub.f32 %v204, %v270
      %v287 = vsub.f32 %v205, %v271
      %v288 = vmul.f32 %v272, %v272
      %v289 = vmul.f32 %v273, %v273
      %v290 = vmul.f32 %v274, %v274
      %v291 = vmul.f32 %v275, %v275
      %v292 = vmul.f32 %v276, %v276
      %v293 = vmul.f32 %v277, %v277
      %v294 = vmul.f32 %v278, %v278
      %v295 = vmul.f32 %v279, %v279
      %v296 = vmul.f32 %v280, %v280
      %v297 = vmul.f32 %v281, %v281
      %v298 = vmul.f32 %v282, %v282
      %v299 = vmul.f32 %v283, %v283
      %v300 = vmul.f32 %v284, %v284
      %v301 = vmul.f32 %v285, %v285
      %v302 = vmul.f32 %v286, %v286
      %v303 = vmul.f32 %v287, %v287
      %v304 = vsel %vm206, %v288, 0.0
      %305 = vadd.xlane.f32.xlu0 %v304
      %v306 = vpop.xlane.xlu0 %305
      %v307 = vsel %vm206, %v289, 0.0
      %308 = vadd.xlane.f32.xlu0 %v307
      %v309 = vpop.xlane.xlu0 %308
      %v310 = vsel %vm206, %v290, 0.0
      %311 = vadd.xlane.f32.xlu0 %v310
      %v312 = vpop.xlane.xlu0 %311
      %v313 = vsel %vm206, %v291, 0.0
      %314 = vadd.xlane.f32.xlu0 %v313
      %v315 = vpop.xlane.xlu0 %314
      %v316 = vsel %vm206, %v292, 0.0
      %317 = vadd.xlane.f32.xlu0 %v316
      %v318 = vpop.xlane.xlu0 %317
      %v319 = vsel %vm206, %v293, 0.0
      %320 = vadd.xlane.f32.xlu0 %v319
      %v321 = vpop.xlane.xlu0 %320
      %v322 = vsel %vm206, %v294, 0.0
      %323 = vadd.xlane.f32.xlu0 %v322
      %v324 = vpop.xlane.xlu0 %323
      %v325 = vsel %vm206, %v295, 0.0
      %326 = vadd.xlane.f32.xlu0 %v325
      %v327 = vpop.xlane.xlu0 %326
      %v328 = vsel %vm206, %v296, 0.0
      %329 = vadd.xlane.f32.xlu0 %v328
      %v330 = vpop.xlane.xlu0 %329
      %v331 = vsel %vm206, %v297, 0.0
      %332 = vadd.xlane.f32.xlu0 %v331
      %v333 = vpop.xlane.xlu0 %332
      %v334 = vsel %vm206, %v298, 0.0
      %335 = vadd.xlane.f32.xlu0 %v334
      %v336 = vpop.xlane.xlu0 %335
      %v337 = vsel %vm206, %v299, 0.0
      %338 = vadd.xlane.f32.xlu0 %v337
      %v339 = vpop.xlane.xlu0 %338
      %v340 = vsel %vm206, %v300, 0.0
      %341 = vadd.xlane.f32.xlu0 %v340
      %v342 = vpop.xlane.xlu0 %341
      %v343 = vsel %vm206, %v301, 0.0
      %344 = vadd.xlane.f32.xlu0 %v343
      %v345 = vpop.xlane.xlu0 %344
      %v346 = vsel %vm206, %v302, 0.0
      %347 = vadd.xlane.f32.xlu0 %v346
      %v348 = vpop.xlane.xlu0 %347
      %v349 = vsel %vm206, %v303, 0.0
      %350 = vadd.xlane.f32.xlu0 %v349
      %v351 = vpop.xlane.xlu0 %350
      %v352 = vmul.f32 %v306, %v255
      %v353 = vmul.f32 %v309, %v255
      %v354 = vmul.f32 %v312, %v255
      %v355 = vmul.f32 %v315, %v255
      %v356 = vmul.f32 %v318, %v255
      %v357 = vmul.f32 %v321, %v255
      %v358 = vmul.f32 %v324, %v255
      %v359 = vmul.f32 %v327, %v255
      %v360 = vmul.f32 %v330, %v255
      %v361 = vmul.f32 %v333, %v255
      %v362 = vmul.f32 %v336, %v255
      %v363 = vmul.f32 %v339, %v255
      %v364 = vmul.f32 %v342, %v255
      %v365 = vmul.f32 %v345, %v255
      %v366 = vmul.f32 %v348, %v255
      %v367 = vmul.f32 %v351, %v255
      %v368 = vadd.f32 %v352, 1e-05
      %v369 = vadd.f32 %v353, 1e-05
      %v370 = vadd.f32 %v354, 1e-05
      %v371 = vadd.f32 %v355, 1e-05
      %v372 = vadd.f32 %v356, 1e-05
      %v373 = vadd.f32 %v357, 1e-05
      %v374 = vadd.f32 %v358, 1e-05
      %v375 = vadd.f32 %v359, 1e-05
      %v376 = vadd.f32 %v360, 1e-05
      %v377 = vadd.f32 %v361, 1e-05
      %v378 = vadd.f32 %v362, 1e-05
      %v379 = vadd.f32 %v363, 1e-05
      %v380 = vadd.f32 %v364, 1e-05
      %v381 = vadd.f32 %v365, 1e-05
      %v382 = vadd.f32 %v366, 1e-05
      %v383 = vadd.f32 %v367, 1e-05
      %v384 = vrsqrt.pop %v368
      %v385 = vrsqrt.pop %v369
      %v386 = vrsqrt.pop %v370
      %v387 = vrsqrt.pop %v371
      %v388 = vrsqrt.pop %v372
      %v389 = vrsqrt.pop %v373
      %v390 = vrsqrt.pop %v374
      %v391 = vrsqrt.pop %v375
      %v392 = vrsqrt.pop %v376
      %v393 = vrsqrt.pop %v377
      %v394 = vrsqrt.pop %v378
      %v395 = vrsqrt.pop %v379
      %v396 = vrsqrt.pop %v380
      %v397 = vrsqrt.pop %v381
      %v398 = vrsqrt.pop %v382
      %v399 = vrsqrt.pop %v383
      %v400 = vmul.f32 %v272, %v384
      %v401 = vmul.f32 %v273, %v385
      %v402 = vmul.f32 %v274, %v386
      %v403 = vmul.f32 %v275, %v387
      %v404 = vmul.f32 %v276, %v388
      %v405 = vmul.f32 %v277, %v389
      %v406 = vmul.f32 %v278, %v390
      %v407 = vmul.f32 %v279, %v391
      %v408 = vmul.f32 %v280, %v392
      %v409 = vmul.f32 %v281, %v393
      %v410 = vmul.f32 %v282, %v394
      %v411 = vmul.f32 %v283, %v395
      %v412 = vmul.f32 %v284, %v396
      %v413 = vmul.f32 %v285, %v397
      %v414 = vmul.f32 %v286, %v398
      %v415 = vmul.f32 %v287, %v399
      %v416 = vpack.c.bf16 %v401, %v400
      %v417 = vpack.c.bf16 %v403, %v402
      %v418 = vpack.c.bf16 %v405, %v404
      %v419 = vpack.c.bf16 %v407, %v406
      %v420 = vpack.c.bf16 %v409, %v408
      %v421 = vpack.c.bf16 %v411, %v410
      %v422 = vpack.c.bf16 %v413, %v412
      %v423 = vpack.c.bf16 %v415, %v414
      %v424 = vld [vmem:[%s1] sm:$0xff]
      %v425 = vld [vmem:[%s1 + $0x8] sm:$0xff]
      %v426 = vld [vmem:[%s2] sm:$0x3]
      %v428 = vlaneseq
      %v429 = vshrl.u32 %v428, 7
      %v430 = vsub.s32 0, %v429
      %v431 = vrot.slane %v426, %v430
      %v432 = vlaneseq
      %v433 = vshrl.u32 %v432, 7
      %v434 = vsub.s32 1, %v433
      %v435 = vrot.slane %v426, %v434
      %v440 = vunpack.c.l.b16 %v424
      %v441 = vunpack.c.h.b16 %v424
      %v442 = vunpack.c.l.b16 %v425
      %v443 = vunpack.c.h.b16 %v425
      %v444 = vpack.c.b16 %v442, %v440
      %v445 = vpack.c.b16 %v443, %v441
      %v449 = vsel %vm206, %v416, 0
      %v452 = vsel %vm206, %v417, 0
      %v455 = vsel %vm206, %v418, 0
      %v458 = vsel %vm206, %v419, 0
      %v461 = vsel %vm206, %v420, 0
      %v464 = vsel %vm206, %v421, 0
      %v467 = vsel %vm206, %v422, 0
      %v470 = vsel %vm206, %v423, 0
      %472 = vmatprep.subr.bf16.mxu0 0
      %473 = vmatpush1.bf16.msra.mxu0 0
      %474 = vmatprep.subr.bf16.mxu0 0
      %475 = vmatpush1.bf16.msra.mxu0 0
      %476 = vmatprep.subr.bf16.mxu0 0
      %477 = vmatpush1.bf16.msra.mxu0 0
      %478 = vmatprep.subr.bf16.mxu0 0
      %479 = vmatpush1.bf16.msra.mxu0 0
      %480 = vmatprep.subr.bf16.mxu0 0
      %481 = vmatpush1.bf16.msra.mxu0 0
      %482 = vmatprep.subr.bf16.mxu0 0
      %483 = vmatpush1.bf16.msra.mxu0 0
      %484 = vmatprep.subr.bf16.mxu0 0
      %485 = vmatpush1.bf16.msra.mxu0 0
      %486 = vmatprep.subr.bf16.mxu0 %v445
      %487 = vmatpush1.bf16.msra.mxu0 %v444
      %488 = vmatprep.subr.bf16.mxu0 0
      %489 = vmatpush2.bf16.msra.mxu0 0
      %490 = vmatprep.subr.bf16.mxu0 0
      %491 = vmatpush2.bf16.msra.mxu0 0
      %492 = vmatprep.subr.bf16.mxu0 0
      %493 = vmatpush2.bf16.msra.mxu0 0
      %494 = vmatprep.subr.bf16.mxu0 0
      %495 = vmatpush2.bf16.msra.mxu0 0
      %496 = vmatprep.subr.bf16.mxu0 0
      %497 = vmatpush2.bf16.msra.mxu0 0
      %498 = vmatprep.subr.bf16.mxu0 0
      %499 = vmatpush2.bf16.msra.mxu0 0
      %500 = vmatprep.subr.bf16.mxu0 0
      %501 = vmatpush2.bf16.msra.mxu0 0
      %502 = vmatprep.subr.bf16.mxu0 0
      %503 = vmatpush2.bf16.msra.mxu0 0
      %504 = vmatprep.mubr.bf16.mxu0 0
      %505 = vmatmul.mubr.bf16.gmra.mxu0 %v449
      %v506 = vpop.f32.mrf.mxu0
      %v507 = vadd.f32 %v431, %v506
      %v508 = vpop.f32.mrf.mxu0
      %v509 = vadd.f32 %v435, %v508
      %v510 = vpop.f32.mrf.mxu0
      %v511 = vadd.f32 %v431, %v510
      %v512 = vpop.f32.mrf.mxu0
      %v513 = vadd.f32 %v435, %v512
      %514 = vmatprep.mubr.bf16.mxu0 0
      %515 = vmatmul.mubr.bf16.gmra.mxu0 %v452
      %v516 = vpop.f32.mrf.mxu0
      %v517 = vadd.f32 %v431, %v516
      %v518 = vpop.f32.mrf.mxu0
      %v519 = vadd.f32 %v435, %v518
      %v520 = vpop.f32.mrf.mxu0
      %v521 = vadd.f32 %v431, %v520
      %v522 = vpop.f32.mrf.mxu0
      %v523 = vadd.f32 %v435, %v522
      %524 = vmatprep.mubr.bf16.mxu0 0
      %525 = vmatmul.mubr.bf16.gmra.mxu0 %v455
      %v526 = vpop.f32.mrf.mxu0
      %v527 = vadd.f32 %v431, %v526
      %v528 = vpop.f32.mrf.mxu0
      %v529 = vadd.f32 %v435, %v528
      %v530 = vpop.f32.mrf.mxu0
      %v531 = vadd.f32 %v431, %v530
      %v532 = vpop.f32.mrf.mxu0
      %v533 = vadd.f32 %v435, %v532
      %534 = vmatprep.mubr.bf16.mxu0 0
      %535 = vmatmul.mubr.bf16.gmra.mxu0 %v458
      %v536 = vpop.f32.mrf.mxu0
      %v537 = vadd.f32 %v431, %v536
      %v538 = vpop.f32.mrf.mxu0
      %v539 = vadd.f32 %v435, %v538
      %v540 = vpop.f32.mrf.mxu0
      %v541 = vadd.f32 %v431, %v540
      %v542 = vpop.f32.mrf.mxu0
      %v543 = vadd.f32 %v435, %v542
      %544 = vmatprep.mubr.bf16.mxu0 0
      %545 = vmatmul.mubr.bf16.gmra.mxu0 %v461
      %v546 = vpop.f32.mrf.mxu0
      %v547 = vadd.f32 %v431, %v546
      %v548 = vpop.f32.mrf.mxu0
      %v549 = vadd.f32 %v435, %v548
      %v550 = vpop.f32.mrf.mxu0
      %v551 = vadd.f32 %v431, %v550
      %v552 = vpop.f32.mrf.mxu0
      %v553 = vadd.f32 %v435, %v552
      %554 = vmatprep.mubr.bf16.mxu0 0
      %555 = vmatmul.mubr.bf16.gmra.mxu0 %v464
      %v556 = vpop.f32.mrf.mxu0
      %v557 = vadd.f32 %v431, %v556
      %v558 = vpop.f32.mrf.mxu0
      %v559 = vadd.f32 %v435, %v558
      %v560 = vpop.f32.mrf.mxu0
      %v561 = vadd.f32 %v431, %v560
      %v562 = vpop.f32.mrf.mxu0
      %v563 = vadd.f32 %v435, %v562
      %564 = vmatprep.mubr.bf16.mxu0 0
      %565 = vmatmul.mubr.bf16.gmra.mxu0 %v467
      %v566 = vpop.f32.mrf.mxu0
      %v567 = vadd.f32 %v431, %v566
      %v568 = vpop.f32.mrf.mxu0
      %v569 = vadd.f32 %v435, %v568
      %v570 = vpop.f32.mrf.mxu0
      %v571 = vadd.f32 %v431, %v570
      %v572 = vpop.f32.mrf.mxu0
      %v573 = vadd.f32 %v435, %v572
      %574 = vmatprep.mubr.bf16.mxu0 0
      %575 = vmatmul.mubr.bf16.gmra.mxu0 %v470
      %v576 = vpop.f32.mrf.mxu0
      %v577 = vadd.f32 %v431, %v576
      %v578 = vpop.f32.mrf.mxu0
      %v579 = vadd.f32 %v435, %v578
      %v580 = vpop.f32.mrf.mxu0
      %v581 = vadd.f32 %v431, %v580
      %v582 = vpop.f32.mrf.mxu0
      %v583 = vadd.f32 %v435, %v582
      %584 = vdwg.mxu0
      %v585 = vpack.c.bf16 %v511, %v507
      %v586 = vpack.c.bf16 %v521, %v517
      %v587 = vpack.c.bf16 %v531, %v527
      %v588 = vpack.c.bf16 %v541, %v537
      %v589 = vpack.c.bf16 %v551, %v547
      %v590 = vpack.c.bf16 %v561, %v557
      %v591 = vpack.c.bf16 %v571, %v567
      %v592 = vpack.c.bf16 %v581, %v577
      %v593 = vpack.c.bf16 %v513, %v509
      %v594 = vpack.c.bf16 %v523, %v519
      %v595 = vpack.c.bf16 %v533, %v529
      %v596 = vpack.c.bf16 %v543, %v539
      %v597 = vpack.c.bf16 %v553, %v549
      %v598 = vpack.c.bf16 %v563, %v559
      %v599 = vpack.c.bf16 %v573, %v569
      %v600 = vpack.c.bf16 %v583, %v579
      %609 = vrot.lane.b32.xlu0 %v585, 96
      %v610 = vpop.permute.xlu0 %609
      %611 = vrot.lane.b32.xlu0 %v586, 96
      %v612 = vpop.permute.xlu0 %611
      %613 = vrot.lane.b32.xlu0 %v587, 96
      %v614 = vpop.permute.xlu0 %613
      %615 = vrot.lane.b32.xlu0 %v588, 96
      %v616 = vpop.permute.xlu0 %615
      %617 = vrot.lane.b32.xlu0 %v589, 96
      %v618 = vpop.permute.xlu0 %617
      %619 = vrot.lane.b32.xlu0 %v590, 96
      %v620 = vpop.permute.xlu0 %619
      %621 = vrot.lane.b32.xlu0 %v591, 96
      %v622 = vpop.permute.xlu0 %621
      %623 = vrot.lane.b32.xlu0 %v592, 96
      %v624 = vpop.permute.xlu0 %623
      %625 = vrot.lane.b32.xlu0 %v585, 64
      %v626 = vpop.permute.xlu0 %625
      %627 = vrot.lane.b32.xlu0 %v586, 64
      %v628 = vpop.permute.xlu0 %627
      %629 = vrot.lane.b32.xlu0 %v587, 64
      %v630 = vpop.permute.xlu0 %629
      %631 = vrot.lane.b32.xlu0 %v588, 64
      %v632 = vpop.permute.xlu0 %631
      %633 = vrot.lane.b32.xlu0 %v589, 64
      %v634 = vpop.permute.xlu0 %633
      %635 = vrot.lane.b32.xlu0 %v590, 64
      %v636 = vpop.permute.xlu0 %635
      %637 = vrot.lane.b32.xlu0 %v591, 64
      %v638 = vpop.permute.xlu0 %637
      %639 = vrot.lane.b32.xlu0 %v592, 64
      %v640 = vpop.permute.xlu0 %639
      %641 = vrot.lane.b32.xlu0 %v585, 32
      %v642 = vpop.permute.xlu0 %641
      %643 = vrot.lane.b32.xlu0 %v586, 32
      %v644 = vpop.permute.xlu0 %643
      %645 = vrot.lane.b32.xlu0 %v587, 32
      %v646 = vpop.permute.xlu0 %645
      %647 = vrot.lane.b32.xlu0 %v588, 32
      %v648 = vpop.permute.xlu0 %647
      %649 = vrot.lane.b32.xlu0 %v589, 32
      %v650 = vpop.permute.xlu0 %649
      %651 = vrot.lane.b32.xlu0 %v590, 32
      %v652 = vpop.permute.xlu0 %651
      %653 = vrot.lane.b32.xlu0 %v591, 32
      %v654 = vpop.permute.xlu0 %653
      %655 = vrot.lane.b32.xlu0 %v592, 32
      %v656 = vpop.permute.xlu0 %655
      %665 = vrot.lane.b32.xlu0 %v593, 96
      %v666 = vpop.permute.xlu0 %665
      %667 = vrot.lane.b32.xlu0 %v594, 96
      %v668 = vpop.permute.xlu0 %667
      %669 = vrot.lane.b32.xlu0 %v595, 96
      %v670 = vpop.permute.xlu0 %669
      %671 = vrot.lane.b32.xlu0 %v596, 96
      %v672 = vpop.permute.xlu0 %671
      %673 = vrot.lane.b32.xlu0 %v597, 96
      %v674 = vpop.permute.xlu0 %673
      %675 = vrot.lane.b32.xlu0 %v598, 96
      %v676 = vpop.permute.xlu0 %675
      %677 = vrot.lane.b32.xlu0 %v599, 96
      %v678 = vpop.permute.xlu0 %677
      %679 = vrot.lane.b32.xlu0 %v600, 96
      %v680 = vpop.permute.xlu0 %679
      %681 = vrot.lane.b32.xlu0 %v593, 64
      %v682 = vpop.permute.xlu0 %681
      %683 = vrot.lane.b32.xlu0 %v594, 64
      %v684 = vpop.permute.xlu0 %683
      %685 = vrot.lane.b32.xlu0 %v595, 64
      %v686 = vpop.permute.xlu0 %685
      %687 = vrot.lane.b32.xlu0 %v596, 64
      %v688 = vpop.permute.xlu0 %687
      %689 = vrot.lane.b32.xlu0 %v597, 64
      %v690 = vpop.permute.xlu0 %689
      %691 = vrot.lane.b32.xlu0 %v598, 64
      %v692 = vpop.permute.xlu0 %691
      %693 = vrot.lane.b32.xlu0 %v599, 64
      %v694 = vpop.permute.xlu0 %693
      %695 = vrot.lane.b32.xlu0 %v600, 64
      %v696 = vpop.permute.xlu0 %695
      %697 = vrot.lane.b32.xlu0 %v593, 32
      %v698 = vpop.permute.xlu0 %697
      %699 = vrot.lane.b32.xlu0 %v594, 32
      %v700 = vpop.permute.xlu0 %699
      %701 = vrot.lane.b32.xlu0 %v595, 32
      %v702 = vpop.permute.xlu0 %701
      %703 = vrot.lane.b32.xlu0 %v596, 32
      %v704 = vpop.permute.xlu0 %703
      %705 = vrot.lane.b32.xlu0 %v597, 32
      %v706 = vpop.permute.xlu0 %705
      %707 = vrot.lane.b32.xlu0 %v598, 32
      %v708 = vpop.permute.xlu0 %707
      %709 = vrot.lane.b32.xlu0 %v599, 32
      %v710 = vpop.permute.xlu0 %709
      %711 = vrot.lane.b32.xlu0 %v600, 32
      %v712 = vpop.permute.xlu0 %711
      %vm713 = vcmask 261120
      %v715 = vsel %vm713, %v585, 0
      %v718 = vsel %vm713, %v593, 0
      %720 = vmatprep.subr.bf16.mxu0 0
      %721 = vmatpush1.bf16.xpose.msra.mxu0 0
      %722 = vmatprep.subr.bf16.mxu0 0
      %723 = vmatpush1.bf16.xpose.msra.mxu0 0
      %724 = vmatprep.subr.bf16.mxu0 0
      %725 = vmatpush1.bf16.xpose.msra.mxu0 0
      %726 = vmatprep.subr.bf16.mxu0 0
      %727 = vmatpush1.bf16.xpose.msra.mxu0 0
      %728 = vmatprep.subr.bf16.mxu0 0
      %729 = vmatpush1.bf16.xpose.msra.mxu0 0
      %730 = vmatprep.subr.bf16.mxu0 0
      %731 = vmatpush1.bf16.xpose.msra.mxu0 0
      %732 = vmatprep.subr.bf16.mxu0 0
      %733 = vmatpush1.bf16.xpose.msra.mxu0 0
      %734 = vmatprep.subr.bf16.mxu0 0
      %735 = vmatpush1.bf16.xpose.msra.mxu0 %v718
      %736 = vmatprep.subr.bf16.mxu0 0
      %737 = vmatpush2.bf16.xpose.msra.mxu0 0
      %738 = vmatprep.subr.bf16.mxu0 0
      %739 = vmatpush2.bf16.xpose.msra.mxu0 0
      %740 = vmatprep.subr.bf16.mxu0 0
      %741 = vmatpush2.bf16.xpose.msra.mxu0 0
      %742 = vmatprep.subr.bf16.mxu0 0
      %743 = vmatpush2.bf16.xpose.msra.mxu0 0
      %744 = vmatprep.subr.bf16.mxu0 0
      %745 = vmatpush2.bf16.xpose.msra.mxu0 0
      %746 = vmatprep.subr.bf16.mxu0 0
      %747 = vmatpush2.bf16.xpose.msra.mxu0 0
      %748 = vmatprep.subr.bf16.mxu0 0
      %749 = vmatpush2.bf16.xpose.msra.mxu0 0
      %750 = vmatprep.subr.bf16.mxu0 0
      %751 = vmatpush2.bf16.xpose.msra.mxu0 0
      %752 = vmatprep.mubr.bf16.mxu0 0
      %753 = vmatmul.mubr.bf16.gmra.mxu0 %v715
      %v754 = vpop.f32.mrf.mxu0
      %v755 = vadd.f32 0.0, %v754
      %v756 = vpop.f32.mrf.mxu0
      %v757 = vpop.f32.mrf.mxu0
      %v758 = vadd.f32 0.0, %v757
      %v759 = vpop.f32.mrf.mxu0
      %760 = vdwg.mxu0
      %v762 = vsel %vm713, %v586, 0
      %v765 = vsel %vm713, %v594, 0
      %767 = vmatprep.subr.bf16.mxu0 0
      %768 = vmatpush1.bf16.xpose.msra.mxu0 0
      %769 = vmatprep.subr.bf16.mxu0 0
      %770 = vmatpush1.bf16.xpose.msra.mxu0 0
      %771 = vmatprep.subr.bf16.mxu0 0
      %772 = vmatpush1.bf16.xpose.msra.mxu0 0
      %773 = vmatprep.subr.bf16.mxu0 0
      %774 = vmatpush1.bf16.xpose.msra.mxu0 0
      %775 = vmatprep.subr.bf16.mxu0 0
      %776 = vmatpush1.bf16.xpose.msra.mxu0 0
      %777 = vmatprep.subr.bf16.mxu0 0
      %778 = vmatpush1.bf16.xpose.msra.mxu0 0
      %779 = vmatprep.subr.bf16.mxu0 0
      %780 = vmatpush1.bf16.xpose.msra.mxu0 0
      %781 = vmatprep.subr.bf16.mxu0 0
      %782 = vmatpush1.bf16.xpose.msra.mxu0 %v765
      %783 = vmatprep.subr.bf16.mxu0 0
      %784 = vmatpush2.bf16.xpose.msra.mxu0 0
      %785 = vmatprep.subr.bf16.mxu0 0
      %786 = vmatpush2.bf16.xpose.msra.mxu0 0
      %787 = vmatprep.subr.bf16.mxu0 0
      %788 = vmatpush2.bf16.xpose.msra.mxu0 0
      %789 = vmatprep.subr.bf16.mxu0 0
      %790 = vmatpush2.bf16.xpose.msra.mxu0 0
      %791 = vmatprep.subr.bf16.mxu0 0
      %792 = vmatpush2.bf16.xpose.msra.mxu0 0
      %793 = vmatprep.subr.bf16.mxu0 0
      %794 = vmatpush2.bf16.xpose.msra.mxu0 0
      %795 = vmatprep.subr.bf16.mxu0 0
      %796 = vmatpush2.bf16.xpose.msra.mxu0 0
      %797 = vmatprep.subr.bf16.mxu0 0
      %798 = vmatpush2.bf16.xpose.msra.mxu0 0
      %799 = vmatprep.mubr.bf16.mxu0 0
      %800 = vmatmul.mubr.bf16.gmra.mxu0 %v762
      %v801 = vpop.f32.mrf.mxu0
      %v802 = vadd.f32 0.0, %v801
      %v803 = vpop.f32.mrf.mxu0
      %v804 = vpop.f32.mrf.mxu0
      %v805 = vadd.f32 0.0, %v804
      %v806 = vpop.f32.mrf.mxu0
      %807 = vdwg.mxu0
      %v809 = vsel %vm713, %v587, 0
      %v812 = vsel %vm713, %v595, 0
      %814 = vmatprep.subr.bf16.mxu0 0
      %815 = vmatpush1.bf16.xpose.msra.mxu0 0
      %816 = vmatprep.subr.bf16.mxu0 0
      %817 = vmatpush1.bf16.xpose.msra.mxu0 0
      %818 = vmatprep.subr.bf16.mxu0 0
      %819 = vmatpush1.bf16.xpose.msra.mxu0 0
      %820 = vmatprep.subr.bf16.mxu0 0
      %821 = vmatpush1.bf16.xpose.msra.mxu0 0
      %822 = vmatprep.subr.bf16.mxu0 0
      %823 = vmatpush1.bf16.xpose.msra.mxu0 0
      %824 = vmatprep.subr.bf16.mxu0 0
      %825 = vmatpush1.bf16.xpose.msra.mxu0 0
      %826 = vmatprep.subr.bf16.mxu0 0
      %827 = vmatpush1.bf16.xpose.msra.mxu0 0
      %828 = vmatprep.subr.bf16.mxu0 0
      %829 = vmatpush1.bf16.xpose.msra.mxu0 %v812
      %830 = vmatprep.subr.bf16.mxu0 0
      %831 = vmatpush2.bf16.xpose.msra.mxu0 0
      %832 = vmatprep.subr.bf16.mxu0 0
      %833 = vmatpush2.bf16.xpose.msra.mxu0 0
      %834 = vmatprep.subr.bf16.mxu0 0
      %835 = vmatpush2.bf16.xpose.msra.mxu0 0
      %836 = vmatprep.subr.bf16.mxu0 0
      %837 = vmatpush2.bf16.xpose.msra.mxu0 0
      %838 = vmatprep.subr.bf16.mxu0 0
      %839 = vmatpush2.bf16.xpose.msra.mxu0 0
      %840 = vmatprep.subr.bf16.mxu0 0
      %841 = vmatpush2.bf16.xpose.msra.mxu0 0
      %842 = vmatprep.subr.bf16.mxu0 0
      %843 = vmatpush2.bf16.xpose.msra.mxu0 0
      %844 = vmatprep.subr.bf16.mxu0 0
      %845 = vmatpush2.bf16.xpose.msra.mxu0 0
      %846 = vmatprep.mubr.bf16.mxu0 0
      %847 = vmatmul.mubr.bf16.gmra.mxu0 %v809
      %v848 = vpop.f32.mrf.mxu0
      %v849 = vadd.f32 0.0, %v848
      %v850 = vpop.f32.mrf.mxu0
      %v851 = vpop.f32.mrf.mxu0
      %v852 = vadd.f32 0.0, %v851
      %v853 = vpop.f32.mrf.mxu0
      %854 = vdwg.mxu0
      %v856 = vsel %vm713, %v588, 0
      %v859 = vsel %vm713, %v596, 0
      %861 = vmatprep.subr.bf16.mxu0 0
      %862 = vmatpush1.bf16.xpose.msra.mxu0 0
      %863 = vmatprep.subr.bf16.mxu0 0
      %864 = vmatpush1.bf16.xpose.msra.mxu0 0
      %865 = vmatprep.subr.bf16.mxu0 0
      %866 = vmatpush1.bf16.xpose.msra.mxu0 0
      %867 = vmatprep.subr.bf16.mxu0 0
      %868 = vmatpush1.bf16.xpose.msra.mxu0 0
      %869 = vmatprep.subr.bf16.mxu0 0
      %870 = vmatpush1.bf16.xpose.msra.mxu0 0
      %871 = vmatprep.subr.bf16.mxu0 0
      %872 = vmatpush1.bf16.xpose.msra.mxu0 0
      %873 = vmatprep.subr.bf16.mxu0 0
      %874 = vmatpush1.bf16.xpose.msra.mxu0 0
      %875 = vmatprep.subr.bf16.mxu0 0
      %876 = vmatpush1.bf16.xpose.msra.mxu0 %v859
      %877 = vmatprep.subr.bf16.mxu0 0
      %878 = vmatpush2.bf16.xpose.msra.mxu0 0
      %879 = vmatprep.subr.bf16.mxu0 0
      %880 = vmatpush2.bf16.xpose.msra.mxu0 0
      %881 = vmatprep.subr.bf16.mxu0 0
      %882 = vmatpush2.bf16.xpose.msra.mxu0 0
      %883 = vmatprep.subr.bf16.mxu0 0
      %884 = vmatpush2.bf16.xpose.msra.mxu0 0
      %885 = vmatprep.subr.bf16.mxu0 0
      %886 = vmatpush2.bf16.xpose.msra.mxu0 0
      %887 = vmatprep.subr.bf16.mxu0 0
      %888 = vmatpush2.bf16.xpose.msra.mxu0 0
      %889 = vmatprep.subr.bf16.mxu0 0
      %890 = vmatpush2.bf16.xpose.msra.mxu0 0
      %891 = vmatprep.subr.bf16.mxu0 0
      %892 = vmatpush2.bf16.xpose.msra.mxu0 0
      %893 = vmatprep.mubr.bf16.mxu0 0
      %894 = vmatmul.mubr.bf16.gmra.mxu0 %v856
      %v895 = vpop.f32.mrf.mxu0
      %v896 = vadd.f32 0.0, %v895
      %v897 = vpop.f32.mrf.mxu0
      %v898 = vpop.f32.mrf.mxu0
      %v899 = vadd.f32 0.0, %v898
      %v900 = vpop.f32.mrf.mxu0
      %901 = vdwg.mxu0
      %v903 = vsel %vm713, %v589, 0
      %v906 = vsel %vm713, %v597, 0
      %908 = vmatprep.subr.bf16.mxu0 0
      %909 = vmatpush1.bf16.xpose.msra.mxu0 0
      %910 = vmatprep.subr.bf16.mxu0 0
      %911 = vmatpush1.bf16.xpose.msra.mxu0 0
      %912 = vmatprep.subr.bf16.mxu0 0
      %913 = vmatpush1.bf16.xpose.msra.mxu0 0
      %914 = vmatprep.subr.bf16.mxu0 0
      %915 = vmatpush1.bf16.xpose.msra.mxu0 0
      %916 = vmatprep.subr.bf16.mxu0 0
      %917 = vmatpush1.bf16.xpose.msra.mxu0 0
      %918 = vmatprep.subr.bf16.mxu0 0
      %919 = vmatpush1.bf16.xpose.msra.mxu0 0
      %920 = vmatprep.subr.bf16.mxu0 0
      %921 = vmatpush1.bf16.xpose.msra.mxu0 0
      %922 = vmatprep.subr.bf16.mxu0 0
      %923 = vmatpush1.bf16.xpose.msra.mxu0 %v906
      %924 = vmatprep.subr.bf16.mxu0 0
      %925 = vmatpush2.bf16.xpose.msra.mxu0 0
      %926 = vmatprep.subr.bf16.mxu0 0
      %927 = vmatpush2.bf16.xpose.msra.mxu0 0
      %928 = vmatprep.subr.bf16.mxu0 0
      %929 = vmatpush2.bf16.xpose.msra.mxu0 0
      %930 = vmatprep.subr.bf16.mxu0 0
      %931 = vmatpush2.bf16.xpose.msra.mxu0 0
      %932 = vmatprep.subr.bf16.mxu0 0
      %933 = vmatpush2.bf16.xpose.msra.mxu0 0
      %934 = vmatprep.subr.bf16.mxu0 0
      %935 = vmatpush2.bf16.xpose.msra.mxu0 0
      %936 = vmatprep.subr.bf16.mxu0 0
      %937 = vmatpush2.bf16.xpose.msra.mxu0 0
      %938 = vmatprep.subr.bf16.mxu0 0
      %939 = vmatpush2.bf16.xpose.msra.mxu0 0
      %940 = vmatprep.mubr.bf16.mxu0 0
      %941 = vmatmul.mubr.bf16.gmra.mxu0 %v903
      %v942 = vpop.f32.mrf.mxu0
      %v943 = vadd.f32 0.0, %v942
      %v944 = vpop.f32.mrf.mxu0
      %v945 = vpop.f32.mrf.mxu0
      %v946 = vadd.f32 0.0, %v945
      %v947 = vpop.f32.mrf.mxu0
      %948 = vdwg.mxu0
      %v950 = vsel %vm713, %v590, 0
      %v953 = vsel %vm713, %v598, 0
      %955 = vmatprep.subr.bf16.mxu0 0
      %956 = vmatpush1.bf16.xpose.msra.mxu0 0
      %957 = vmatprep.subr.bf16.mxu0 0
      %958 = vmatpush1.bf16.xpose.msra.mxu0 0
      %959 = vmatprep.subr.bf16.mxu0 0
      %960 = vmatpush1.bf16.xpose.msra.mxu0 0
      %961 = vmatprep.subr.bf16.mxu0 0
      %962 = vmatpush1.bf16.xpose.msra.mxu0 0
      %963 = vmatprep.subr.bf16.mxu0 0
      %964 = vmatpush1.bf16.xpose.msra.mxu0 0
      %965 = vmatprep.subr.bf16.mxu0 0
      %966 = vmatpush1.bf16.xpose.msra.mxu0 0
      %967 = vmatprep.subr.bf16.mxu0 0
      %968 = vmatpush1.bf16.xpose.msra.mxu0 0
      %969 = vmatprep.subr.bf16.mxu0 0
      %970 = vmatpush1.bf16.xpose.msra.mxu0 %v953
      %971 = vmatprep.subr.bf16.mxu0 0
      %972 = vmatpush2.bf16.xpose.msra.mxu0 0
      %973 = vmatprep.subr.bf16.mxu0 0
      %974 = vmatpush2.bf16.xpose.msra.mxu0 0
      %975 = vmatprep.subr.bf16.mxu0 0
      %976 = vmatpush2.bf16.xpose.msra.mxu0 0
      %977 = vmatprep.subr.bf16.mxu0 0
      %978 = vmatpush2.bf16.xpose.msra.mxu0 0
      %979 = vmatprep.subr.bf16.mxu0 0
      %980 = vmatpush2.bf16.xpose.msra.mxu0 0
      %981 = vmatprep.subr.bf16.mxu0 0
      %982 = vmatpush2.bf16.xpose.msra.mxu0 0
      %983 = vmatprep.subr.bf16.mxu0 0
      %984 = vmatpush2.bf16.xpose.msra.mxu0 0
      %985 = vmatprep.subr.bf16.mxu0 0
      %986 = vmatpush2.bf16.xpose.msra.mxu0 0
      %987 = vmatprep.mubr.bf16.mxu0 0
      %988 = vmatmul.mubr.bf16.gmra.mxu0 %v950
      %v989 = vpop.f32.mrf.mxu0
      %v990 = vadd.f32 0.0, %v989
      %v991 = vpop.f32.mrf.mxu0
      %v992 = vpop.f32.mrf.mxu0
      %v993 = vadd.f32 0.0, %v992
      %v994 = vpop.f32.mrf.mxu0
      %995 = vdwg.mxu0
      %v997 = vsel %vm713, %v591, 0
      %v1000 = vsel %vm713, %v599, 0
      %1002 = vmatprep.subr.bf16.mxu0 0
      %1003 = vmatpush1.bf16.xpose.msra.mxu0 0
      %1004 = vmatprep.subr.bf16.mxu0 0
      %1005 = vmatpush1.bf16.xpose.msra.mxu0 0
      %1006 = vmatprep.subr.bf16.mxu0 0
      %1007 = vmatpush1.bf16.xpose.msra.mxu0 0
      %1008 = vmatprep.subr.bf16.mxu0 0
      %1009 = vmatpush1.bf16.xpose.msra.mxu0 0
      %1010 = vmatprep.subr.bf16.mxu0 0
      %1011 = vmatpush1.bf16.xpose.msra.mxu0 0
      %1012 = vmatprep.subr.bf16.mxu0 0
      %1013 = vmatpush1.bf16.xpose.msra.mxu0 0
      %1014 = vmatprep.subr.bf16.mxu0 0
      %1015 = vmatpush1.bf16.xpose.msra.mxu0 0
      %1016 = vmatprep.subr.bf16.mxu0 0
      %1017 = vmatpush1.bf16.xpose.msra.mxu0 %v1000
      %1018 = vmatprep.subr.bf16.mxu0 0
      %1019 = vmatpush2.bf16.xpose.msra.mxu0 0
      %1020 = vmatprep.subr.bf16.mxu0 0
      %1021 = vmatpush2.bf16.xpose.msra.mxu0 0
      %1022 = vmatprep.subr.bf16.mxu0 0
      %1023 = vmatpush2.bf16.xpose.msra.mxu0 0
      %1024 = vmatprep.subr.bf16.mxu0 0
      %1025 = vmatpush2.bf16.xpose.msra.mxu0 0
      %1026 = vmatprep.subr.bf16.mxu0 0
      %1027 = vmatpush2.bf16.xpose.msra.mxu0 0
      %1028 = vmatprep.subr.bf16.mxu0 0
      %1029 = vmatpush2.bf16.xpose.msra.mxu0 0
      %1030 = vmatprep.subr.bf16.mxu0 0
      %1031 = vmatpush2.bf16.xpose.msra.mxu0 0
      %1032 = vmatprep.subr.bf16.mxu0 0
      %1033 = vmatpush2.bf16.xpose.msra.mxu0 0
      %1034 = vmatprep.mubr.bf16.mxu0 0
      %1035 = vmatmul.mubr.bf16.gmra.mxu0 %v997
      %v1036 = vpop.f32.mrf.mxu0
      %v1037 = vadd.f32 0.0, %v1036
      %v1038 = vpop.f32.mrf.mxu0
      %v1039 = vpop.f32.mrf.mxu0
      %v1040 = vadd.f32 0.0, %v1039
      %v1041 = vpop.f32.mrf.mxu0
      %1042 = vdwg.mxu0
      %v1044 = vsel %vm713, %v592, 0
      %v1047 = vsel %vm713, %v600, 0
      %1049 = vmatprep.subr.bf16.mxu0 0
      %1050 = vmatpush1.bf16.xpose.msra.mxu0 0
      %1051 = vmatprep.subr.bf16.mxu0 0
      %1052 = vmatpush1.bf16.xpose.msra.mxu0 0
      %1053 = vmatprep.subr.bf16.mxu0 0
      %1054 = vmatpush1.bf16.xpose.msra.mxu0 0
      %1055 = vmatprep.subr.bf16.mxu0 0
      %1056 = vmatpush1.bf16.xpose.msra.mxu0 0
      %1057 = vmatprep.subr.bf16.mxu0 0
      %1058 = vmatpush1.bf16.xpose.msra.mxu0 0
      %1059 = vmatprep.subr.bf16.mxu0 0
      %1060 = vmatpush1.bf16.xpose.msra.mxu0 0
      %1061 = vmatprep.subr.bf16.mxu0 0
      %1062 = vmatpush1.bf16.xpose.msra.mxu0 0
      %1063 = vmatprep.subr.bf16.mxu0 0
      %1064 = vmatpush1.bf16.xpose.msra.mxu0 %v1047
      %1065 = vmatprep.subr.bf16.mxu0 0
      %1066 = vmatpush2.bf16.xpose.msra.mxu0 0
      %1067 = vmatprep.subr.bf16.mxu0 0
      %1068 = vmatpush2.bf16.xpose.msra.mxu0 0
      %1069 = vmatprep.subr.bf16.mxu0 0
      %1070 = vmatpush2.bf16.xpose.msra.mxu0 0
      %1071 = vmatprep.subr.bf16.mxu0 0
      %1072 = vmatpush2.bf16.xpose.msra.mxu0 0
      %1073 = vmatprep.subr.bf16.mxu0 0
      %1074 = vmatpush2.bf16.xpose.msra.mxu0 0
      %1075 = vmatprep.subr.bf16.mxu0 0
      %1076 = vmatpush2.bf16.xpose.msra.mxu0 0
      %1077 = vmatprep.subr.bf16.mxu0 0
      %1078 = vmatpush2.bf16.xpose.msra.mxu0 0
      %1079 = vmatprep.subr.bf16.mxu0 0
      %1080 = vmatpush2.bf16.xpose.msra.mxu0 0
      %1081 = vmatprep.mubr.bf16.mxu0 0
      %1082 = vmatmul.mubr.bf16.gmra.mxu0 %v1044
      %v1083 = vpop.f32.mrf.mxu0
      %v1084 = vadd.f32 0.0, %v1083
      %v1085 = vpop.f32.mrf.mxu0
      %v1086 = vpop.f32.mrf.mxu0
      %v1087 = vadd.f32 0.0, %v1086
      %v1088 = vpop.f32.mrf.mxu0
      %1089 = vdwg.mxu0
      %v1091 = vsel %vm713, %v610, 0
      %v1094 = vsel %vm713, %v666, 0
      %1096 = vmatprep.subr.bf16.mxu0 0
      %1097 = vmatpush1.bf16.xpose.msra.mxu0 0
      %1098 = vmatprep.subr.bf16.mxu0 0
      %1099 = vmatpush1.bf16.xpose.msra.mxu0 0
      %1100 = vmatprep.subr.bf16.mxu0 0
      %1101 = vmatpush1.bf16.xpose.msra.mxu0 0
      %1102 = vmatprep.subr.bf16.mxu0 0
      %1103 = vmatpush1.bf16.xpose.msra.mxu0 0
      %1104 = vmatprep.subr.bf16.mxu0 0
      %1105 = vmatpush1.bf16.xpose.msra.mxu0 0
      %1106 = vmatprep.subr.bf16.mxu0 0
      %1107 = vmatpush1.bf16.xpose.msra.mxu0 0
      %1108 = vmatprep.subr.bf16.mxu0 0
      %1109 = vmatpush1.bf16.xpose.msra.mxu0 0
      %1110 = vmatprep.subr.bf16.mxu0 0
      %1111 = vmatpush1.bf16.xpose.msra.mxu0 %v1094
      %1112 = vmatprep.subr.bf16.mxu0 0
      %1113 = vmatpush2.bf16.xpose.msra.mxu0 0
      %1114 = vmatprep.subr.bf16.mxu0 0
      %1115 = vmatpush2.bf16.xpose.msra.mxu0 0
      %1116 = vmatprep.subr.bf16.mxu0 0
      %1117 = vmatpush2.bf16.xpose.msra.mxu0 0
      %1118 = vmatprep.subr.bf16.mxu0 0
      %1119 = vmatpush2.bf16.xpose.msra.mxu0 0
      %1120 = vmatprep.subr.bf16.mxu0 0
      %1121 = vmatpush2.bf16.xpose.msra.mxu0 0
      %1122 = vmatprep.subr.bf16.mxu0 0
      %1123 = vmatpush2.bf16.xpose.msra.mxu0 0
      %1124 = vmatprep.subr.bf16.mxu0 0
      %1125 = vmatpush2.bf16.xpose.msra.mxu0 0
      %1126 = vmatprep.subr.bf16.mxu0 0
      %1127 = vmatpush2.bf16.xpose.msra.mxu0 0
      %1128 = vmatprep.mubr.bf16.mxu0 0
      %1129 = vmatmul.mubr.bf16.gmra.mxu0 %v1091
      %v1130 = vpop.f32.mrf.mxu0
      %v1131 = vadd.f32 0.0, %v1130
      %v1132 = vpop.f32.mrf.mxu0
      %v1133 = vpop.f32.mrf.mxu0
      %v1134 = vadd.f32 0.0, %v1133
      %v1135 = vpop.f32.mrf.mxu0
      %1136 = vdwg.mxu0
      %v1138 = vsel %vm713, %v612, 0
      %v1141 = vsel %vm713, %v668, 0
      %1143 = vmatprep.subr.bf16.mxu0 0
      %1144 = vmatpush1.bf16.xpose.msra.mxu0 0
      %1145 = vmatprep.subr.bf16.mxu0 0
      %1146 = vmatpush1.bf16.xpose.msra.mxu0 0
      %1147 = vmatprep.subr.bf16.mxu0 0
      %1148 = vmatpush1.bf16.xpose.msra.mxu0 0
      %1149 = vmatprep.subr.bf16.mxu0 0
      %1150 = vmatpush1.bf16.xpose.msra.mxu0 0
      %1151 = vmatprep.subr.bf16.mxu0 0
      %1152 = vmatpush1.bf16.xpose.msra.mxu0 0
      %1153 = vmatprep.subr.bf16.mxu0 0
      %1154 = vmatpush1.bf16.xpose.msra.mxu0 0
      %1155 = vmatprep.subr.bf16.mxu0 0
      %1156 = vmatpush1.bf16.xpose.msra.mxu0 0
      %1157 = vmatprep.subr.bf16.mxu0 0
      %1158 = vmatpush1.bf16.xpose.msra.mxu0 %v1141
      %1159 = vmatprep.subr.bf16.mxu0 0
      %1160 = vmatpush2.bf16.xpose.msra.mxu0 0
      %1161 = vmatprep.subr.bf16.mxu0 0
      %1162 = vmatpush2.bf16.xpose.msra.mxu0 0
      %1163 = vmatprep.subr.bf16.mxu0 0
      %1164 = vmatpush2.bf16.xpose.msra.mxu0 0
      %1165 = vmatprep.subr.bf16.mxu0 0
      %1166 = vmatpush2.bf16.xpose.msra.mxu0 0
      %1167 = vmatprep.subr.bf16.mxu0 0
      %1168 = vmatpush2.bf16.xpose.msra.mxu0 0
      %1169 = vmatprep.subr.bf16.mxu0 0
      %1170 = vmatpush2.bf16.xpose.msra.mxu0 0
      %1171 = vmatprep.subr.bf16.mxu0 0
      %1172 = vmatpush2.bf16.xpose.msra.mxu0 0
      %1173 = vmatprep.subr.bf16.mxu0 0
      %1174 = vmatpush2.bf16.xpose.msra.mxu0 0
      %1175 = vmatprep.mubr.bf16.mxu0 0
      %1176 = vmatmul.mubr.bf16.gmra.mxu0 %v1138
      %v1177 = vpop.f32.mrf.mxu0
      %v1178 = vadd.f32 0.0, %v1177
      %v1179 = vpop.f32.mrf.mxu0
      %v1180 = vpop.f32.mrf.mxu0
      %v1181 = vadd.f32 0.0, %v1180
      %v1182 = vpop.f32.mrf.mxu0
      %1183 = vdwg.mxu0
      %v1185 = vsel %vm713, %v614, 0
      %v1188 = vsel %vm713, %v670, 0
      %1190 = vmatprep.subr.bf16.mxu0 0
      %1191 = vmatpush1.bf16.xpose.msra.mxu0 0
      %1192 = vmatprep.subr.bf16.mxu0 0
      %1193 = vmatpush1.bf16.xpose.msra.mxu0 0
      %1194 = vmatprep.subr.bf16.mxu0 0
      %1195 = vmatpush1.bf16.xpose.msra.mxu0 0
      %1196 = vmatprep.subr.bf16.mxu0 0
      %1197 = vmatpush1.bf16.xpose.msra.mxu0 0
      %1198 = vmatprep.subr.bf16.mxu0 0
      %1199 = vmatpush1.bf16.xpose.msra.mxu0 0
      %1200 = vmatprep.subr.bf16.mxu0 0
      %1201 = vmatpush1.bf16.xpose.msra.mxu0 0
      %1202 = vmatprep.subr.bf16.mxu0 0
      %1203 = vmatpush1.bf16.xpose.msra.mxu0 0
      %1204 = vmatprep.subr.bf16.mxu0 0
      %1205 = vmatpush1.bf16.xpose.msra.mxu0 %v1188
      %1206 = vmatprep.subr.bf16.mxu0 0
      %1207 = vmatpush2.bf16.xpose.msra.mxu0 0
      %1208 = vmatprep.subr.bf16.mxu0 0
      %1209 = vmatpush2.bf16.xpose.msra.mxu0 0
      %1210 = vmatprep.subr.bf16.mxu0 0
      %1211 = vmatpush2.bf16.xpose.msra.mxu0 0
      %1212 = vmatprep.subr.bf16.mxu0 0
      %1213 = vmatpush2.bf16.xpose.msra.mxu0 0
      %1214 = vmatprep.subr.bf16.mxu0 0
      %1215 = vmatpush2.bf16.xpose.msra.mxu0 0
      %1216 = vmatprep.subr.bf16.mxu0 0
      %1217 = vmatpush2.bf16.xpose.msra.mxu0 0
      %1218 = vmatprep.subr.bf16.mxu0 0
      %1219 = vmatpush2.bf16.xpose.msra.mxu0 0
      %1220 = vmatprep.subr.bf16.mxu0 0
      %1221 = vmatpush2.bf16.xpose.msra.mxu0 0
      %1222 = vmatprep.mubr.bf16.mxu0 0
      %1223 = vmatmul.mubr.bf16.gmra.mxu0 %v1185
      %v1224 = vpop.f32.mrf.mxu0
      %v1225 = vadd.f32 0.0, %v1224
      %v1226 = vpop.f32.mrf.mxu0
      %v1227 = vpop.f32.mrf.mxu0
      %v1228 = vadd.f32 0.0, %v1227
      %v1229 = vpop.f32.mrf.mxu0
      %1230 = vdwg.mxu0
      %v1232 = vsel %vm713, %v616, 0
      %v1235 = vsel %vm713, %v672, 0
      %1237 = vmatprep.subr.bf16.mxu0 0
      %1238 = vmatpush1.bf16.xpose.msra.mxu0 0
      %1239 = vmatprep.subr.bf16.mxu0 0
      %1240 = vmatpush1.bf16.xpose.msra.mxu0 0
      %1241 = vmatprep.subr.bf16.mxu0 0
      %1242 = vmatpush1.bf16.xpose.msra.mxu0 0
      %1243 = vmatprep.subr.bf16.mxu0 0
      %1244 = vmatpush1.bf16.xpose.msra.mxu0 0
      %1245 = vmatprep.subr.bf16.mxu0 0
      %1246 = vmatpush1.bf16.xpose.msra.mxu0 0
      %1247 = vmatprep.subr.bf16.mxu0 0
      %1248 = vmatpush1.bf16.xpose.msra.mxu0 0
      %1249 = vmatprep.subr.bf16.mxu0 0
      %1250 = vmatpush1.bf16.xpose.msra.mxu0 0
      %1251 = vmatprep.subr.bf16.mxu0 0
      %1252 = vmatpush1.bf16.xpose.msra.mxu0 %v1235
      %1253 = vmatprep.subr.bf16.mxu0 0
      %1254 = vmatpush2.bf16.xpose.msra.mxu0 0
      %1255 = vmatprep.subr.bf16.mxu0 0
      %1256 = vmatpush2.bf16.xpose.msra.mxu0 0
      %1257 = vmatprep.subr.bf16.mxu0 0
      %1258 = vmatpush2.bf16.xpose.msra.mxu0 0
      %1259 = vmatprep.subr.bf16.mxu0 0
      %1260 = vmatpush2.bf16.xpose.msra.mxu0 0
      %1261 = vmatprep.subr.bf16.mxu0 0
      %1262 = vmatpush2.bf16.xpose.msra.mxu0 0
      %1263 = vmatprep.subr.bf16.mxu0 0
      %1264 = vmatpush2.bf16.xpose.msra.mxu0 0
      %1265 = vmatprep.subr.bf16.mxu0 0
      %1266 = vmatpush2.bf16.xpose.msra.mxu0 0
      %1267 = vmatprep.subr.bf16.mxu0 0
      %1268 = vmatpush2.bf16.xpose.msra.mxu0 0
      %1269 = vmatprep.mubr.bf16.mxu0 0
      %1270 = vmatmul.mubr.bf16.gmra.mxu0 %v1232
      %v1271 = vpop.f32.mrf.mxu0
      %v1272 = vadd.f32 0.0, %v1271
      %v1273 = vpop.f32.mrf.mxu0
      %v1274 = vpop.f32.mrf.mxu0
      %v1275 = vadd.f32 0.0, %v1274
      %v1276 = vpop.f32.mrf.mxu0
      %1277 = vdwg.mxu0
      %v1279 = vsel %vm713, %v618, 0
      %v1282 = vsel %vm713, %v674, 0
      %1284 = vmatprep.subr.bf16.mxu0 0
      %1285 = vmatpush1.bf16.xpose.msra.mxu0 0
      %1286 = vmatprep.subr.bf16.mxu0 0
      %1287 = vmatpush1.bf16.xpose.msra.mxu0 0
      %1288 = vmatprep.subr.bf16.mxu0 0
      %1289 = vmatpush1.bf16.xpose.msra.mxu0 0
      %1290 = vmatprep.subr.bf16.mxu0 0
      %1291 = vmatpush1.bf16.xpose.msra.mxu0 0
      %1292 = vmatprep.subr.bf16.mxu0 0
      %1293 = vmatpush1.bf16.xpose.msra.mxu0 0
      %1294 = vmatprep.subr.bf16.mxu0 0
      %1295 = vmatpush1.bf16.xpose.msra.mxu0 0
      %1296 = vmatprep.subr.bf16.mxu0 0
      %1297 = vmatpush1.bf16.xpose.msra.mxu0 0
      %1298 = vmatprep.subr.bf16.mxu0 0
      %1299 = vmatpush1.bf16.xpose.msra.mxu0 %v1282
      %1300 = vmatprep.subr.bf16.mxu0 0
      %1301 = vmatpush2.bf16.xpose.msra.mxu0 0
      %1302 = vmatprep.subr.bf16.mxu0 0
      %1303 = vmatpush2.bf16.xpose.msra.mxu0 0
      %1304 = vmatprep.subr.bf16.mxu0 0
      %1305 = vmatpush2.bf16.xpose.msra.mxu0 0
      %1306 = vmatprep.subr.bf16.mxu0 0
      %1307 = vmatpush2.bf16.xpose.msra.mxu0 0
      %1308 = vmatprep.subr.bf16.mxu0 0
      %1309 = vmatpush2.bf16.xpose.msra.mxu0 0
      %1310 = vmatprep.subr.bf16.mxu0 0
      %1311 = vmatpush2.bf16.xpose.msra.mxu0 0
      %1312 = vmatprep.subr.bf16.mxu0 0
      %1313 = vmatpush2.bf16.xpose.msra.mxu0 0
      %1314 = vmatprep.subr.bf16.mxu0 0
      %1315 = vmatpush2.bf16.xpose.msra.mxu0 0
      %1316 = vmatprep.mubr.bf16.mxu0 0
      %1317 = vmatmul.mubr.bf16.gmra.mxu0 %v1279
      %v1318 = vpop.f32.mrf.mxu0
      %v1319 = vadd.f32 0.0, %v1318
      %v1320 = vpop.f32.mrf.mxu0
      %v1321 = vpop.f32.mrf.mxu0
      %v1322 = vadd.f32 0.0, %v1321
      %v1323 = vpop.f32.mrf.mxu0
      %1324 = vdwg.mxu0
      %v1326 = vsel %vm713, %v620, 0
      %v1329 = vsel %vm713, %v676, 0
      %1331 = vmatprep.subr.bf16.mxu0 0
      %1332 = vmatpush1.bf16.xpose.msra.mxu0 0
      %1333 = vmatprep.subr.bf16.mxu0 0
      %1334 = vmatpush1.bf16.xpose.msra.mxu0 0
      %1335 = vmatprep.subr.bf16.mxu0 0
      %1336 = vmatpush1.bf16.xpose.msra.mxu0 0
      %1337 = vmatprep.subr.bf16.mxu0 0
      %1338 = vmatpush1.bf16.xpose.msra.mxu0 0
      %1339 = vmatprep.subr.bf16.mxu0 0
      %1340 = vmatpush1.bf16.xpose.msra.mxu0 0
      %1341 = vmatprep.subr.bf16.mxu0 0
      %1342 = vmatpush1.bf16.xpose.msra.mxu0 0
      %1343 = vmatprep.subr.bf16.mxu0 0
      %1344 = vmatpush1.bf16.xpose.msra.mxu0 0
      %1345 = vmatprep.subr.bf16.mxu0 0
      %1346 = vmatpush1.bf16.xpose.msra.mxu0 %v1329
      %1347 = vmatprep.subr.bf16.mxu0 0
      %1348 = vmatpush2.bf16.xpose.msra.mxu0 0
      %1349 = vmatprep.subr.bf16.mxu0 0
      %1350 = vmatpush2.bf16.xpose.msra.mxu0 0
      %1351 = vmatprep.subr.bf16.mxu0 0
      %1352 = vmatpush2.bf16.xpose.msra.mxu0 0
      %1353 = vmatprep.subr.bf16.mxu0 0
      %1354 = vmatpush2.bf16.xpose.msra.mxu0 0
      %1355 = vmatprep.subr.bf16.mxu0 0
      %1356 = vmatpush2.bf16.xpose.msra.mxu0 0
      %1357 = vmatprep.subr.bf16.mxu0 0
      %1358 = vmatpush2.bf16.xpose.msra.mxu0 0
      %1359 = vmatprep.subr.bf16.mxu0 0
      %1360 = vmatpush2.bf16.xpose.msra.mxu0 0
      %1361 = vmatprep.subr.bf16.mxu0 0
      %1362 = vmatpush2.bf16.xpose.msra.mxu0 0
      %1363 = vmatprep.mubr.bf16.mxu0 0
      %1364 = vmatmul.mubr.bf16.gmra.mxu0 %v1326
      %v1365 = vpop.f32.mrf.mxu0
      %v1366 = vadd.f32 0.0, %v1365
      %v1367 = vpop.f32.mrf.mxu0
      %v1368 = vpop.f32.mrf.mxu0
      %v1369 = vadd.f32 0.0, %v1368
      %v1370 = vpop.f32.mrf.mxu0
      %1371 = vdwg.mxu0
      %v1373 = vsel %vm713, %v622, 0
      %v1376 = vsel %vm713, %v678, 0
      %1378 = vmatprep.subr.bf16.mxu0 0
      %1379 = vmatpush1.bf16.xpose.msra.mxu0 0
      %1380 = vmatprep.subr.bf16.mxu0 0
      %1381 = vmatpush1.bf16.xpose.msra.mxu0 0
      %1382 = vmatprep.subr.bf16.mxu0 0
      %1383 = vmatpush1.bf16.xpose.msra.mxu0 0
      %1384 = vmatprep.subr.bf16.mxu0 0
      %1385 = vmatpush1.bf16.xpose.msra.mxu0 0
      %1386 = vmatprep.subr.bf16.mxu0 0
      %1387 = vmatpush1.bf16.xpose.msra.mxu0 0
      %1388 = vmatprep.subr.bf16.mxu0 0
      %1389 = vmatpush1.bf16.xpose.msra.mxu0 0
      %1390 = vmatprep.subr.bf16.mxu0 0
      %1391 = vmatpush1.bf16.xpose.msra.mxu0 0
      %1392 = vmatprep.subr.bf16.mxu0 0
      %1393 = vmatpush1.bf16.xpose.msra.mxu0 %v1376
      %1394 = vmatprep.subr.bf16.mxu0 0
      %1395 = vmatpush2.bf16.xpose.msra.mxu0 0
      %1396 = vmatprep.subr.bf16.mxu0 0
      %1397 = vmatpush2.bf16.xpose.msra.mxu0 0
      %1398 = vmatprep.subr.bf16.mxu0 0
      %1399 = vmatpush2.bf16.xpose.msra.mxu0 0
      %1400 = vmatprep.subr.bf16.mxu0 0
      %1401 = vmatpush2.bf16.xpose.msra.mxu0 0
      %1402 = vmatprep.subr.bf16.mxu0 0
      %1403 = vmatpush2.bf16.xpose.msra.mxu0 0
      %1404 = vmatprep.subr.bf16.mxu0 0
      %1405 = vmatpush2.bf16.xpose.msra.mxu0 0
      %1406 = vmatprep.subr.bf16.mxu0 0
      %1407 = vmatpush2.bf16.xpose.msra.mxu0 0
      %1408 = vmatprep.subr.bf16.mxu0 0
      %1409 = vmatpush2.bf16.xpose.msra.mxu0 0
      %1410 = vmatprep.mubr.bf16.mxu0 0
      %1411 = vmatmul.mubr.bf16.gmra.mxu0 %v1373
      %v1412 = vpop.f32.mrf.mxu0
      %v1413 = vadd.f32 0.0, %v1412
      %v1414 = vpop.f32.mrf.mxu0
      %v1415 = vpop.f32.mrf.mxu0
      %v1416 = vadd.f32 0.0, %v1415
      %v1417 = vpop.f32.mrf.mxu0
      %1418 = vdwg.mxu0
      %v1420 = vsel %vm713, %v624, 0
      %v1423 = vsel %vm713, %v680, 0
      %1425 = vmatprep.subr.bf16.mxu0 0
      %1426 = vmatpush1.bf16.xpose.msra.mxu0 0
      %1427 = vmatprep.subr.bf16.mxu0 0
      %1428 = vmatpush1.bf16.xpose.msra.mxu0 0
      %1429 = vmatprep.subr.bf16.mxu0 0
      %1430 = vmatpush1.bf16.xpose.msra.mxu0 0
      %1431 = vmatprep.subr.bf16.mxu0 0
      %1432 = vmatpush1.bf16.xpose.msra.mxu0 0
      %1433 = vmatprep.subr.bf16.mxu0 0
      %1434 = vmatpush1.bf16.xpose.msra.mxu0 0
      %1435 = vmatprep.subr.bf16.mxu0 0
      %1436 = vmatpush1.bf16.xpose.msra.mxu0 0
      %1437 = vmatprep.subr.bf16.mxu0 0
      %1438 = vmatpush1.bf16.xpose.msra.mxu0 0
      %1439 = vmatprep.subr.bf16.mxu0 0
      %1440 = vmatpush1.bf16.xpose.msra.mxu0 %v1423
      %1441 = vmatprep.subr.bf16.mxu0 0
      %1442 = vmatpush2.bf16.xpose.msra.mxu0 0
      %1443 = vmatprep.subr.bf16.mxu0 0
      %1444 = vmatpush2.bf16.xpose.msra.mxu0 0
      %1445 = vmatprep.subr.bf16.mxu0 0
      %1446 = vmatpush2.bf16.xpose.msra.mxu0 0
      %1447 = vmatprep.subr.bf16.mxu0 0
      %1448 = vmatpush2.bf16.xpose.msra.mxu0 0
      %1449 = vmatprep.subr.bf16.mxu0 0
      %1450 = vmatpush2.bf16.xpose.msra.mxu0 0
      %1451 = vmatprep.subr.bf16.mxu0 0
      %1452 = vmatpush2.bf16.xpose.msra.mxu0 0
      %1453 = vmatprep.subr.bf16.mxu0 0
      %1454 = vmatpush2.bf16.xpose.msra.mxu0 0
      %1455 = vmatprep.subr.bf16.mxu0 0
      %1456 = vmatpush2.bf16.xpose.msra.mxu0 0
      %1457 = vmatprep.mubr.bf16.mxu0 0
      %1458 = vmatmul.mubr.bf16.gmra.mxu0 %v1420
      %v1459 = vpop.f32.mrf.mxu0
      %v1460 = vadd.f32 0.0, %v1459
      %v1461 = vpop.f32.mrf.mxu0
      %v1462 = vpop.f32.mrf.mxu0
      %v1463 = vadd.f32 0.0, %v1462
      %v1464 = vpop.f32.mrf.mxu0
      %1465 = vdwg.mxu0
      %v1467 = vsel %vm713, %v626, 0
      %v1470 = vsel %vm713, %v682, 0
      %1472 = vmatprep.subr.bf16.mxu0 0
      %1473 = vmatpush1.bf16.xpose.msra.mxu0 0
      %1474 = vmatprep.subr.bf16.mxu0 0
      %1475 = vmatpush1.bf16.xpose.msra.mxu0 0
      %1476 = vmatprep.subr.bf16.mxu0 0
      %1477 = vmatpush1.bf16.xpose.msra.mxu0 0
      %1478 = vmatprep.subr.bf16.mxu0 0
      %1479 = vmatpush1.bf16.xpose.msra.mxu0 0
      %1480 = vmatprep.subr.bf16.mxu0 0
      %1481 = vmatpush1.bf16.xpose.msra.mxu0 0
      %1482 = vmatprep.subr.bf16.mxu0 0
      %1483 = vmatpush1.bf16.xpose.msra.mxu0 0
      %1484 = vmatprep.subr.bf16.mxu0 0
      %1485 = vmatpush1.bf16.xpose.msra.mxu0 0
      %1486 = vmatprep.subr.bf16.mxu0 0
      %1487 = vmatpush1.bf16.xpose.msra.mxu0 %v1470
      %1488 = vmatprep.subr.bf16.mxu0 0
      %1489 = vmatpush2.bf16.xpose.msra.mxu0 0
      %1490 = vmatprep.subr.bf16.mxu0 0
      %1491 = vmatpush2.bf16.xpose.msra.mxu0 0
      %1492 = vmatprep.subr.bf16.mxu0 0
      %1493 = vmatpush2.bf16.xpose.msra.mxu0 0
      %1494 = vmatprep.subr.bf16.mxu0 0
      %1495 = vmatpush2.bf16.xpose.msra.mxu0 0
      %1496 = vmatprep.subr.bf16.mxu0 0
      %1497 = vmatpush2.bf16.xpose.msra.mxu0 0
      %1498 = vmatprep.subr.bf16.mxu0 0
      %1499 = vmatpush2.bf16.xpose.msra.mxu0 0
      %1500 = vmatprep.subr.bf16.mxu0 0
      %1501 = vmatpush2.bf16.xpose.msra.mxu0 0
      %1502 = vmatprep.subr.bf16.mxu0 0
      %1503 = vmatpush2.bf16.xpose.msra.mxu0 0
      %1504 = vmatprep.mubr.bf16.mxu0 0
      %1505 = vmatmul.mubr.bf16.gmra.mxu0 %v1467
      %v1506 = vpop.f32.mrf.mxu0
      %v1507 = vadd.f32 0.0, %v1506
      %v1508 = vpop.f32.mrf.mxu0
      %v1509 = vpop.f32.mrf.mxu0
      %v1510 = vadd.f32 0.0, %v1509
      %v1511 = vpop.f32.mrf.mxu0
      %1512 = vdwg.mxu0
      %v1514 = vsel %vm713, %v628, 0
      %v1517 = vsel %vm713, %v684, 0
      %1519 = vmatprep.subr.bf16.mxu0 0
      %1520 = vmatpush1.bf16.xpose.msra.mxu0 0
      %1521 = vmatprep.subr.bf16.mxu0 0
      %1522 = vmatpush1.bf16.xpose.msra.mxu0 0
      %1523 = vmatprep.subr.bf16.mxu0 0
      %1524 = vmatpush1.bf16.xpose.msra.mxu0 0
      %1525 = vmatprep.subr.bf16.mxu0 0
      %1526 = vmatpush1.bf16.xpose.msra.mxu0 0
      %1527 = vmatprep.subr.bf16.mxu0 0
      %1528 = vmatpush1.bf16.xpose.msra.mxu0 0
      %1529 = vmatprep.subr.bf16.mxu0 0
      %1530 = vmatpush1.bf16.xpose.msra.mxu0 0
      %1531 = vmatprep.subr.bf16.mxu0 0
      %1532 = vmatpush1.bf16.xpose.msra.mxu0 0
      %1533 = vmatprep.subr.bf16.mxu0 0
      %1534 = vmatpush1.bf16.xpose.msra.mxu0 %v1517
      %1535 = vmatprep.subr.bf16.mxu0 0
      %1536 = vmatpush2.bf16.xpose.msra.mxu0 0
      %1537 = vmatprep.subr.bf16.mxu0 0
      %1538 = vmatpush2.bf16.xpose.msra.mxu0 0
      %1539 = vmatprep.subr.bf16.mxu0 0
      %1540 = vmatpush2.bf16.xpose.msra.mxu0 0
      %1541 = vmatprep.subr.bf16.mxu0 0
      %1542 = vmatpush2.bf16.xpose.msra.mxu0 0
      %1543 = vmatprep.subr.bf16.mxu0 0
      %1544 = vmatpush2.bf16.xpose.msra.mxu0 0
      %1545 = vmatprep.subr.bf16.mxu0 0
      %1546 = vmatpush2.bf16.xpose.msra.mxu0 0
      %1547 = vmatprep.subr.bf16.mxu0 0
      %1548 = vmatpush2.bf16.xpose.msra.mxu0 0
      %1549 = vmatprep.subr.bf16.mxu0 0
      %1550 = vmatpush2.bf16.xpose.msra.mxu0 0
      %1551 = vmatprep.mubr.bf16.mxu0 0
      %1552 = vmatmul.mubr.bf16.gmra.mxu0 %v1514
      %v1553 = vpop.f32.mrf.mxu0
      %v1554 = vadd.f32 0.0, %v1553
      %v1555 = vpop.f32.mrf.mxu0
      %v1556 = vpop.f32.mrf.mxu0
      %v1557 = vadd.f32 0.0, %v1556
      %v1558 = vpop.f32.mrf.mxu0
      %1559 = vdwg.mxu0
      %v1561 = vsel %vm713, %v630, 0
      %v1564 = vsel %vm713, %v686, 0
      %1566 = vmatprep.subr.bf16.mxu0 0
      %1567 = vmatpush1.bf16.xpose.msra.mxu0 0
      %1568 = vmatprep.subr.bf16.mxu0 0
      %1569 = vmatpush1.bf16.xpose.msra.mxu0 0
      %1570 = vmatprep.subr.bf16.mxu0 0
      %1571 = vmatpush1.bf16.xpose.msra.mxu0 0
      %1572 = vmatprep.subr.bf16.mxu0 0
      %1573 = vmatpush1.bf16.xpose.msra.mxu0 0
      %1574 = vmatprep.subr.bf16.mxu0 0
      %1575 = vmatpush1.bf16.xpose.msra.mxu0 0
      %1576 = vmatprep.subr.bf16.mxu0 0
      %1577 = vmatpush1.bf16.xpose.msra.mxu0 0
      %1578 = vmatprep.subr.bf16.mxu0 0
      %1579 = vmatpush1.bf16.xpose.msra.mxu0 0
      %1580 = vmatprep.subr.bf16.mxu0 0
      %1581 = vmatpush1.bf16.xpose.msra.mxu0 %v1564
      %1582 = vmatprep.subr.bf16.mxu0 0
      %1583 = vmatpush2.bf16.xpose.msra.mxu0 0
      %1584 = vmatprep.subr.bf16.mxu0 0
      %1585 = vmatpush2.bf16.xpose.msra.mxu0 0
      %1586 = vmatprep.subr.bf16.mxu0 0
      %1587 = vmatpush2.bf16.xpose.msra.mxu0 0
      %1588 = vmatprep.subr.bf16.mxu0 0
      %1589 = vmatpush2.bf16.xpose.msra.mxu0 0
      %1590 = vmatprep.subr.bf16.mxu0 0
      %1591 = vmatpush2.bf16.xpose.msra.mxu0 0
      %1592 = vmatprep.subr.bf16.mxu0 0
      %1593 = vmatpush2.bf16.xpose.msra.mxu0 0
      %1594 = vmatprep.subr.bf16.mxu0 0
      %1595 = vmatpush2.bf16.xpose.msra.mxu0 0
      %1596 = vmatprep.subr.bf16.mxu0 0
      %1597 = vmatpush2.bf16.xpose.msra.mxu0 0
      %1598 = vmatprep.mubr.bf16.mxu0 0
      %1599 = vmatmul.mubr.bf16.gmra.mxu0 %v1561
      %v1600 = vpop.f32.mrf.mxu0
      %v1601 = vadd.f32 0.0, %v1600
      %v1602 = vpop.f32.mrf.mxu0
      %v1603 = vpop.f32.mrf.mxu0
      %v1604 = vadd.f32 0.0, %v1603
      %v1605 = vpop.f32.mrf.mxu0
      %1606 = vdwg.mxu0
      %v1608 = vsel %vm713, %v632, 0
      %v1611 = vsel %vm713, %v688, 0
      %1613 = vmatprep.subr.bf16.mxu0 0
      %1614 = vmatpush1.bf16.xpose.msra.mxu0 0
      %1615 = vmatprep.subr.bf16.mxu0 0
      %1616 = vmatpush1.bf16.xpose.msra.mxu0 0
      %1617 = vmatprep.subr.bf16.mxu0 0
      %1618 = vmatpush1.bf16.xpose.msra.mxu0 0
      %1619 = vmatprep.subr.bf16.mxu0 0
      %1620 = vmatpush1.bf16.xpose.msra.mxu0 0
      %1621 = vmatprep.subr.bf16.mxu0 0
      %1622 = vmatpush1.bf16.xpose.msra.mxu0 0
      %1623 = vmatprep.subr.bf16.mxu0 0
      %1624 = vmatpush1.bf16.xpose.msra.mxu0 0
      %1625 = vmatprep.subr.bf16.mxu0 0
      %1626 = vmatpush1.bf16.xpose.msra.mxu0 0
      %1627 = vmatprep.subr.bf16.mxu0 0
      %1628 = vmatpush1.bf16.xpose.msra.mxu0 %v1611
      %1629 = vmatprep.subr.bf16.mxu0 0
      %1630 = vmatpush2.bf16.xpose.msra.mxu0 0
      %1631 = vmatprep.subr.bf16.mxu0 0
      %1632 = vmatpush2.bf16.xpose.msra.mxu0 0
      %1633 = vmatprep.subr.bf16.mxu0 0
      %1634 = vmatpush2.bf16.xpose.msra.mxu0 0
      %1635 = vmatprep.subr.bf16.mxu0 0
      %1636 = vmatpush2.bf16.xpose.msra.mxu0 0
      %1637 = vmatprep.subr.bf16.mxu0 0
      %1638 = vmatpush2.bf16.xpose.msra.mxu0 0
      %1639 = vmatprep.subr.bf16.mxu0 0
      %1640 = vmatpush2.bf16.xpose.msra.mxu0 0
      %1641 = vmatprep.subr.bf16.mxu0 0
      %1642 = vmatpush2.bf16.xpose.msra.mxu0 0
      %1643 = vmatprep.subr.bf16.mxu0 0
      %1644 = vmatpush2.bf16.xpose.msra.mxu0 0
      %1645 = vmatprep.mubr.bf16.mxu0 0
      %1646 = vmatmul.mubr.bf16.gmra.mxu0 %v1608
      %v1647 = vpop.f32.mrf.mxu0
      %v1648 = vadd.f32 0.0, %v1647
      %v1649 = vpop.f32.mrf.mxu0
      %v1650 = vpop.f32.mrf.mxu0
      %v1651 = vadd.f32 0.0, %v1650
      %v1652 = vpop.f32.mrf.mxu0
      %1653 = vdwg.mxu0
      %v1655 = vsel %vm713, %v634, 0
      %v1658 = vsel %vm713, %v690, 0
      %1660 = vmatprep.subr.bf16.mxu0 0
      %1661 = vmatpush1.bf16.xpose.msra.mxu0 0
      %1662 = vmatprep.subr.bf16.mxu0 0
      %1663 = vmatpush1.bf16.xpose.msra.mxu0 0
      %1664 = vmatprep.subr.bf16.mxu0 0
      %1665 = vmatpush1.bf16.xpose.msra.mxu0 0
      %1666 = vmatprep.subr.bf16.mxu0 0
      %1667 = vmatpush1.bf16.xpose.msra.mxu0 0
      %1668 = vmatprep.subr.bf16.mxu0 0
      %1669 = vmatpush1.bf16.xpose.msra.mxu0 0
      %1670 = vmatprep.subr.bf16.mxu0 0
      %1671 = vmatpush1.bf16.xpose.msra.mxu0 0
      %1672 = vmatprep.subr.bf16.mxu0 0
      %1673 = vmatpush1.bf16.xpose.msra.mxu0 0
      %1674 = vmatprep.subr.bf16.mxu0 0
      %1675 = vmatpush1.bf16.xpose.msra.mxu0 %v1658
      %1676 = vmatprep.subr.bf16.mxu0 0
      %1677 = vmatpush2.bf16.xpose.msra.mxu0 0
      %1678 = vmatprep.subr.bf16.mxu0 0
      %1679 = vmatpush2.bf16.xpose.msra.mxu0 0
      %1680 = vmatprep.subr.bf16.mxu0 0
      %1681 = vmatpush2.bf16.xpose.msra.mxu0 0
      %1682 = vmatprep.subr.bf16.mxu0 0
      %1683 = vmatpush2.bf16.xpose.msra.mxu0 0
      %1684 = vmatprep.subr.bf16.mxu0 0
      %1685 = vmatpush2.bf16.xpose.msra.mxu0 0
      %1686 = vmatprep.subr.bf16.mxu0 0
      %1687 = vmatpush2.bf16.xpose.msra.mxu0 0
      %1688 = vmatprep.subr.bf16.mxu0 0
      %1689 = vmatpush2.bf16.xpose.msra.mxu0 0
      %1690 = vmatprep.subr.bf16.mxu0 0
      %1691 = vmatpush2.bf16.xpose.msra.mxu0 0
      %1692 = vmatprep.mubr.bf16.mxu0 0
      %1693 = vmatmul.mubr.bf16.gmra.mxu0 %v1655
      %v1694 = vpop.f32.mrf.mxu0
      %v1695 = vadd.f32 0.0, %v1694
      %v1696 = vpop.f32.mrf.mxu0
      %v1697 = vpop.f32.mrf.mxu0
      %v1698 = vadd.f32 0.0, %v1697
      %v1699 = vpop.f32.mrf.mxu0
      %1700 = vdwg.mxu0
      %v1702 = vsel %vm713, %v636, 0
      %v1705 = vsel %vm713, %v692, 0
      %1707 = vmatprep.subr.bf16.mxu0 0
      %1708 = vmatpush1.bf16.xpose.msra.mxu0 0
      %1709 = vmatprep.subr.bf16.mxu0 0
      %1710 = vmatpush1.bf16.xpose.msra.mxu0 0
      %1711 = vmatprep.subr.bf16.mxu0 0
      %1712 = vmatpush1.bf16.xpose.msra.mxu0 0
      %1713 = vmatprep.subr.bf16.mxu0 0
      %1714 = vmatpush1.bf16.xpose.msra.mxu0 0
      %1715 = vmatprep.subr.bf16.mxu0 0
      %1716 = vmatpush1.bf16.xpose.msra.mxu0 0
      %1717 = vmatprep.subr.bf16.mxu0 0
      %1718 = vmatpush1.bf16.xpose.msra.mxu0 0
      %1719 = vmatprep.subr.bf16.mxu0 0
      %1720 = vmatpush1.bf16.xpose.msra.mxu0 0
      %1721 = vmatprep.subr.bf16.mxu0 0
      %1722 = vmatpush1.bf16.xpose.msra.mxu0 %v1705
      %1723 = vmatprep.subr.bf16.mxu0 0
      %1724 = vmatpush2.bf16.xpose.msra.mxu0 0
      %1725 = vmatprep.subr.bf16.mxu0 0
      %1726 = vmatpush2.bf16.xpose.msra.mxu0 0
      %1727 = vmatprep.subr.bf16.mxu0 0
      %1728 = vmatpush2.bf16.xpose.msra.mxu0 0
      %1729 = vmatprep.subr.bf16.mxu0 0
      %1730 = vmatpush2.bf16.xpose.msra.mxu0 0
      %1731 = vmatprep.subr.bf16.mxu0 0
      %1732 = vmatpush2.bf16.xpose.msra.mxu0 0
      %1733 = vmatprep.subr.bf16.mxu0 0
      %1734 = vmatpush2.bf16.xpose.msra.mxu0 0
      %1735 = vmatprep.subr.bf16.mxu0 0
      %1736 = vmatpush2.bf16.xpose.msra.mxu0 0
      %1737 = vmatprep.subr.bf16.mxu0 0
      %1738 = vmatpush2.bf16.xpose.msra.mxu0 0
      %1739 = vmatprep.mubr.bf16.mxu0 0
      %1740 = vmatmul.mubr.bf16.gmra.mxu0 %v1702
      %v1741 = vpop.f32.mrf.mxu0
      %v1742 = vadd.f32 0.0, %v1741
      %v1743 = vpop.f32.mrf.mxu0
      %v1744 = vpop.f32.mrf.mxu0
      %v1745 = vadd.f32 0.0, %v1744
      %v1746 = vpop.f32.mrf.mxu0
      %1747 = vdwg.mxu0
      %v1749 = vsel %vm713, %v638, 0
      %v1752 = vsel %vm713, %v694, 0
      %1754 = vmatprep.subr.bf16.mxu0 0
      %1755 = vmatpush1.bf16.xpose.msra.mxu0 0
      %1756 = vmatprep.subr.bf16.mxu0 0
      %1757 = vmatpush1.bf16.xpose.msra.mxu0 0
      %1758 = vmatprep.subr.bf16.mxu0 0
      %1759 = vmatpush1.bf16.xpose.msra.mxu0 0
      %1760 = vmatprep.subr.bf16.mxu0 0
      %1761 = vmatpush1.bf16.xpose.msra.mxu0 0
      %1762 = vmatprep.subr.bf16.mxu0 0
      %1763 = vmatpush1.bf16.xpose.msra.mxu0 0
      %1764 = vmatprep.subr.bf16.mxu0 0
      %1765 = vmatpush1.bf16.xpose.msra.mxu0 0
      %1766 = vmatprep.subr.bf16.mxu0 0
      %1767 = vmatpush1.bf16.xpose.msra.mxu0 0
      %1768 = vmatprep.subr.bf16.mxu0 0
      %1769 = vmatpush1.bf16.xpose.msra.mxu0 %v1752
      %1770 = vmatprep.subr.bf16.mxu0 0
      %1771 = vmatpush2.bf16.xpose.msra.mxu0 0
      %1772 = vmatprep.subr.bf16.mxu0 0
      %1773 = vmatpush2.bf16.xpose.msra.mxu0 0
      %1774 = vmatprep.subr.bf16.mxu0 0
      %1775 = vmatpush2.bf16.xpose.msra.mxu0 0
      %1776 = vmatprep.subr.bf16.mxu0 0
      %1777 = vmatpush2.bf16.xpose.msra.mxu0 0
      %1778 = vmatprep.subr.bf16.mxu0 0
      %1779 = vmatpush2.bf16.xpose.msra.mxu0 0
      %1780 = vmatprep.subr.bf16.mxu0 0
      %1781 = vmatpush2.bf16.xpose.msra.mxu0 0
      %1782 = vmatprep.subr.bf16.mxu0 0
      %1783 = vmatpush2.bf16.xpose.msra.mxu0 0
      %1784 = vmatprep.subr.bf16.mxu0 0
      %1785 = vmatpush2.bf16.xpose.msra.mxu0 0
      %1786 = vmatprep.mubr.bf16.mxu0 0
      %1787 = vmatmul.mubr.bf16.gmra.mxu0 %v1749
      %v1788 = vpop.f32.mrf.mxu0
      %v1789 = vadd.f32 0.0, %v1788
      %v1790 = vpop.f32.mrf.mxu0
      %v1791 = vpop.f32.mrf.mxu0
      %v1792 = vadd.f32 0.0, %v1791
      %v1793 = vpop.f32.mrf.mxu0
      %1794 = vdwg.mxu0
      %v1796 = vsel %vm713, %v640, 0
      %v1799 = vsel %vm713, %v696, 0
      %1801 = vmatprep.subr.bf16.mxu0 0
      %1802 = vmatpush1.bf16.xpose.msra.mxu0 0
      %1803 = vmatprep.subr.bf16.mxu0 0
      %1804 = vmatpush1.bf16.xpose.msra.mxu0 0
      %1805 = vmatprep.subr.bf16.mxu0 0
      %1806 = vmatpush1.bf16.xpose.msra.mxu0 0
      %1807 = vmatprep.subr.bf16.mxu0 0
      %1808 = vmatpush1.bf16.xpose.msra.mxu0 0
      %1809 = vmatprep.subr.bf16.mxu0 0
      %1810 = vmatpush1.bf16.xpose.msra.mxu0 0
      %1811 = vmatprep.subr.bf16.mxu0 0
      %1812 = vmatpush1.bf16.xpose.msra.mxu0 0
      %1813 = vmatprep.subr.bf16.mxu0 0
      %1814 = vmatpush1.bf16.xpose.msra.mxu0 0
      %1815 = vmatprep.subr.bf16.mxu0 0
      %1816 = vmatpush1.bf16.xpose.msra.mxu0 %v1799
      %1817 = vmatprep.subr.bf16.mxu0 0
      %1818 = vmatpush2.bf16.xpose.msra.mxu0 0
      %1819 = vmatprep.subr.bf16.mxu0 0
      %1820 = vmatpush2.bf16.xpose.msra.mxu0 0
      %1821 = vmatprep.subr.bf16.mxu0 0
      %1822 = vmatpush2.bf16.xpose.msra.mxu0 0
      %1823 = vmatprep.subr.bf16.mxu0 0
      %1824 = vmatpush2.bf16.xpose.msra.mxu0 0
      %1825 = vmatprep.subr.bf16.mxu0 0
      %1826 = vmatpush2.bf16.xpose.msra.mxu0 0
      %1827 = vmatprep.subr.bf16.mxu0 0
      %1828 = vmatpush2.bf16.xpose.msra.mxu0 0
      %1829 = vmatprep.subr.bf16.mxu0 0
      %1830 = vmatpush2.bf16.xpose.msra.mxu0 0
      %1831 = vmatprep.subr.bf16.mxu0 0
      %1832 = vmatpush2.bf16.xpose.msra.mxu0 0
      %1833 = vmatprep.mubr.bf16.mxu0 0
      %1834 = vmatmul.mubr.bf16.gmra.mxu0 %v1796
      %v1835 = vpop.f32.mrf.mxu0
      %v1836 = vadd.f32 0.0, %v1835
      %v1837 = vpop.f32.mrf.mxu0
      %v1838 = vpop.f32.mrf.mxu0
      %v1839 = vadd.f32 0.0, %v1838
      %v1840 = vpop.f32.mrf.mxu0
      %1841 = vdwg.mxu0
      %v1843 = vsel %vm713, %v642, 0
      %v1846 = vsel %vm713, %v698, 0
      %1848 = vmatprep.subr.bf16.mxu0 0
      %1849 = vmatpush1.bf16.xpose.msra.mxu0 0
      %1850 = vmatprep.subr.bf16.mxu0 0
      %1851 = vmatpush1.bf16.xpose.msra.mxu0 0
      %1852 = vmatprep.subr.bf16.mxu0 0
      %1853 = vmatpush1.bf16.xpose.msra.mxu0 0
      %1854 = vmatprep.subr.bf16.mxu0 0
      %1855 = vmatpush1.bf16.xpose.msra.mxu0 0
      %1856 = vmatprep.subr.bf16.mxu0 0
      %1857 = vmatpush1.bf16.xpose.msra.mxu0 0
      %1858 = vmatprep.subr.bf16.mxu0 0
      %1859 = vmatpush1.bf16.xpose.msra.mxu0 0
      %1860 = vmatprep.subr.bf16.mxu0 0
      %1861 = vmatpush1.bf16.xpose.msra.mxu0 0
      %1862 = vmatprep.subr.bf16.mxu0 0
      %1863 = vmatpush1.bf16.xpose.msra.mxu0 %v1846
      %1864 = vmatprep.subr.bf16.mxu0 0
      %1865 = vmatpush2.bf16.xpose.msra.mxu0 0
      %1866 = vmatprep.subr.bf16.mxu0 0
      %1867 = vmatpush2.bf16.xpose.msra.mxu0 0
      %1868 = vmatprep.subr.bf16.mxu0 0
      %1869 = vmatpush2.bf16.xpose.msra.mxu0 0
      %1870 = vmatprep.subr.bf16.mxu0 0
      %1871 = vmatpush2.bf16.xpose.msra.mxu0 0
      %1872 = vmatprep.subr.bf16.mxu0 0
      %1873 = vmatpush2.bf16.xpose.msra.mxu0 0
      %1874 = vmatprep.subr.bf16.mxu0 0
      %1875 = vmatpush2.bf16.xpose.msra.mxu0 0
      %1876 = vmatprep.subr.bf16.mxu0 0
      %1877 = vmatpush2.bf16.xpose.msra.mxu0 0
      %1878 = vmatprep.subr.bf16.mxu0 0
      %1879 = vmatpush2.bf16.xpose.msra.mxu0 0
      %1880 = vmatprep.mubr.bf16.mxu0 0
      %1881 = vmatmul.mubr.bf16.gmra.mxu0 %v1843
      %v1882 = vpop.f32.mrf.mxu0
      %v1883 = vadd.f32 0.0, %v1882
      %v1884 = vpop.f32.mrf.mxu0
      %v1885 = vpop.f32.mrf.mxu0
      %v1886 = vadd.f32 0.0, %v1885
      %v1887 = vpop.f32.mrf.mxu0
      %1888 = vdwg.mxu0
      %v1890 = vsel %vm713, %v644, 0
      %v1893 = vsel %vm713, %v700, 0
      %1895 = vmatprep.subr.bf16.mxu0 0
      %1896 = vmatpush1.bf16.xpose.msra.mxu0 0
      %1897 = vmatprep.subr.bf16.mxu0 0
      %1898 = vmatpush1.bf16.xpose.msra.mxu0 0
      %1899 = vmatprep.subr.bf16.mxu0 0
      %1900 = vmatpush1.bf16.xpose.msra.mxu0 0
      %1901 = vmatprep.subr.bf16.mxu0 0
      %1902 = vmatpush1.bf16.xpose.msra.mxu0 0
      %1903 = vmatprep.subr.bf16.mxu0 0
      %1904 = vmatpush1.bf16.xpose.msra.mxu0 0
      %1905 = vmatprep.subr.bf16.mxu0 0
      %1906 = vmatpush1.bf16.xpose.msra.mxu0 0
      %1907 = vmatprep.subr.bf16.mxu0 0
      %1908 = vmatpush1.bf16.xpose.msra.mxu0 0
      %1909 = vmatprep.subr.bf16.mxu0 0
      %1910 = vmatpush1.bf16.xpose.msra.mxu0 %v1893
      %1911 = vmatprep.subr.bf16.mxu0 0
      %1912 = vmatpush2.bf16.xpose.msra.mxu0 0
      %1913 = vmatprep.subr.bf16.mxu0 0
      %1914 = vmatpush2.bf16.xpose.msra.mxu0 0
      %1915 = vmatprep.subr.bf16.mxu0 0
      %1916 = vmatpush2.bf16.xpose.msra.mxu0 0
      %1917 = vmatprep.subr.bf16.mxu0 0
      %1918 = vmatpush2.bf16.xpose.msra.mxu0 0
      %1919 = vmatprep.subr.bf16.mxu0 0
      %1920 = vmatpush2.bf16.xpose.msra.mxu0 0
      %1921 = vmatprep.subr.bf16.mxu0 0
      %1922 = vmatpush2.bf16.xpose.msra.mxu0 0
      %1923 = vmatprep.subr.bf16.mxu0 0
      %1924 = vmatpush2.bf16.xpose.msra.mxu0 0
      %1925 = vmatprep.subr.bf16.mxu0 0
      %1926 = vmatpush2.bf16.xpose.msra.mxu0 0
      %1927 = vmatprep.mubr.bf16.mxu0 0
      %1928 = vmatmul.mubr.bf16.gmra.mxu0 %v1890
      %v1929 = vpop.f32.mrf.mxu0
      %v1930 = vadd.f32 0.0, %v1929
      %v1931 = vpop.f32.mrf.mxu0
      %v1932 = vpop.f32.mrf.mxu0
      %v1933 = vadd.f32 0.0, %v1932
      %v1934 = vpop.f32.mrf.mxu0
      %1935 = vdwg.mxu0
      %v1937 = vsel %vm713, %v646, 0
      %v1940 = vsel %vm713, %v702, 0
      %1942 = vmatprep.subr.bf16.mxu0 0
      %1943 = vmatpush1.bf16.xpose.msra.mxu0 0
      %1944 = vmatprep.subr.bf16.mxu0 0
      %1945 = vmatpush1.bf16.xpose.msra.mxu0 0
      %1946 = vmatprep.subr.bf16.mxu0 0
      %1947 = vmatpush1.bf16.xpose.msra.mxu0 0
      %1948 = vmatprep.subr.bf16.mxu0 0
      %1949 = vmatpush1.bf16.xpose.msra.mxu0 0
      %1950 = vmatprep.subr.bf16.mxu0 0
      %1951 = vmatpush1.bf16.xpose.msra.mxu0 0
      %1952 = vmatprep.subr.bf16.mxu0 0
      %1953 = vmatpush1.bf16.xpose.msra.mxu0 0
      %1954 = vmatprep.subr.bf16.mxu0 0
      %1955 = vmatpush1.bf16.xpose.msra.mxu0 0
      %1956 = vmatprep.subr.bf16.mxu0 0
      %1957 = vmatpush1.bf16.xpose.msra.mxu0 %v1940
      %1958 = vmatprep.subr.bf16.mxu0 0
      %1959 = vmatpush2.bf16.xpose.msra.mxu0 0
      %1960 = vmatprep.subr.bf16.mxu0 0
      %1961 = vmatpush2.bf16.xpose.msra.mxu0 0
      %1962 = vmatprep.subr.bf16.mxu0 0
      %1963 = vmatpush2.bf16.xpose.msra.mxu0 0
      %1964 = vmatprep.subr.bf16.mxu0 0
      %1965 = vmatpush2.bf16.xpose.msra.mxu0 0
      %1966 = vmatprep.subr.bf16.mxu0 0
      %1967 = vmatpush2.bf16.xpose.msra.mxu0 0
      %1968 = vmatprep.subr.bf16.mxu0 0
      %1969 = vmatpush2.bf16.xpose.msra.mxu0 0
      %1970 = vmatprep.subr.bf16.mxu0 0
      %1971 = vmatpush2.bf16.xpose.msra.mxu0 0
      %1972 = vmatprep.subr.bf16.mxu0 0
      %1973 = vmatpush2.bf16.xpose.msra.mxu0 0
      %1974 = vmatprep.mubr.bf16.mxu0 0
      %1975 = vmatmul.mubr.bf16.gmra.mxu0 %v1937
      %v1976 = vpop.f32.mrf.mxu0
      %v1977 = vadd.f32 0.0, %v1976
      %v1978 = vpop.f32.mrf.mxu0
      %v1979 = vpop.f32.mrf.mxu0
      %v1980 = vadd.f32 0.0, %v1979
      %v1981 = vpop.f32.mrf.mxu0
      %1982 = vdwg.mxu0
      %v1984 = vsel %vm713, %v648, 0
      %v1987 = vsel %vm713, %v704, 0
      %1989 = vmatprep.subr.bf16.mxu0 0
      %1990 = vmatpush1.bf16.xpose.msra.mxu0 0
      %1991 = vmatprep.subr.bf16.mxu0 0
      %1992 = vmatpush1.bf16.xpose.msra.mxu0 0
      %1993 = vmatprep.subr.bf16.mxu0 0
      %1994 = vmatpush1.bf16.xpose.msra.mxu0 0
      %1995 = vmatprep.subr.bf16.mxu0 0
      %1996 = vmatpush1.bf16.xpose.msra.mxu0 0
      %1997 = vmatprep.subr.bf16.mxu0 0
      %1998 = vmatpush1.bf16.xpose.msra.mxu0 0
      %1999 = vmatprep.subr.bf16.mxu0 0
      %2000 = vmatpush1.bf16.xpose.msra.mxu0 0
      %2001 = vmatprep.subr.bf16.mxu0 0
      %2002 = vmatpush1.bf16.xpose.msra.mxu0 0
      %2003 = vmatprep.subr.bf16.mxu0 0
      %2004 = vmatpush1.bf16.xpose.msra.mxu0 %v1987
      %2005 = vmatprep.subr.bf16.mxu0 0
      %2006 = vmatpush2.bf16.xpose.msra.mxu0 0
      %2007 = vmatprep.subr.bf16.mxu0 0
      %2008 = vmatpush2.bf16.xpose.msra.mxu0 0
      %2009 = vmatprep.subr.bf16.mxu0 0
      %2010 = vmatpush2.bf16.xpose.msra.mxu0 0
      %2011 = vmatprep.subr.bf16.mxu0 0
      %2012 = vmatpush2.bf16.xpose.msra.mxu0 0
      %2013 = vmatprep.subr.bf16.mxu0 0
      %2014 = vmatpush2.bf16.xpose.msra.mxu0 0
      %2015 = vmatprep.subr.bf16.mxu0 0
      %2016 = vmatpush2.bf16.xpose.msra.mxu0 0
      %2017 = vmatprep.subr.bf16.mxu0 0
      %2018 = vmatpush2.bf16.xpose.msra.mxu0 0
      %2019 = vmatprep.subr.bf16.mxu0 0
      %2020 = vmatpush2.bf16.xpose.msra.mxu0 0
      %2021 = vmatprep.mubr.bf16.mxu0 0
      %2022 = vmatmul.mubr.bf16.gmra.mxu0 %v1984
      %v2023 = vpop.f32.mrf.mxu0
      %v2024 = vadd.f32 0.0, %v2023
      %v2025 = vpop.f32.mrf.mxu0
      %v2026 = vpop.f32.mrf.mxu0
      %v2027 = vadd.f32 0.0, %v2026
      %v2028 = vpop.f32.mrf.mxu0
      %2029 = vdwg.mxu0
      %v2031 = vsel %vm713, %v650, 0
      %v2034 = vsel %vm713, %v706, 0
      %2036 = vmatprep.subr.bf16.mxu0 0
      %2037 = vmatpush1.bf16.xpose.msra.mxu0 0
      %2038 = vmatprep.subr.bf16.mxu0 0
      %2039 = vmatpush1.bf16.xpose.msra.mxu0 0
      %2040 = vmatprep.subr.bf16.mxu0 0
      %2041 = vmatpush1.bf16.xpose.msra.mxu0 0
      %2042 = vmatprep.subr.bf16.mxu0 0
      %2043 = vmatpush1.bf16.xpose.msra.mxu0 0
      %2044 = vmatprep.subr.bf16.mxu0 0
      %2045 = vmatpush1.bf16.xpose.msra.mxu0 0
      %2046 = vmatprep.subr.bf16.mxu0 0
      %2047 = vmatpush1.bf16.xpose.msra.mxu0 0
      %2048 = vmatprep.subr.bf16.mxu0 0
      %2049 = vmatpush1.bf16.xpose.msra.mxu0 0
      %2050 = vmatprep.subr.bf16.mxu0 0
      %2051 = vmatpush1.bf16.xpose.msra.mxu0 %v2034
      %2052 = vmatprep.subr.bf16.mxu0 0
      %2053 = vmatpush2.bf16.xpose.msra.mxu0 0
      %2054 = vmatprep.subr.bf16.mxu0 0
      %2055 = vmatpush2.bf16.xpose.msra.mxu0 0
      %2056 = vmatprep.subr.bf16.mxu0 0
      %2057 = vmatpush2.bf16.xpose.msra.mxu0 0
      %2058 = vmatprep.subr.bf16.mxu0 0
      %2059 = vmatpush2.bf16.xpose.msra.mxu0 0
      %2060 = vmatprep.subr.bf16.mxu0 0
      %2061 = vmatpush2.bf16.xpose.msra.mxu0 0
      %2062 = vmatprep.subr.bf16.mxu0 0
      %2063 = vmatpush2.bf16.xpose.msra.mxu0 0
      %2064 = vmatprep.subr.bf16.mxu0 0
      %2065 = vmatpush2.bf16.xpose.msra.mxu0 0
      %2066 = vmatprep.subr.bf16.mxu0 0
      %2067 = vmatpush2.bf16.xpose.msra.mxu0 0
      %2068 = vmatprep.mubr.bf16.mxu0 0
      %2069 = vmatmul.mubr.bf16.gmra.mxu0 %v2031
      %v2070 = vpop.f32.mrf.mxu0
      %v2071 = vadd.f32 0.0, %v2070
      %v2072 = vpop.f32.mrf.mxu0
      %v2073 = vpop.f32.mrf.mxu0
      %v2074 = vadd.f32 0.0, %v2073
      %v2075 = vpop.f32.mrf.mxu0
      %2076 = vdwg.mxu0
      %v2078 = vsel %vm713, %v652, 0
      %v2081 = vsel %vm713, %v708, 0
      %2083 = vmatprep.subr.bf16.mxu0 0
      %2084 = vmatpush1.bf16.xpose.msra.mxu0 0
      %2085 = vmatprep.subr.bf16.mxu0 0
      %2086 = vmatpush1.bf16.xpose.msra.mxu0 0
      %2087 = vmatprep.subr.bf16.mxu0 0
      %2088 = vmatpush1.bf16.xpose.msra.mxu0 0
      %2089 = vmatprep.subr.bf16.mxu0 0
      %2090 = vmatpush1.bf16.xpose.msra.mxu0 0
      %2091 = vmatprep.subr.bf16.mxu0 0
      %2092 = vmatpush1.bf16.xpose.msra.mxu0 0
      %2093 = vmatprep.subr.bf16.mxu0 0
      %2094 = vmatpush1.bf16.xpose.msra.mxu0 0
      %2095 = vmatprep.subr.bf16.mxu0 0
      %2096 = vmatpush1.bf16.xpose.msra.mxu0 0
      %2097 = vmatprep.subr.bf16.mxu0 0
      %2098 = vmatpush1.bf16.xpose.msra.mxu0 %v2081
      %2099 = vmatprep.subr.bf16.mxu0 0
      %2100 = vmatpush2.bf16.xpose.msra.mxu0 0
      %2101 = vmatprep.subr.bf16.mxu0 0
      %2102 = vmatpush2.bf16.xpose.msra.mxu0 0
      %2103 = vmatprep.subr.bf16.mxu0 0
      %2104 = vmatpush2.bf16.xpose.msra.mxu0 0
      %2105 = vmatprep.subr.bf16.mxu0 0
      %2106 = vmatpush2.bf16.xpose.msra.mxu0 0
      %2107 = vmatprep.subr.bf16.mxu0 0
      %2108 = vmatpush2.bf16.xpose.msra.mxu0 0
      %2109 = vmatprep.subr.bf16.mxu0 0
      %2110 = vmatpush2.bf16.xpose.msra.mxu0 0
      %2111 = vmatprep.subr.bf16.mxu0 0
      %2112 = vmatpush2.bf16.xpose.msra.mxu0 0
      %2113 = vmatprep.subr.bf16.mxu0 0
      %2114 = vmatpush2.bf16.xpose.msra.mxu0 0
      %2115 = vmatprep.mubr.bf16.mxu0 0
      %2116 = vmatmul.mubr.bf16.gmra.mxu0 %v2078
      %v2117 = vpop.f32.mrf.mxu0
      %v2118 = vadd.f32 0.0, %v2117
      %v2119 = vpop.f32.mrf.mxu0
      %v2120 = vpop.f32.mrf.mxu0
      %v2121 = vadd.f32 0.0, %v2120
      %v2122 = vpop.f32.mrf.mxu0
      %2123 = vdwg.mxu0
      %v2125 = vsel %vm713, %v654, 0
      %v2128 = vsel %vm713, %v710, 0
      %2130 = vmatprep.subr.bf16.mxu0 0
      %2131 = vmatpush1.bf16.xpose.msra.mxu0 0
      %2132 = vmatprep.subr.bf16.mxu0 0
      %2133 = vmatpush1.bf16.xpose.msra.mxu0 0
      %2134 = vmatprep.subr.bf16.mxu0 0
      %2135 = vmatpush1.bf16.xpose.msra.mxu0 0
      %2136 = vmatprep.subr.bf16.mxu0 0
      %2137 = vmatpush1.bf16.xpose.msra.mxu0 0
      %2138 = vmatprep.subr.bf16.mxu0 0
      %2139 = vmatpush1.bf16.xpose.msra.mxu0 0
      %2140 = vmatprep.subr.bf16.mxu0 0
      %2141 = vmatpush1.bf16.xpose.msra.mxu0 0
      %2142 = vmatprep.subr.bf16.mxu0 0
      %2143 = vmatpush1.bf16.xpose.msra.mxu0 0
      %2144 = vmatprep.subr.bf16.mxu0 0
      %2145 = vmatpush1.bf16.xpose.msra.mxu0 %v2128
      %2146 = vmatprep.subr.bf16.mxu0 0
      %2147 = vmatpush2.bf16.xpose.msra.mxu0 0
      %2148 = vmatprep.subr.bf16.mxu0 0
      %2149 = vmatpush2.bf16.xpose.msra.mxu0 0
      %2150 = vmatprep.subr.bf16.mxu0 0
      %2151 = vmatpush2.bf16.xpose.msra.mxu0 0
      %2152 = vmatprep.subr.bf16.mxu0 0
      %2153 = vmatpush2.bf16.xpose.msra.mxu0 0
      %2154 = vmatprep.subr.bf16.mxu0 0
      %2155 = vmatpush2.bf16.xpose.msra.mxu0 0
      %2156 = vmatprep.subr.bf16.mxu0 0
      %2157 = vmatpush2.bf16.xpose.msra.mxu0 0
      %2158 = vmatprep.subr.bf16.mxu0 0
      %2159 = vmatpush2.bf16.xpose.msra.mxu0 0
      %2160 = vmatprep.subr.bf16.mxu0 0
      %2161 = vmatpush2.bf16.xpose.msra.mxu0 0
      %2162 = vmatprep.mubr.bf16.mxu0 0
      %2163 = vmatmul.mubr.bf16.gmra.mxu0 %v2125
      %v2164 = vpop.f32.mrf.mxu0
      %v2165 = vadd.f32 0.0, %v2164
      %v2166 = vpop.f32.mrf.mxu0
      %v2167 = vpop.f32.mrf.mxu0
      %v2168 = vadd.f32 0.0, %v2167
      %v2169 = vpop.f32.mrf.mxu0
      %2170 = vdwg.mxu0
      %v2172 = vsel %vm713, %v656, 0
      %v2175 = vsel %vm713, %v712, 0
      %2177 = vmatprep.subr.bf16.mxu0 0
      %2178 = vmatpush1.bf16.xpose.msra.mxu0 0
      %2179 = vmatprep.subr.bf16.mxu0 0
      %2180 = vmatpush1.bf16.xpose.msra.mxu0 0
      %2181 = vmatprep.subr.bf16.mxu0 0
      %2182 = vmatpush1.bf16.xpose.msra.mxu0 0
      %2183 = vmatprep.subr.bf16.mxu0 0
      %2184 = vmatpush1.bf16.xpose.msra.mxu0 0
      %2185 = vmatprep.subr.bf16.mxu0 0
      %2186 = vmatpush1.bf16.xpose.msra.mxu0 0
      %2187 = vmatprep.subr.bf16.mxu0 0
      %2188 = vmatpush1.bf16.xpose.msra.mxu0 0
      %2189 = vmatprep.subr.bf16.mxu0 0
      %2190 = vmatpush1.bf16.xpose.msra.mxu0 0
      %2191 = vmatprep.subr.bf16.mxu0 0
      %2192 = vmatpush1.bf16.xpose.msra.mxu0 %v2175
      %2193 = vmatprep.subr.bf16.mxu0 0
      %2194 = vmatpush2.bf16.xpose.msra.mxu0 0
      %2195 = vmatprep.subr.bf16.mxu0 0
      %2196 = vmatpush2.bf16.xpose.msra.mxu0 0
      %2197 = vmatprep.subr.bf16.mxu0 0
      %2198 = vmatpush2.bf16.xpose.msra.mxu0 0
      %2199 = vmatprep.subr.bf16.mxu0 0
      %2200 = vmatpush2.bf16.xpose.msra.mxu0 0
      %2201 = vmatprep.subr.bf16.mxu0 0
      %2202 = vmatpush2.bf16.xpose.msra.mxu0 0
      %2203 = vmatprep.subr.bf16.mxu0 0
      %2204 = vmatpush2.bf16.xpose.msra.mxu0 0
      %2205 = vmatprep.subr.bf16.mxu0 0
      %2206 = vmatpush2.bf16.xpose.msra.mxu0 0
      %2207 = vmatprep.subr.bf16.mxu0 0
      %2208 = vmatpush2.bf16.xpose.msra.mxu0 0
      %2209 = vmatprep.mubr.bf16.mxu0 0
      %2210 = vmatmul.mubr.bf16.gmra.mxu0 %v2172
      %v2211 = vpop.f32.mrf.mxu0
      %v2212 = vadd.f32 0.0, %v2211
      %v2213 = vpop.f32.mrf.mxu0
      %v2214 = vpop.f32.mrf.mxu0
      %v2215 = vadd.f32 0.0, %v2214
      %v2216 = vpop.f32.mrf.mxu0
      %2217 = vdwg.mxu0
      %v2218 = vsel %vm206, %v755, -inf
      %2219 = vmax.xlane.f32.xlu0 %v2218
      %v2220 = vpop.xlane.xlu0 %2219
      %v2221 = vsel %vm206, %v758, -inf
      %2222 = vmax.xlane.f32.xlu0 %v2221
      %v2223 = vpop.xlane.xlu0 %2222
      %v2224 = vsel %vm206, %v802, -inf
      %2225 = vmax.xlane.f32.xlu0 %v2224
      %v2226 = vpop.xlane.xlu0 %2225
      %v2227 = vsel %vm206, %v805, -inf
      %2228 = vmax.xlane.f32.xlu0 %v2227
      %v2229 = vpop.xlane.xlu0 %2228
      %v2230 = vsel %vm206, %v849, -inf
      %2231 = vmax.xlane.f32.xlu0 %v2230
      %v2232 = vpop.xlane.xlu0 %2231
      %v2233 = vsel %vm206, %v852, -inf
      %2234 = vmax.xlane.f32.xlu0 %v2233
      %v2235 = vpop.xlane.xlu0 %2234
      %v2236 = vsel %vm206, %v896, -inf
      %2237 = vmax.xlane.f32.xlu0 %v2236
      %v2238 = vpop.xlane.xlu0 %2237
      %v2239 = vsel %vm206, %v899, -inf
      %2240 = vmax.xlane.f32.xlu0 %v2239
      %v2241 = vpop.xlane.xlu0 %2240
      %v2242 = vsel %vm206, %v943, -inf
      %2243 = vmax.xlane.f32.xlu0 %v2242
      %v2244 = vpop.xlane.xlu0 %2243
      %v2245 = vsel %vm206, %v946, -inf
      %2246 = vmax.xlane.f32.xlu0 %v2245
      %v2247 = vpop.xlane.xlu0 %2246
      %v2248 = vsel %vm206, %v990, -inf
      %2249 = vmax.xlane.f32.xlu0 %v2248
      %v2250 = vpop.xlane.xlu0 %2249
      %v2251 = vsel %vm206, %v993, -inf
      %2252 = vmax.xlane.f32.xlu0 %v2251
      %v2253 = vpop.xlane.xlu0 %2252
      %v2254 = vsel %vm206, %v1037, -inf
      %2255 = vmax.xlane.f32.xlu0 %v2254
      %v2256 = vpop.xlane.xlu0 %2255
      %v2257 = vsel %vm206, %v1040, -inf
      %2258 = vmax.xlane.f32.xlu0 %v2257
      %v2259 = vpop.xlane.xlu0 %2258
      %v2260 = vsel %vm206, %v1084, -inf
      %2261 = vmax.xlane.f32.xlu0 %v2260
      %v2262 = vpop.xlane.xlu0 %2261
      %v2263 = vsel %vm206, %v1087, -inf
      %2264 = vmax.xlane.f32.xlu0 %v2263
      %v2265 = vpop.xlane.xlu0 %2264
      %v2266 = vsel %vm206, %v1131, -inf
      %2267 = vmax.xlane.f32.xlu0 %v2266
      %v2268 = vpop.xlane.xlu0 %2267
      %v2269 = vsel %vm206, %v1134, -inf
      %2270 = vmax.xlane.f32.xlu0 %v2269
      %v2271 = vpop.xlane.xlu0 %2270
      %v2272 = vsel %vm206, %v1178, -inf
      %2273 = vmax.xlane.f32.xlu0 %v2272
      %v2274 = vpop.xlane.xlu0 %2273
      %v2275 = vsel %vm206, %v1181, -inf
      %2276 = vmax.xlane.f32.xlu0 %v2275
      %v2277 = vpop.xlane.xlu0 %2276
      %v2278 = vsel %vm206, %v1225, -inf
      %2279 = vmax.xlane.f32.xlu0 %v2278
      %v2280 = vpop.xlane.xlu0 %2279
      %v2281 = vsel %vm206, %v1228, -inf
      %2282 = vmax.xlane.f32.xlu0 %v2281
      %v2283 = vpop.xlane.xlu0 %2282
      %v2284 = vsel %vm206, %v1272, -inf
      %2285 = vmax.xlane.f32.xlu0 %v2284
      %v2286 = vpop.xlane.xlu0 %2285
      %v2287 = vsel %vm206, %v1275, -inf
      %2288 = vmax.xlane.f32.xlu0 %v2287
      %v2289 = vpop.xlane.xlu0 %2288
      %v2290 = vsel %vm206, %v1319, -inf
      %2291 = vmax.xlane.f32.xlu0 %v2290
      %v2292 = vpop.xlane.xlu0 %2291
      %v2293 = vsel %vm206, %v1322, -inf
      %2294 = vmax.xlane.f32.xlu0 %v2293
      %v2295 = vpop.xlane.xlu0 %2294
      %v2296 = vsel %vm206, %v1366, -inf
      %2297 = vmax.xlane.f32.xlu0 %v2296
      %v2298 = vpop.xlane.xlu0 %2297
      %v2299 = vsel %vm206, %v1369, -inf
      %2300 = vmax.xlane.f32.xlu0 %v2299
      %v2301 = vpop.xlane.xlu0 %2300
      %v2302 = vsel %vm206, %v1413, -inf
      %2303 = vmax.xlane.f32.xlu0 %v2302
      %v2304 = vpop.xlane.xlu0 %2303
      %v2305 = vsel %vm206, %v1416, -inf
      %2306 = vmax.xlane.f32.xlu0 %v2305
      %v2307 = vpop.xlane.xlu0 %2306
      %v2308 = vsel %vm206, %v1460, -inf
      %2309 = vmax.xlane.f32.xlu0 %v2308
      %v2310 = vpop.xlane.xlu0 %2309
      %v2311 = vsel %vm206, %v1463, -inf
      %2312 = vmax.xlane.f32.xlu0 %v2311
      %v2313 = vpop.xlane.xlu0 %2312
      %v2314 = vsel %vm206, %v1507, -inf
      %2315 = vmax.xlane.f32.xlu0 %v2314
      %v2316 = vpop.xlane.xlu0 %2315
      %v2317 = vsel %vm206, %v1510, -inf
      %2318 = vmax.xlane.f32.xlu0 %v2317
      %v2319 = vpop.xlane.xlu0 %2318
      %v2320 = vsel %vm206, %v1554, -inf
      %2321 = vmax.xlane.f32.xlu0 %v2320
      %v2322 = vpop.xlane.xlu0 %2321
      %v2323 = vsel %vm206, %v1557, -inf
      %2324 = vmax.xlane.f32.xlu0 %v2323
      %v2325 = vpop.xlane.xlu0 %2324
      %v2326 = vsel %vm206, %v1601, -inf
      %2327 = vmax.xlane.f32.xlu0 %v2326
      %v2328 = vpop.xlane.xlu0 %2327
      %v2329 = vsel %vm206, %v1604, -inf
      %2330 = vmax.xlane.f32.xlu0 %v2329
      %v2331 = vpop.xlane.xlu0 %2330
      %v2332 = vsel %vm206, %v1648, -inf
      %2333 = vmax.xlane.f32.xlu0 %v2332
      %v2334 = vpop.xlane.xlu0 %2333
      %v2335 = vsel %vm206, %v1651, -inf
      %2336 = vmax.xlane.f32.xlu0 %v2335
      %v2337 = vpop.xlane.xlu0 %2336
      %v2338 = vsel %vm206, %v1695, -inf
      %2339 = vmax.xlane.f32.xlu0 %v2338
      %v2340 = vpop.xlane.xlu0 %2339
      %v2341 = vsel %vm206, %v1698, -inf
      %2342 = vmax.xlane.f32.xlu0 %v2341
      %v2343 = vpop.xlane.xlu0 %2342
      %v2344 = vsel %vm206, %v1742, -inf
      %2345 = vmax.xlane.f32.xlu0 %v2344
      %v2346 = vpop.xlane.xlu0 %2345
      %v2347 = vsel %vm206, %v1745, -inf
      %2348 = vmax.xlane.f32.xlu0 %v2347
      %v2349 = vpop.xlane.xlu0 %2348
      %v2350 = vsel %vm206, %v1789, -inf
      %2351 = vmax.xlane.f32.xlu0 %v2350
      %v2352 = vpop.xlane.xlu0 %2351
      %v2353 = vsel %vm206, %v1792, -inf
      %2354 = vmax.xlane.f32.xlu0 %v2353
      %v2355 = vpop.xlane.xlu0 %2354
      %v2356 = vsel %vm206, %v1836, -inf
      %2357 = vmax.xlane.f32.xlu0 %v2356
      %v2358 = vpop.xlane.xlu0 %2357
      %v2359 = vsel %vm206, %v1839, -inf
      %2360 = vmax.xlane.f32.xlu0 %v2359
      %v2361 = vpop.xlane.xlu0 %2360
      %v2362 = vsel %vm206, %v1883, -inf
      %2363 = vmax.xlane.f32.xlu0 %v2362
      %v2364 = vpop.xlane.xlu0 %2363
      %v2365 = vsel %vm206, %v1886, -inf
      %2366 = vmax.xlane.f32.xlu0 %v2365
      %v2367 = vpop.xlane.xlu0 %2366
      %v2368 = vsel %vm206, %v1930, -inf
      %2369 = vmax.xlane.f32.xlu0 %v2368
      %v2370 = vpop.xlane.xlu0 %2369
      %v2371 = vsel %vm206, %v1933, -inf
      %2372 = vmax.xlane.f32.xlu0 %v2371
      %v2373 = vpop.xlane.xlu0 %2372
      %v2374 = vsel %vm206, %v1977, -inf
      %2375 = vmax.xlane.f32.xlu0 %v2374
      %v2376 = vpop.xlane.xlu0 %2375
      %v2377 = vsel %vm206, %v1980, -inf
      %2378 = vmax.xlane.f32.xlu0 %v2377
      %v2379 = vpop.xlane.xlu0 %2378
      %v2380 = vsel %vm206, %v2024, -inf
      %2381 = vmax.xlane.f32.xlu0 %v2380
      %v2382 = vpop.xlane.xlu0 %2381
      %v2383 = vsel %vm206, %v2027, -inf
      %2384 = vmax.xlane.f32.xlu0 %v2383
      %v2385 = vpop.xlane.xlu0 %2384
      %v2386 = vsel %vm206, %v2071, -inf
      %2387 = vmax.xlane.f32.xlu0 %v2386
      %v2388 = vpop.xlane.xlu0 %2387
      %v2389 = vsel %vm206, %v2074, -inf
      %2390 = vmax.xlane.f32.xlu0 %v2389
      %v2391 = vpop.xlane.xlu0 %2390
      %v2392 = vsel %vm206, %v2118, -inf
      %2393 = vmax.xlane.f32.xlu0 %v2392
      %v2394 = vpop.xlane.xlu0 %2393
      %v2395 = vsel %vm206, %v2121, -inf
      %2396 = vmax.xlane.f32.xlu0 %v2395
      %v2397 = vpop.xlane.xlu0 %2396
      %v2398 = vsel %vm206, %v2165, -inf
      %2399 = vmax.xlane.f32.xlu0 %v2398
      %v2400 = vpop.xlane.xlu0 %2399
      %v2401 = vsel %vm206, %v2168, -inf
      %2402 = vmax.xlane.f32.xlu0 %v2401
      %v2403 = vpop.xlane.xlu0 %2402
      %v2404 = vsel %vm206, %v2212, -inf
      %2405 = vmax.xlane.f32.xlu0 %v2404
      %v2406 = vpop.xlane.xlu0 %2405
      %v2407 = vsel %vm206, %v2215, -inf
      %2408 = vmax.xlane.f32.xlu0 %v2407
      %v2409 = vpop.xlane.xlu0 %2408
      %v2410 = vsub.f32 %v755, %v2220
      %v2411 = vsub.f32 %v758, %v2223
      %v2412 = vsub.f32 %v802, %v2226
      %v2413 = vsub.f32 %v805, %v2229
      %v2414 = vsub.f32 %v849, %v2232
      %v2415 = vsub.f32 %v852, %v2235
      %v2416 = vsub.f32 %v896, %v2238
      %v2417 = vsub.f32 %v899, %v2241
      %v2418 = vsub.f32 %v943, %v2244
      %v2419 = vsub.f32 %v946, %v2247
      %v2420 = vsub.f32 %v990, %v2250
      %v2421 = vsub.f32 %v993, %v2253
      %v2422 = vsub.f32 %v1037, %v2256
      %v2423 = vsub.f32 %v1040, %v2259
      %v2424 = vsub.f32 %v1084, %v2262
      %v2425 = vsub.f32 %v1087, %v2265
      %v2426 = vsub.f32 %v1131, %v2268
      %v2427 = vsub.f32 %v1134, %v2271
      %v2428 = vsub.f32 %v1178, %v2274
      %v2429 = vsub.f32 %v1181, %v2277
      %v2430 = vsub.f32 %v1225, %v2280
      %v2431 = vsub.f32 %v1228, %v2283
      %v2432 = vsub.f32 %v1272, %v2286
      %v2433 = vsub.f32 %v1275, %v2289
      %v2434 = vsub.f32 %v1319, %v2292
      %v2435 = vsub.f32 %v1322, %v2295
      %v2436 = vsub.f32 %v1366, %v2298
      %v2437 = vsub.f32 %v1369, %v2301
      %v2438 = vsub.f32 %v1413, %v2304
      %v2439 = vsub.f32 %v1416, %v2307
      %v2440 = vsub.f32 %v1460, %v2310
      %v2441 = vsub.f32 %v1463, %v2313
      %v2442 = vsub.f32 %v1507, %v2316
      %v2443 = vsub.f32 %v1510, %v2319
      %v2444 = vsub.f32 %v1554, %v2322
      %v2445 = vsub.f32 %v1557, %v2325
      %v2446 = vsub.f32 %v1601, %v2328
      %v2447 = vsub.f32 %v1604, %v2331
      %v2448 = vsub.f32 %v1648, %v2334
      %v2449 = vsub.f32 %v1651, %v2337
      %v2450 = vsub.f32 %v1695, %v2340
      %v2451 = vsub.f32 %v1698, %v2343
      %v2452 = vsub.f32 %v1742, %v2346
      %v2453 = vsub.f32 %v1745, %v2349
      %v2454 = vsub.f32 %v1789, %v2352
      %v2455 = vsub.f32 %v1792, %v2355
      %v2456 = vsub.f32 %v1836, %v2358
      %v2457 = vsub.f32 %v1839, %v2361
      %v2458 = vsub.f32 %v1883, %v2364
      %v2459 = vsub.f32 %v1886, %v2367
      %v2460 = vsub.f32 %v1930, %v2370
      %v2461 = vsub.f32 %v1933, %v2373
      %v2462 = vsub.f32 %v1977, %v2376
      %v2463 = vsub.f32 %v1980, %v2379
      %v2464 = vsub.f32 %v2024, %v2382
      %v2465 = vsub.f32 %v2027, %v2385
      %v2466 = vsub.f32 %v2071, %v2388
      %v2467 = vsub.f32 %v2074, %v2391
      %v2468 = vsub.f32 %v2118, %v2394
      %v2469 = vsub.f32 %v2121, %v2397
      %v2470 = vsub.f32 %v2165, %v2400
      %v2471 = vsub.f32 %v2168, %v2403
      %v2472 = vsub.f32 %v2212, %v2406
      %v2473 = vsub.f32 %v2215, %v2409
      %v2474 = vmul.f32 %v2410, 1.442695
      %v2475 = vpow.pop %v2474
      %v2476 = vmul.f32 %v2411, 1.442695
      %v2477 = vpow.pop %v2476
      %v2478 = vmul.f32 %v2412, 1.442695
      %v2479 = vpow.pop %v2478
      %v2480 = vmul.f32 %v2413, 1.442695
      %v2481 = vpow.pop %v2480
      %v2482 = vmul.f32 %v2414, 1.442695
      %v2483 = vpow.pop %v2482
      %v2484 = vmul.f32 %v2415, 1.442695
      %v2485 = vpow.pop %v2484
      %v2486 = vmul.f32 %v2416, 1.442695
      %v2487 = vpow.pop %v2486
      %v2488 = vmul.f32 %v2417, 1.442695
      %v2489 = vpow.pop %v2488
      %v2490 = vmul.f32 %v2418, 1.442695
      %v2491 = vpow.pop %v2490
      %v2492 = vmul.f32 %v2419, 1.442695
      %v2493 = vpow.pop %v2492
      %v2494 = vmul.f32 %v2420, 1.442695
      %v2495 = vpow.pop %v2494
      %v2496 = vmul.f32 %v2421, 1.442695
      %v2497 = vpow.pop %v2496
      %v2498 = vmul.f32 %v2422, 1.442695
      %v2499 = vpow.pop %v2498
      %v2500 = vmul.f32 %v2423, 1.442695
      %v2501 = vpow.pop %v2500
      %v2502 = vmul.f32 %v2424, 1.442695
      %v2503 = vpow.pop %v2502
      %v2504 = vmul.f32 %v2425, 1.442695
      %v2505 = vpow.pop %v2504
      %v2506 = vmul.f32 %v2426, 1.442695
      %v2507 = vpow.pop %v2506
      %v2508 = vmul.f32 %v2427, 1.442695
      %v2509 = vpow.pop %v2508
      %v2510 = vmul.f32 %v2428, 1.442695
      %v2511 = vpow.pop %v2510
      %v2512 = vmul.f32 %v2429, 1.442695
      %v2513 = vpow.pop %v2512
      %v2514 = vmul.f32 %v2430, 1.442695
      %v2515 = vpow.pop %v2514
      %v2516 = vmul.f32 %v2431, 1.442695
      %v2517 = vpow.pop %v2516
      %v2518 = vmul.f32 %v2432, 1.442695
      %v2519 = vpow.pop %v2518
      %v2520 = vmul.f32 %v2433, 1.442695
      %v2521 = vpow.pop %v2520
      %v2522 = vmul.f32 %v2434, 1.442695
      %v2523 = vpow.pop %v2522
      %v2524 = vmul.f32 %v2435, 1.442695
      %v2525 = vpow.pop %v2524
      %v2526 = vmul.f32 %v2436, 1.442695
      %v2527 = vpow.pop %v2526
      %v2528 = vmul.f32 %v2437, 1.442695
      %v2529 = vpow.pop %v2528
      %v2530 = vmul.f32 %v2438, 1.442695
      %v2531 = vpow.pop %v2530
      %v2532 = vmul.f32 %v2439, 1.442695
      %v2533 = vpow.pop %v2532
      %v2534 = vmul.f32 %v2440, 1.442695
      %v2535 = vpow.pop %v2534
      %v2536 = vmul.f32 %v2441, 1.442695
      %v2537 = vpow.pop %v2536
      %v2538 = vmul.f32 %v2442, 1.442695
      %v2539 = vpow.pop %v2538
      %v2540 = vmul.f32 %v2443, 1.442695
      %v2541 = vpow.pop %v2540
      %v2542 = vmul.f32 %v2444, 1.442695
      %v2543 = vpow.pop %v2542
      %v2544 = vmul.f32 %v2445, 1.442695
      %v2545 = vpow.pop %v2544
      %v2546 = vmul.f32 %v2446, 1.442695
      %v2547 = vpow.pop %v2546
      %v2548 = vmul.f32 %v2447, 1.442695
      %v2549 = vpow.pop %v2548
      %v2550 = vmul.f32 %v2448, 1.442695
      %v2551 = vpow.pop %v2550
      %v2552 = vmul.f32 %v2449, 1.442695
      %v2553 = vpow.pop %v2552
      %v2554 = vmul.f32 %v2450, 1.442695
      %v2555 = vpow.pop %v2554
      %v2556 = vmul.f32 %v2451, 1.442695
      %v2557 = vpow.pop %v2556
      %v2558 = vmul.f32 %v2452, 1.442695
      %v2559 = vpow.pop %v2558
      %v2560 = vmul.f32 %v2453, 1.442695
      %v2561 = vpow.pop %v2560
      %v2562 = vmul.f32 %v2454, 1.442695
      %v2563 = vpow.pop %v2562
      %v2564 = vmul.f32 %v2455, 1.442695
      %v2565 = vpow.pop %v2564
      %v2566 = vmul.f32 %v2456, 1.442695
      %v2567 = vpow.pop %v2566
      %v2568 = vmul.f32 %v2457, 1.442695
      %v2569 = vpow.pop %v2568
      %v2570 = vmul.f32 %v2458, 1.442695
      %v2571 = vpow.pop %v2570
      %v2572 = vmul.f32 %v2459, 1.442695
      %v2573 = vpow.pop %v2572
      %v2574 = vmul.f32 %v2460, 1.442695
      %v2575 = vpow.pop %v2574
      %v2576 = vmul.f32 %v2461, 1.442695
      %v2577 = vpow.pop %v2576
      %v2578 = vmul.f32 %v2462, 1.442695
      %v2579 = vpow.pop %v2578
      %v2580 = vmul.f32 %v2463, 1.442695
      %v2581 = vpow.pop %v2580
      %v2582 = vmul.f32 %v2464, 1.442695
      %v2583 = vpow.pop %v2582
      %v2584 = vmul.f32 %v2465, 1.442695
      %v2585 = vpow.pop %v2584
      %v2586 = vmul.f32 %v2466, 1.442695
      %v2587 = vpow.pop %v2586
      %v2588 = vmul.f32 %v2467, 1.442695
      %v2589 = vpow.pop %v2588
      %v2590 = vmul.f32 %v2468, 1.442695
      %v2591 = vpow.pop %v2590
      %v2592 = vmul.f32 %v2469, 1.442695
      %v2593 = vpow.pop %v2592
      %v2594 = vmul.f32 %v2470, 1.442695
      %v2595 = vpow.pop %v2594
      %v2596 = vmul.f32 %v2471, 1.442695
      %v2597 = vpow.pop %v2596
      %v2598 = vmul.f32 %v2472, 1.442695
      %v2599 = vpow.pop %v2598
      %v2600 = vmul.f32 %v2473, 1.442695
      %v2601 = vpow.pop %v2600
      %v2602 = vsel %vm206, %v2475, 0.0
      %2603 = vadd.xlane.f32.xlu0 %v2602
      %v2604 = vpop.xlane.xlu0 %2603
      %v2605 = vsel %vm206, %v2477, 0.0
      %2606 = vadd.xlane.f32.xlu0 %v2605
      %v2607 = vpop.xlane.xlu0 %2606
      %v2608 = vsel %vm206, %v2479, 0.0
      %2609 = vadd.xlane.f32.xlu0 %v2608
      %v2610 = vpop.xlane.xlu0 %2609
      %v2611 = vsel %vm206, %v2481, 0.0
      %2612 = vadd.xlane.f32.xlu0 %v2611
      %v2613 = vpop.xlane.xlu0 %2612
      %v2614 = vsel %vm206, %v2483, 0.0
      %2615 = vadd.xlane.f32.xlu0 %v2614
      %v2616 = vpop.xlane.xlu0 %2615
      %v2617 = vsel %vm206, %v2485, 0.0
      %2618 = vadd.xlane.f32.xlu0 %v2617
      %v2619 = vpop.xlane.xlu0 %2618
      %v2620 = vsel %vm206, %v2487, 0.0
      %2621 = vadd.xlane.f32.xlu0 %v2620
      %v2622 = vpop.xlane.xlu0 %2621
      %v2623 = vsel %vm206, %v2489, 0.0
      %2624 = vadd.xlane.f32.xlu0 %v2623
      %v2625 = vpop.xlane.xlu0 %2624
      %v2626 = vsel %vm206, %v2491, 0.0
      %2627 = vadd.xlane.f32.xlu0 %v2626
      %v2628 = vpop.xlane.xlu0 %2627
      %v2629 = vsel %vm206, %v2493, 0.0
      %2630 = vadd.xlane.f32.xlu0 %v2629
      %v2631 = vpop.xlane.xlu0 %2630
      %v2632 = vsel %vm206, %v2495, 0.0
      %2633 = vadd.xlane.f32.xlu0 %v2632
      %v2634 = vpop.xlane.xlu0 %2633
      %v2635 = vsel %vm206, %v2497, 0.0
      %2636 = vadd.xlane.f32.xlu0 %v2635
      %v2637 = vpop.xlane.xlu0 %2636
      %v2638 = vsel %vm206, %v2499, 0.0
      %2639 = vadd.xlane.f32.xlu0 %v2638
      %v2640 = vpop.xlane.xlu0 %2639
      %v2641 = vsel %vm206, %v2501, 0.0
      %2642 = vadd.xlane.f32.xlu0 %v2641
      %v2643 = vpop.xlane.xlu0 %2642
      %v2644 = vsel %vm206, %v2503, 0.0
      %2645 = vadd.xlane.f32.xlu0 %v2644
      %v2646 = vpop.xlane.xlu0 %2645
      %v2647 = vsel %vm206, %v2505, 0.0
      %2648 = vadd.xlane.f32.xlu0 %v2647
      %v2649 = vpop.xlane.xlu0 %2648
      %v2650 = vsel %vm206, %v2507, 0.0
      %2651 = vadd.xlane.f32.xlu0 %v2650
      %v2652 = vpop.xlane.xlu0 %2651
      %v2653 = vsel %vm206, %v2509, 0.0
      %2654 = vadd.xlane.f32.xlu0 %v2653
      %v2655 = vpop.xlane.xlu0 %2654
      %v2656 = vsel %vm206, %v2511, 0.0
      %2657 = vadd.xlane.f32.xlu0 %v2656
      %v2658 = vpop.xlane.xlu0 %2657
      %v2659 = vsel %vm206, %v2513, 0.0
      %2660 = vadd.xlane.f32.xlu0 %v2659
      %v2661 = vpop.xlane.xlu0 %2660
      %v2662 = vsel %vm206, %v2515, 0.0
      %2663 = vadd.xlane.f32.xlu0 %v2662
      %v2664 = vpop.xlane.xlu0 %2663
      %v2665 = vsel %vm206, %v2517, 0.0
      %2666 = vadd.xlane.f32.xlu0 %v2665
      %v2667 = vpop.xlane.xlu0 %2666
      %v2668 = vsel %vm206, %v2519, 0.0
      %2669 = vadd.xlane.f32.xlu0 %v2668
      %v2670 = vpop.xlane.xlu0 %2669
      %v2671 = vsel %vm206, %v2521, 0.0
      %2672 = vadd.xlane.f32.xlu0 %v2671
      %v2673 = vpop.xlane.xlu0 %2672
      %v2674 = vsel %vm206, %v2523, 0.0
      %2675 = vadd.xlane.f32.xlu0 %v2674
      %v2676 = vpop.xlane.xlu0 %2675
      %v2677 = vsel %vm206, %v2525, 0.0
      %2678 = vadd.xlane.f32.xlu0 %v2677
      %v2679 = vpop.xlane.xlu0 %2678
      %v2680 = vsel %vm206, %v2527, 0.0
      %2681 = vadd.xlane.f32.xlu0 %v2680
      %v2682 = vpop.xlane.xlu0 %2681
      %v2683 = vsel %vm206, %v2529, 0.0
      %2684 = vadd.xlane.f32.xlu0 %v2683
      %v2685 = vpop.xlane.xlu0 %2684
      %v2686 = vsel %vm206, %v2531, 0.0
      %2687 = vadd.xlane.f32.xlu0 %v2686
      %v2688 = vpop.xlane.xlu0 %2687
      %v2689 = vsel %vm206, %v2533, 0.0
      %2690 = vadd.xlane.f32.xlu0 %v2689
      %v2691 = vpop.xlane.xlu0 %2690
      %v2692 = vsel %vm206, %v2535, 0.0
      %2693 = vadd.xlane.f32.xlu0 %v2692
      %v2694 = vpop.xlane.xlu0 %2693
      %v2695 = vsel %vm206, %v2537, 0.0
      %2696 = vadd.xlane.f32.xlu0 %v2695
      %v2697 = vpop.xlane.xlu0 %2696
      %v2698 = vsel %vm206, %v2539, 0.0
      %2699 = vadd.xlane.f32.xlu0 %v2698
      %v2700 = vpop.xlane.xlu0 %2699
      %v2701 = vsel %vm206, %v2541, 0.0
      %2702 = vadd.xlane.f32.xlu0 %v2701
      %v2703 = vpop.xlane.xlu0 %2702
      %v2704 = vsel %vm206, %v2543, 0.0
      %2705 = vadd.xlane.f32.xlu0 %v2704
      %v2706 = vpop.xlane.xlu0 %2705
      %v2707 = vsel %vm206, %v2545, 0.0
      %2708 = vadd.xlane.f32.xlu0 %v2707
      %v2709 = vpop.xlane.xlu0 %2708
      %v2710 = vsel %vm206, %v2547, 0.0
      %2711 = vadd.xlane.f32.xlu0 %v2710
      %v2712 = vpop.xlane.xlu0 %2711
      %v2713 = vsel %vm206, %v2549, 0.0
      %2714 = vadd.xlane.f32.xlu0 %v2713
      %v2715 = vpop.xlane.xlu0 %2714
      %v2716 = vsel %vm206, %v2551, 0.0
      %2717 = vadd.xlane.f32.xlu0 %v2716
      %v2718 = vpop.xlane.xlu0 %2717
      %v2719 = vsel %vm206, %v2553, 0.0
      %2720 = vadd.xlane.f32.xlu0 %v2719
      %v2721 = vpop.xlane.xlu0 %2720
      %v2722 = vsel %vm206, %v2555, 0.0
      %2723 = vadd.xlane.f32.xlu0 %v2722
      %v2724 = vpop.xlane.xlu0 %2723
      %v2725 = vsel %vm206, %v2557, 0.0
      %2726 = vadd.xlane.f32.xlu0 %v2725
      %v2727 = vpop.xlane.xlu0 %2726
      %v2728 = vsel %vm206, %v2559, 0.0
      %2729 = vadd.xlane.f32.xlu0 %v2728
      %v2730 = vpop.xlane.xlu0 %2729
      %v2731 = vsel %vm206, %v2561, 0.0
      %2732 = vadd.xlane.f32.xlu0 %v2731
      %v2733 = vpop.xlane.xlu0 %2732
      %v2734 = vsel %vm206, %v2563, 0.0
      %2735 = vadd.xlane.f32.xlu0 %v2734
      %v2736 = vpop.xlane.xlu0 %2735
      %v2737 = vsel %vm206, %v2565, 0.0
      %2738 = vadd.xlane.f32.xlu0 %v2737
      %v2739 = vpop.xlane.xlu0 %2738
      %v2740 = vsel %vm206, %v2567, 0.0
      %2741 = vadd.xlane.f32.xlu0 %v2740
      %v2742 = vpop.xlane.xlu0 %2741
      %v2743 = vsel %vm206, %v2569, 0.0
      %2744 = vadd.xlane.f32.xlu0 %v2743
      %v2745 = vpop.xlane.xlu0 %2744
      %v2746 = vsel %vm206, %v2571, 0.0
      %2747 = vadd.xlane.f32.xlu0 %v2746
      %v2748 = vpop.xlane.xlu0 %2747
      %v2749 = vsel %vm206, %v2573, 0.0
      %2750 = vadd.xlane.f32.xlu0 %v2749
      %v2751 = vpop.xlane.xlu0 %2750
      %v2752 = vsel %vm206, %v2575, 0.0
      %2753 = vadd.xlane.f32.xlu0 %v2752
      %v2754 = vpop.xlane.xlu0 %2753
      %v2755 = vsel %vm206, %v2577, 0.0
      %2756 = vadd.xlane.f32.xlu0 %v2755
      %v2757 = vpop.xlane.xlu0 %2756
      %v2758 = vsel %vm206, %v2579, 0.0
      %2759 = vadd.xlane.f32.xlu0 %v2758
      %v2760 = vpop.xlane.xlu0 %2759
      %v2761 = vsel %vm206, %v2581, 0.0
      %2762 = vadd.xlane.f32.xlu0 %v2761
      %v2763 = vpop.xlane.xlu0 %2762
      %v2764 = vsel %vm206, %v2583, 0.0
      %2765 = vadd.xlane.f32.xlu0 %v2764
      %v2766 = vpop.xlane.xlu0 %2765
      %v2767 = vsel %vm206, %v2585, 0.0
      %2768 = vadd.xlane.f32.xlu0 %v2767
      %v2769 = vpop.xlane.xlu0 %2768
      %v2770 = vsel %vm206, %v2587, 0.0
      %2771 = vadd.xlane.f32.xlu0 %v2770
      %v2772 = vpop.xlane.xlu0 %2771
      %v2773 = vsel %vm206, %v2589, 0.0
      %2774 = vadd.xlane.f32.xlu0 %v2773
      %v2775 = vpop.xlane.xlu0 %2774
      %v2776 = vsel %vm206, %v2591, 0.0
      %2777 = vadd.xlane.f32.xlu0 %v2776
      %v2778 = vpop.xlane.xlu0 %2777
      %v2779 = vsel %vm206, %v2593, 0.0
      %2780 = vadd.xlane.f32.xlu0 %v2779
      %v2781 = vpop.xlane.xlu0 %2780
      %v2782 = vsel %vm206, %v2595, 0.0
      %2783 = vadd.xlane.f32.xlu0 %v2782
      %v2784 = vpop.xlane.xlu0 %2783
      %v2785 = vsel %vm206, %v2597, 0.0
      %2786 = vadd.xlane.f32.xlu0 %v2785
      %v2787 = vpop.xlane.xlu0 %2786
      %v2788 = vsel %vm206, %v2599, 0.0
      %2789 = vadd.xlane.f32.xlu0 %v2788
      %v2790 = vpop.xlane.xlu0 %2789
      %v2791 = vsel %vm206, %v2601, 0.0
      %2792 = vadd.xlane.f32.xlu0 %v2791
      %v2793 = vpop.xlane.xlu0 %2792
      %v2794 = vrcp.pop %v2604
      %v2795 = vrcp.pop %v2607
      %v2796 = vrcp.pop %v2610
      %v2797 = vrcp.pop %v2613
      %v2798 = vrcp.pop %v2616
      %v2799 = vrcp.pop %v2619
      %v2800 = vrcp.pop %v2622
      %v2801 = vrcp.pop %v2625
      %v2802 = vrcp.pop %v2628
      %v2803 = vrcp.pop %v2631
      %v2804 = vrcp.pop %v2634
      %v2805 = vrcp.pop %v2637
      %v2806 = vrcp.pop %v2640
      %v2807 = vrcp.pop %v2643
      %v2808 = vrcp.pop %v2646
      %v2809 = vrcp.pop %v2649
      %v2810 = vrcp.pop %v2652
      %v2811 = vrcp.pop %v2655
      %v2812 = vrcp.pop %v2658
      %v2813 = vrcp.pop %v2661
      %v2814 = vrcp.pop %v2664
      %v2815 = vrcp.pop %v2667
      %v2816 = vrcp.pop %v2670
      %v2817 = vrcp.pop %v2673
      %v2818 = vrcp.pop %v2676
      %v2819 = vrcp.pop %v2679
      %v2820 = vrcp.pop %v2682
      %v2821 = vrcp.pop %v2685
      %v2822 = vrcp.pop %v2688
      %v2823 = vrcp.pop %v2691
      %v2824 = vrcp.pop %v2694
      %v2825 = vrcp.pop %v2697
      %v2826 = vrcp.pop %v2700
      %v2827 = vrcp.pop %v2703
      %v2828 = vrcp.pop %v2706
      %v2829 = vrcp.pop %v2709
      %v2830 = vrcp.pop %v2712
      %v2831 = vrcp.pop %v2715
      %v2832 = vrcp.pop %v2718
      %v2833 = vrcp.pop %v2721
      %v2834 = vrcp.pop %v2724
      %v2835 = vrcp.pop %v2727
      %v2836 = vrcp.pop %v2730
      %v2837 = vrcp.pop %v2733
      %v2838 = vrcp.pop %v2736
      %v2839 = vrcp.pop %v2739
      %v2840 = vrcp.pop %v2742
      %v2841 = vrcp.pop %v2745
      %v2842 = vrcp.pop %v2748
      %v2843 = vrcp.pop %v2751
      %v2844 = vrcp.pop %v2754
      %v2845 = vrcp.pop %v2757
      %v2846 = vrcp.pop %v2760
      %v2847 = vrcp.pop %v2763
      %v2848 = vrcp.pop %v2766
      %v2849 = vrcp.pop %v2769
      %v2850 = vrcp.pop %v2772
      %v2851 = vrcp.pop %v2775
      %v2852 = vrcp.pop %v2778
      %v2853 = vrcp.pop %v2781
      %v2854 = vrcp.pop %v2784
      %v2855 = vrcp.pop %v2787
      %v2856 = vrcp.pop %v2790
      %v2857 = vrcp.pop %v2793
      %v2858 = vmul.f32 %v2475, %v2794
      %v2859 = vmul.f32 %v2477, %v2795
      %v2860 = vmul.f32 %v2479, %v2796
      %v2861 = vmul.f32 %v2481, %v2797
      %v2862 = vmul.f32 %v2483, %v2798
      %v2863 = vmul.f32 %v2485, %v2799
      %v2864 = vmul.f32 %v2487, %v2800
      %v2865 = vmul.f32 %v2489, %v2801
      %v2866 = vmul.f32 %v2491, %v2802
      %v2867 = vmul.f32 %v2493, %v2803
      %v2868 = vmul.f32 %v2495, %v2804
      %v2869 = vmul.f32 %v2497, %v2805
      %v2870 = vmul.f32 %v2499, %v2806
      %v2871 = vmul.f32 %v2501, %v2807
      %v2872 = vmul.f32 %v2503, %v2808
      %v2873 = vmul.f32 %v2505, %v2809
      %v2874 = vmul.f32 %v2507, %v2810
      %v2875 = vmul.f32 %v2509, %v2811
      %v2876 = vmul.f32 %v2511, %v2812
      %v2877 = vmul.f32 %v2513, %v2813
      %v2878 = vmul.f32 %v2515, %v2814
      %v2879 = vmul.f32 %v2517, %v2815
      %v2880 = vmul.f32 %v2519, %v2816
      %v2881 = vmul.f32 %v2521, %v2817
      %v2882 = vmul.f32 %v2523, %v2818
      %v2883 = vmul.f32 %v2525, %v2819
      %v2884 = vmul.f32 %v2527, %v2820
      %v2885 = vmul.f32 %v2529, %v2821
      %v2886 = vmul.f32 %v2531, %v2822
      %v2887 = vmul.f32 %v2533, %v2823
      %v2888 = vmul.f32 %v2535, %v2824
      %v2889 = vmul.f32 %v2537, %v2825
      %v2890 = vmul.f32 %v2539, %v2826
      %v2891 = vmul.f32 %v2541, %v2827
      %v2892 = vmul.f32 %v2543, %v2828
      %v2893 = vmul.f32 %v2545, %v2829
      %v2894 = vmul.f32 %v2547, %v2830
      %v2895 = vmul.f32 %v2549, %v2831
      %v2896 = vmul.f32 %v2551, %v2832
      %v2897 = vmul.f32 %v2553, %v2833
      %v2898 = vmul.f32 %v2555, %v2834
      %v2899 = vmul.f32 %v2557, %v2835
      %v2900 = vmul.f32 %v2559, %v2836
      %v2901 = vmul.f32 %v2561, %v2837
      %v2902 = vmul.f32 %v2563, %v2838
      %v2903 = vmul.f32 %v2565, %v2839
      %v2904 = vmul.f32 %v2567, %v2840
      %v2905 = vmul.f32 %v2569, %v2841
      %v2906 = vmul.f32 %v2571, %v2842
      %v2907 = vmul.f32 %v2573, %v2843
      %v2908 = vmul.f32 %v2575, %v2844
      %v2909 = vmul.f32 %v2577, %v2845
      %v2910 = vmul.f32 %v2579, %v2846
      %v2911 = vmul.f32 %v2581, %v2847
      %v2912 = vmul.f32 %v2583, %v2848
      %v2913 = vmul.f32 %v2585, %v2849
      %v2914 = vmul.f32 %v2587, %v2850
      %v2915 = vmul.f32 %v2589, %v2851
      %v2916 = vmul.f32 %v2591, %v2852
      %v2917 = vmul.f32 %v2593, %v2853
      %v2918 = vmul.f32 %v2595, %v2854
      %v2919 = vmul.f32 %v2597, %v2855
      %v2920 = vmul.f32 %v2599, %v2856
      %v2921 = vmul.f32 %v2601, %v2857
      %2924 = vrot.lane.b32.xlu0 %v2860, 16
      %v2925 = vpop.permute.xlu0 %2924
      %2926 = vrot.lane.b32.xlu0 %v2861, 16
      %v2927 = vpop.permute.xlu0 %2926
      %2932 = vrot.lane.b32.xlu0 %v2862, 32
      %v2933 = vpop.permute.xlu0 %2932
      %2934 = vrot.lane.b32.xlu0 %v2863, 32
      %v2935 = vpop.permute.xlu0 %2934
      %2940 = vrot.lane.b32.xlu0 %v2864, 48
      %v2941 = vpop.permute.xlu0 %2940
      %2942 = vrot.lane.b32.xlu0 %v2865, 48
      %v2943 = vpop.permute.xlu0 %2942
      %2948 = vrot.lane.b32.xlu0 %v2866, 64
      %v2949 = vpop.permute.xlu0 %2948
      %2950 = vrot.lane.b32.xlu0 %v2867, 64
      %v2951 = vpop.permute.xlu0 %2950
      %2956 = vrot.lane.b32.xlu0 %v2868, 80
      %v2957 = vpop.permute.xlu0 %2956
      %2958 = vrot.lane.b32.xlu0 %v2869, 80
      %v2959 = vpop.permute.xlu0 %2958
      %2964 = vrot.lane.b32.xlu0 %v2870, 96
      %v2965 = vpop.permute.xlu0 %2964
      %2966 = vrot.lane.b32.xlu0 %v2871, 96
      %v2967 = vpop.permute.xlu0 %2966
      %2972 = vrot.lane.b32.xlu0 %v2872, 112
      %v2973 = vpop.permute.xlu0 %2972
      %2974 = vrot.lane.b32.xlu0 %v2873, 112
      %v2975 = vpop.permute.xlu0 %2974
      %2980 = vrot.lane.b32.xlu0 %v2876, 16
      %v2981 = vpop.permute.xlu0 %2980
      %2982 = vrot.lane.b32.xlu0 %v2877, 16
      %v2983 = vpop.permute.xlu0 %2982
      %2988 = vrot.lane.b32.xlu0 %v2878, 32
      %v2989 = vpop.permute.xlu0 %2988
      %2990 = vrot.lane.b32.xlu0 %v2879, 32
      %v2991 = vpop.permute.xlu0 %2990
      %2996 = vrot.lane.b32.xlu0 %v2880, 48
      %v2997 = vpop.permute.xlu0 %2996
      %2998 = vrot.lane.b32.xlu0 %v2881, 48
      %v2999 = vpop.permute.xlu0 %2998
      %3004 = vrot.lane.b32.xlu0 %v2882, 64
      %v3005 = vpop.permute.xlu0 %3004
      %3006 = vrot.lane.b32.xlu0 %v2883, 64
      %v3007 = vpop.permute.xlu0 %3006
      %3012 = vrot.lane.b32.xlu0 %v2884, 80
      %v3013 = vpop.permute.xlu0 %3012
      %3014 = vrot.lane.b32.xlu0 %v2885, 80
      %v3015 = vpop.permute.xlu0 %3014
      %3020 = vrot.lane.b32.xlu0 %v2886, 96
      %v3021 = vpop.permute.xlu0 %3020
      %3022 = vrot.lane.b32.xlu0 %v2887, 96
      %v3023 = vpop.permute.xlu0 %3022
      %3028 = vrot.lane.b32.xlu0 %v2888, 112
      %v3029 = vpop.permute.xlu0 %3028
      %3030 = vrot.lane.b32.xlu0 %v2889, 112
      %v3031 = vpop.permute.xlu0 %3030
      %v3034 = vsel %vm206, %v2858, %v2925
      %v3035 = vsel %vm206, %v2859, %v2927
      %v3036 = vsel %vm713, %v3034, %v2933
      %v3037 = vsel %vm713, %v3035, %v2935
      %vm3038 = vcmask 392192
      %v3039 = vsel %vm3038, %v3036, %v2941
      %v3040 = vsel %vm3038, %v3037, %v2943
      %vm3041 = vcmask 523264
      %v3042 = vsel %vm3041, %v3039, %v2949
      %v3043 = vsel %vm3041, %v3040, %v2951
      %vm3044 = vcmask 654336
      %v3045 = vsel %vm3044, %v3042, %v2957
      %v3046 = vsel %vm3044, %v3043, %v2959
      %vm3047 = vcmask 785408
      %v3048 = vsel %vm3047, %v3045, %v2965
      %v3049 = vsel %vm3047, %v3046, %v2967
      %vm3050 = vcmask 916480
      %v3051 = vsel %vm3050, %v3048, %v2973
      %v3052 = vsel %vm3050, %v3049, %v2975
      %v3053 = vsel %vm206, %v2874, %v2981
      %v3054 = vsel %vm206, %v2875, %v2983
      %v3055 = vsel %vm713, %v3053, %v2989
      %v3056 = vsel %vm713, %v3054, %v2991
      %v3057 = vsel %vm3038, %v3055, %v2997
      %v3058 = vsel %vm3038, %v3056, %v2999
      %v3059 = vsel %vm3041, %v3057, %v3005
      %v3060 = vsel %vm3041, %v3058, %v3007
      %v3061 = vsel %vm3044, %v3059, %v3013
      %v3062 = vsel %vm3044, %v3060, %v3015
      %v3063 = vsel %vm3047, %v3061, %v3021
      %v3064 = vsel %vm3047, %v3062, %v3023
      %v3065 = vsel %vm3050, %v3063, %v3029
      %v3066 = vsel %vm3050, %v3064, %v3031
      %3069 = vrot.lane.b32.xlu0 %v2892, 16
      %v3070 = vpop.permute.xlu0 %3069
      %3071 = vrot.lane.b32.xlu0 %v2893, 16
      %v3072 = vpop.permute.xlu0 %3071
      %3077 = vrot.lane.b32.xlu0 %v2894, 32
      %v3078 = vpop.permute.xlu0 %3077
      %3079 = vrot.lane.b32.xlu0 %v2895, 32
      %v3080 = vpop.permute.xlu0 %3079
      %3085 = vrot.lane.b32.xlu0 %v2896, 48
      %v3086 = vpop.permute.xlu0 %3085
      %3087 = vrot.lane.b32.xlu0 %v2897, 48
      %v3088 = vpop.permute.xlu0 %3087
      %3093 = vrot.lane.b32.xlu0 %v2898, 64
      %v3094 = vpop.permute.xlu0 %3093
      %3095 = vrot.lane.b32.xlu0 %v2899, 64
      %v3096 = vpop.permute.xlu0 %3095
      %3101 = vrot.lane.b32.xlu0 %v2900, 80
      %v3102 = vpop.permute.xlu0 %3101
      %3103 = vrot.lane.b32.xlu0 %v2901, 80
      %v3104 = vpop.permute.xlu0 %3103
      %3109 = vrot.lane.b32.xlu0 %v2902, 96
      %v3110 = vpop.permute.xlu0 %3109
      %3111 = vrot.lane.b32.xlu0 %v2903, 96
      %v3112 = vpop.permute.xlu0 %3111
      %3117 = vrot.lane.b32.xlu0 %v2904, 112
      %v3118 = vpop.permute.xlu0 %3117
      %3119 = vrot.lane.b32.xlu0 %v2905, 112
      %v3120 = vpop.permute.xlu0 %3119
      %3125 = vrot.lane.b32.xlu0 %v2908, 16
      %v3126 = vpop.permute.xlu0 %3125
      %3127 = vrot.lane.b32.xlu0 %v2909, 16
      %v3128 = vpop.permute.xlu0 %3127
      %3133 = vrot.lane.b32.xlu0 %v2910, 32
      %v3134 = vpop.permute.xlu0 %3133
      %3135 = vrot.lane.b32.xlu0 %v2911, 32
      %v3136 = vpop.permute.xlu0 %3135
      %3141 = vrot.lane.b32.xlu0 %v2912, 48
      %v3142 = vpop.permute.xlu0 %3141
      %3143 = vrot.lane.b32.xlu0 %v2913, 48
      %v3144 = vpop.permute.xlu0 %3143
      %3149 = vrot.lane.b32.xlu0 %v2914, 64
      %v3150 = vpop.permute.xlu0 %3149
      %3151 = vrot.lane.b32.xlu0 %v2915, 64
      %v3152 = vpop.permute.xlu0 %3151
      %3157 = vrot.lane.b32.xlu0 %v2916, 80
      %v3158 = vpop.permute.xlu0 %3157
      %3159 = vrot.lane.b32.xlu0 %v2917, 80
      %v3160 = vpop.permute.xlu0 %3159
      %3165 = vrot.lane.b32.xlu0 %v2918, 96
      %v3166 = vpop.permute.xlu0 %3165
      %3167 = vrot.lane.b32.xlu0 %v2919, 96
      %v3168 = vpop.permute.xlu0 %3167
      %3173 = vrot.lane.b32.xlu0 %v2920, 112
      %v3174 = vpop.permute.xlu0 %3173
      %3175 = vrot.lane.b32.xlu0 %v2921, 112
      %v3176 = vpop.permute.xlu0 %3175
      %v3179 = vsel %vm206, %v2890, %v3070
      %v3180 = vsel %vm206, %v2891, %v3072
      %v3181 = vsel %vm713, %v3179, %v3078
      %v3182 = vsel %vm713, %v3180, %v3080
      %v3183 = vsel %vm3038, %v3181, %v3086
      %v3184 = vsel %vm3038, %v3182, %v3088
      %v3185 = vsel %vm3041, %v3183, %v3094
      %v3186 = vsel %vm3041, %v3184, %v3096
      %v3187 = vsel %vm3044, %v3185, %v3102
      %v3188 = vsel %vm3044, %v3186, %v3104
      %v3189 = vsel %vm3047, %v3187, %v3110
      %v3190 = vsel %vm3047, %v3188, %v3112
      %v3191 = vsel %vm3050, %v3189, %v3118
      %v3192 = vsel %vm3050, %v3190, %v3120
      %v3193 = vsel %vm206, %v2906, %v3126
      %v3194 = vsel %vm206, %v2907, %v3128
      %v3195 = vsel %vm713, %v3193, %v3134
      %v3196 = vsel %vm713, %v3194, %v3136
      %v3197 = vsel %vm3038, %v3195, %v3142
      %v3198 = vsel %vm3038, %v3196, %v3144
      %v3199 = vsel %vm3041, %v3197, %v3150
      %v3200 = vsel %vm3041, %v3198, %v3152
      %v3201 = vsel %vm3044, %v3199, %v3158
      %v3202 = vsel %vm3044, %v3200, %v3160
      %v3203 = vsel %vm3047, %v3201, %v3166
      %v3204 = vsel %vm3047, %v3202, %v3168
      %v3205 = vsel %vm3050, %v3203, %v3174
      %v3206 = vsel %vm3050, %v3204, %v3176
      %3207 = vst [vmem:[%s170] sm:$0xff] %v3051
      %3208 = vst [vmem:[%s170 + $0x8] sm:$0xff] %v3065
      %3209 = vst [vmem:[%s170 + $0x10] sm:$0xff] %v3191
      %3210 = vst [vmem:[%s170 + $0x18] sm:$0xff] %v3205
      %3211 = vst [vmem:[%s170 + $0x20] sm:$0xff] %v3052
      %3212 = vst [vmem:[%s170 + $0x28] sm:$0xff] %v3066
      %3213 = vst [vmem:[%s170 + $0x30] sm:$0xff] %v3192
      %3214 = vst [vmem:[%s170 + $0x38] sm:$0xff] %v3206
      %p3215 = scmp.lt.s32.totalorder %s14, 1
      %s3216 = scalar_select %p3215, %s14, 1
      %s3217 = smul.addr %s3216, 8
      %s3218 = smul.addr %s3217, 8
      %s3219 = scalar_lea.vmem %s3, %s3218
      // Predicated region
      $region33: #{self_attention_forward.1} parent=31 // pred_check
        %p3220 = pneg %p100
      $region34: #{self_attention_forward.1} parent=31 // pred_check_branch
        %3222 = sbr.rel (%p3220) target = $region36
      $region35: #{self_attention_forward.1} parent=31 // pred_region
        _
      $region36: #{self_attention_forward.1} parent=31 // pred_fallthru
        _
    $region32: #{self_attention_forward.1} parent=5 // pred_fallthru
      _
    %p3223 = scmp.le.s32.totalorder 2, %s9
    // Predicated region
    $region37: #{self_attention_forward.1} parent=5 // pred_check
      %p3224 = pneg %p3223
    $region38: #{self_attention_forward.1} parent=5 // pred_check_branch
      %3226 = sbr.rel (%p3224) target = $region40
    $region39: #{self_attention_forward.1} parent=5 // pred_region
      %s3227 = ssub.s32 %s9, 2
      // Predicated region
      $region41: #{self_attention_forward.1} parent=39 // pred_check
        %p3228 = pneg %p106
      $region42: #{self_attention_forward.1} parent=39 // pred_check_branch
        %3230 = sbr.rel (%p3228) target = $region44
      $region43: #{self_attention_forward.1} parent=39 // pred_region
        %p3231 = scmp.lt.s32.totalorder %s15, 1
        %s3232 = scalar_select %p3231, %s15, 1
        %s3233 = smul.addr %s3232, 8
        %s3234 = smul.addr %s3233, 8
        %s3235 = scalar_lea.vmem %s3, %s3234
      $region44: #{self_attention_forward.1} parent=39 // pred_fallthru
        _
    $region40: #{self_attention_forward.1} parent=5 // pred_fallthru
      _
  $region6: #{self_attention_forward.1} parent=0 // loop_footer
    %s13 = sadd.s32 1, %s9
  $region7: #{self_attention_forward.1} parent=0 // loop_footer_branch
    %8 = sbr.rel target = $region3
  $region8: #{self_attention_forward.1} parent=0 // loop_exit
    _

</llo_original>
